<compile_context>
chip_gen: v7x
topology: tpu7x:2x2x1
jax: 0.10.0
libtpu: 0.0.40
codegen_flags: <defaults>
</compile_context>

<pallas_src>
import functools

import jax
import jax.numpy as jnp
from jax import lax
from jax.experimental import pallas as pl
from jax.experimental.pallas import tpu as pltpu


def _residual_block_kernel(xt_ref, xr_ref, w1_ref, b1_ref, w2_ref, b2_ref,
                           o_ref, pad2_ref, *, TH, W, C, n_tiles):
    t = pl.program_id(1)              # h-tile index (serial, "arbitrary" axis)
    cdtype = pad2_ref.dtype

    # The W borders of pad2 are never overwritten by the interior writes, so
    # zero them only on the first step of the serial h-tile axis.  t == 0 runs
    # first for every image a core processes, so this is megacore-safe
    # (gating on the parallel batch axis would not be).
    @pl.when(t == 0)
    def _():
        zcol = jnp.zeros((TH + 2, 1, C), cdtype)
        pad2_ref[:, 0:1, :] = zcol
        pad2_ref[:, W + 1:W + 2, :] = zcol

    xb = xt_ref[0]                    # (TH+4, W+2, C): haloed, zero-padded tile

    def conv3x3(src, rows, w_ref):
        # 9 shifted-window matmuls accumulated in f32.  No im2col slab, so no
        # misaligned slab stores and no (rows*W, 9C) scratch; the tap loads
        # interleave naturally with the MXU pushes.
        acc = jnp.zeros((rows * W, C), jnp.float32)
        for dy in range(3):
            for dx in range(3):
                lhs = src[dy:dy + rows, dx:dx + W, :].reshape(rows * W, C)
                acc = acc + jnp.dot(lhs, w_ref[3 * dy + dx],
                                    preferred_element_type=jnp.float32)
        return acc

    # conv1 -> BN1 (scale folded into weights) -> ReLU, computed on TH+2 rows
    # (1-row halo each side so conv2 sees real neighbours across tile edges).
    h1 = jnp.maximum(conv3x3(xb, TH + 2, w1_ref) + b1_ref[...], 0.0)
    pad2_ref[:, 1:1 + W, :] = h1.reshape(TH + 2, W, C).astype(cdtype)

    # h1 rows that fall outside the image are conv2's zero padding.
    @pl.when(t == 0)
    def _():
        pad2_ref[0:1, 1:1 + W, :] = jnp.zeros((1, W, C), cdtype)

    @pl.when(t == n_tiles - 1)
    def _():
        pad2_ref[TH + 1:TH + 2, 1:1 + W, :] = jnp.zeros((1, W, C), cdtype)

    # conv2 -> BN2, then pack to the lane-dense (TH, W*C) layout, add the
    # full-precision identity shortcut and apply the final ReLU lane-dense.
    y2 = (conv3x3(pad2_ref, TH, w2_ref) + b2_ref[...]).reshape(TH, W, C)
    y2p = jnp.concatenate([y2[:, w, :] for w in range(W)], axis=-1)  # (TH, W*C)
    out = jnp.maximum(y2p + xr_ref[0].astype(jnp.float32), 0.0)
    o_ref[0] = out.astype(o_ref.dtype)


def residual_block(x_nchw, w1, gamma1, beta1, mean1, var1,
                   w2, gamma2, beta2, mean2, var2, *,
                   eps=1e-5, compute_dtype=jnp.bfloat16, tile_h=None):
    """Fused ResidualBlock forward (eval-mode BN), input/output in NCHW."""
    # Fold eval-mode BatchNorm: scale goes into the conv weights, bias stays.
    inv1 = gamma1 / jnp.sqrt(var1 + eps)
    inv2 = gamma2 / jnp.sqrt(var2 + eps)
    b1 = (beta1 - mean1 * inv1).reshape(1, -1).astype(jnp.float32)
    b2 = (beta2 - mean2 * inv2).reshape(1, -1).astype(jnp.float32)

    x = jnp.transpose(x_nchw, (0, 2, 3, 1))              # NCHW -> NHWC
    N, H, W, C = x.shape
    assert w1.shape == (3, 3, C, C) and w2.shape == (3, 3, C, C), \
        "identity shortcut requires stride=1 and in_channels == out_channels"

    w1f = (w1 * inv1).reshape(9, C, C).astype(compute_dtype)   # (tap, Cin, Cout)
    w2f = (w2 * inv2).reshape(9, C, C).astype(compute_dtype)

    if tile_h is None:
        tile_h = 8 if (H % 8 == 0 and H > 8) else H
    assert H % tile_h == 0 and (tile_h % 8 == 0 or tile_h == H)
    n_tiles = H // tile_h

    # Spatially zero-pad (2 rows top/bottom for the two chained 3x3 convs,
    # 1 col left/right) and carve overlapping haloed row tiles so every grid
    # step is independent: no in-kernel x copy, halo DMA or edge special case.
    xp = jnp.pad(x.astype(compute_dtype), ((0, 0), (2, 2), (1, 1), (0, 0)))
    x_tiles = jnp.stack([xp[:, i * tile_h: i * tile_h + tile_h + 4]
                         for i in range(n_tiles)], axis=1)
    x_tiles = x_tiles.reshape(N * n_tiles, tile_h + 4, W + 2, C)

    # Lane-dense view of x in its ORIGINAL dtype for the identity shortcut.
    x_res = x.reshape(N, H, W * C)

    kernel = functools.partial(_residual_block_kernel,
                               TH=tile_h, W=W, C=C, n_tiles=n_tiles)

    # Explicit scoped-VMEM limit from the live set (double-buffered blocks +
    # weights + the persistent pad scratch), with headroom. Capped at the v7x
    # physical 64 MiB so the same setting is valid on all generations.
    csize = jnp.dtype(compute_dtype).itemsize
    osize = jnp.dtype(x.dtype).itemsize
    live = (2 * (tile_h + 4) * (W + 2) * C * csize        # haloed x tile block
            + 2 * tile_h * W * C * osize                  # residual block
            + 2 * tile_h * W * C * osize                  # output block
            + 2 * (2 * 9 * C * C * csize + 2 * C * 4)     # weights + biases
            + (tile_h + 2) * (W + 2) * C * csize)         # pad2 scratch
    vmem_limit = int(min(64 * 2**20, max(32 * 2**20, 4 * live)))

    out = pl.pallas_call(
        kernel,
        out_shape=jax.ShapeDtypeStruct((N, H, W * C), x.dtype),
        grid_spec=pltpu.PrefetchScalarGridSpec(
            num_scalar_prefetch=0,
            grid=(N, n_tiles),
            in_specs=[
                pl.BlockSpec((1, tile_h + 4, W + 2, C),
                             lambda n, t: (n * n_tiles + t, 0, 0, 0)),
                pl.BlockSpec((1, tile_h, W * C), lambda n, t: (n, t, 0)),
                pl.BlockSpec((9, C, C), lambda n, t: (0, 0, 0)),   # w1 (BN folded)
                pl.BlockSpec((1, C), lambda n, t: (0, 0)),          # b1
                pl.BlockSpec((9, C, C), lambda n, t: (0, 0, 0)),   # w2 (BN folded)
                pl.BlockSpec((1, C), lambda n, t: (0, 0)),          # b2
            ],
            out_specs=pl.BlockSpec((1, tile_h, W * C), lambda n, t: (n, t, 0)),
            scratch_shapes=[
                pltpu.VMEM((tile_h + 2, W + 2, C), compute_dtype),  # conv2 input
            ],
        ),
        compiler_params=pltpu.CompilerParams(
            dimension_semantics=("parallel", "arbitrary"),
            vmem_limit_bytes=vmem_limit),
    )(x_tiles, x_res, w1f, b1, w2f, b2)

    out = out.reshape(N, H, W, C)
    return jnp.transpose(out, (0, 3, 1, 2))               # NHWC -> NCHW


def _reference(x_nchw, w1, gamma1, beta1, mean1, var1,
               w2, gamma2, beta2, mean2, var2, eps=1e-5):
    # Pure-JAX reference (same eval-mode BN semantics).
    x = jnp.transpose(x_nchw, (0, 2, 3, 1))
    dn = ('NHWC', 'HWIO', 'NHWC')
    y = lax.conv_general_dilated(x, w1, (1, 1), 'SAME', dimension_numbers=dn,
                                 precision=lax.Precision.HIGHEST)
    y = (y - mean1) / jnp.sqrt(var1 + eps) * gamma1 + beta1
    y = jnp.maximum(y, 0.0)
    y = lax.conv_general_dilated(y, w2, (1, 1), 'SAME', dimension_numbers=dn,
                                 precision=lax.Precision.HIGHEST)
    y = (y - mean2) / jnp.sqrt(var2 + eps) * gamma2 + beta2
    y = jnp.maximum(y + x, 0.0)
    return jnp.transpose(y, (0, 3, 1, 2))


if __name__ == "__main__":
    N, C, H, W = 2, 64, 16, 16

    key = jax.random.PRNGKey(0)
    ks = jax.random.split(key, 11)
    x = jax.random.normal(ks[0], (N, C, H, W), jnp.float32)

    w1 = jax.random.normal(ks[1], (3, 3, C, C), jnp.float32) * 0.05   # HWIO
    w2 = jax.random.normal(ks[2], (3, 3, C, C), jnp.float32) * 0.05
    gamma1 = 1.0 + 0.1 * jax.random.normal(ks[3], (C,), jnp.float32)
    beta1 = 0.1 * jax.random.normal(ks[4], (C,), jnp.float32)
    mean1 = 0.1 * jax.random.normal(ks[5], (C,), jnp.float32)
    var1 = jax.random.uniform(ks[6], (C,), jnp.float32, 0.5, 1.5)
    gamma2 = 1.0 + 0.1 * jax.random.normal(ks[7], (C,), jnp.float32)
    beta2 = 0.1 * jax.random.normal(ks[8], (C,), jnp.float32)
    mean2 = 0.1 * jax.random.normal(ks[9], (C,), jnp.float32)
    var2 = jax.random.uniform(ks[10], (C,), jnp.float32, 0.5, 1.5)

    args = (x, w1, gamma1, beta1, mean1, var1, w2, gamma2, beta2, mean2, var2)

    ref = jax.block_until_ready(_reference(*args))

    # float32 operands, default row tiling (TH=8 -> 2 h-tiles): tight check.
    out_f32 = jax.block_until_ready(
        residual_block(*args, compute_dtype=jnp.float32))
    assert out_f32.shape == (N, C, H, W)
    assert jnp.allclose(out_f32, ref, rtol=5e-4, atol=5e-4), \
        f"f32 max abs err {jnp.max(jnp.abs(out_f32 - ref))}"

    # float32, whole-image tile (exercise the n_tiles == 1 path).
    out_whole = jax.block_until_ready(
        residual_block(*args, compute_dtype=jnp.float32, tile_h=H))
    assert jnp.allclose(out_whole, ref, rtol=5e-4, atol=5e-4), \
        f"f32 (whole-image) max abs err {jnp.max(jnp.abs(out_whole - ref))}"

    # bf16 operands + f32 accumulation and f32 residual (MXU-native path).
    out_bf16 = jax.block_until_ready(
        residual_block(*args, compute_dtype=jnp.bfloat16))
    assert out_bf16.shape == (N, C, H, W)
    bf16_err = jnp.max(jnp.abs(out_bf16 - ref))
    assert bf16_err < 0.25, f"bf16 max abs err {bf16_err}"

    print("KERNEL_OK")
</pallas_src>

<mosaic_0001>
module attributes {stable_mosaic.version = 11 : i64} {
  func.func @_residual_block_kernel(%arg0: i32, %arg1: i32, %arg2: memref<1x12x18x64xf32, #tpu.memory_space<vmem>>, %arg3: memref<1x8x1024xf32, #tpu.memory_space<vmem>>, %arg4: memref<9x64x64xf32, #tpu.memory_space<vmem>>, %arg5: memref<1x64xf32, #tpu.memory_space<vmem>>, %arg6: memref<9x64x64xf32, #tpu.memory_space<vmem>>, %arg7: memref<1x64xf32, #tpu.memory_space<vmem>>, %arg8: memref<1x8x1024xf32, #tpu.memory_space<vmem>>, %arg9: memref<10x18x64xf32, #tpu.memory_space<vmem>>) attributes {dimension_semantics = [#tpu.dimension_semantics<parallel>, #tpu.dimension_semantics<arbitrary>], iteration_bounds = array<i64: 2, 2>, scalar_prefetch = 0 : i64, scratch_operands = 1 : i64, tpu.core_type = #tpu.core_type<tc>, window_params = [{transform_indices = @transform_0, window_bounds = array<i64: 1, 12, 18, 64>}, {transform_indices = @transform_1, window_bounds = array<i64: 1, 8, 1024>}, {pipeline_mode = #tpu.pipeline_mode<synchronous>, transform_indices = @transform_2, window_bounds = array<i64: 9, 64, 64>}, {pipeline_mode = #tpu.pipeline_mode<synchronous>, transform_indices = @transform_3, window_bounds = array<i64: 1, 64>}, {pipeline_mode = #tpu.pipeline_mode<synchronous>, transform_indices = @transform_4, window_bounds = array<i64: 9, 64, 64>}, {pipeline_mode = #tpu.pipeline_mode<synchronous>, transform_indices = @transform_5, window_bounds = array<i64: 1, 64>}, {transform_indices = @transform_6, window_bounds = array<i64: 1, 8, 1024>}]} {
    %c0_i32 = arith.constant 0 : i32
    %0 = arith.cmpi eq, %arg1, %c0_i32 : i32
    %1 = arith.extui %0 : i1 to i32
    %c0_i32_0 = arith.constant 0 : i32
    %2 = arith.cmpi ne, %1, %c0_i32_0 : i32
    scf.if %2 {
      %cst_114 = arith.constant 0.000000e+00 : f32
      %173 = vector.broadcast %cst_114 : f32 to vector<10x1x64xf32>
      %c0_115 = arith.constant 0 : index
      %c0_116 = arith.constant 0 : index
      %c0_117 = arith.constant 0 : index
      %174 = vector.load %arg9[%c0_115, %c0_116, %c0_117] : memref<10x18x64xf32, #tpu.memory_space<vmem>>, vector<10x1x64xf32>
      tpu.vector_store %arg9[%c0_115, %c0_116, %c0_117], %173 {strides = array<i32>} : memref<10x18x64xf32, #tpu.memory_space<vmem>>, vector<10x1x64xf32>,
      %c0_118 = arith.constant 0 : index
      %c17 = arith.constant 17 : index
      %c0_119 = arith.constant 0 : index
      %175 = vector.load %arg9[%c0_118, %c17, %c0_119] : memref<10x18x64xf32, #tpu.memory_space<vmem>>, vector<10x1x64xf32>
      tpu.vector_store %arg9[%c0_118, %c17, %c0_119], %173 {strides = array<i32>} : memref<10x18x64xf32, #tpu.memory_space<vmem>>, vector<10x1x64xf32>,
    } else {
    }
    %c0 = arith.constant 0 : index
    %c0_1 = arith.constant 0 : index
    %c0_2 = arith.constant 0 : index
    %c0_3 = arith.constant 0 : index
    %3 = vector.load %arg2[%c0, %c0_1, %c0_2, %c0_3] : memref<1x12x18x64xf32, #tpu.memory_space<vmem>>, vector<1x12x18x64xf32>
    %4 = vector.shape_cast %3 : vector<1x12x18x64xf32> to vector<12x18x64xf32>
    %cst = arith.constant 0.000000e+00 : f32
    %5 = vector.broadcast %cst : f32 to vector<160x64xf32>
    %6 = vector.extract_strided_slice %4 {offsets = [0, 0, 0], sizes = [10, 16, 64], strides = [1, 1, 1]} : vector<12x18x64xf32> to vector<10x16x64xf32>
    %7 = vector.shape_cast %6 : vector<10x16x64xf32> to vector<160x64xf32>
    %c0_4 = arith.constant 0 : index
    %c0_5 = arith.constant 0 : index
    %c0_6 = arith.constant 0 : index
    %8 = vector.load %arg4[%c0_4, %c0_5, %c0_6] : memref<9x64x64xf32, #tpu.memory_space<vmem>>, vector<1x64x64xf32>
    %9 = vector.shape_cast %8 : vector<1x64x64xf32> to vector<64x64xf32>
    %cst_7 = arith.constant dense<0.000000e+00> : vector<160x64xf32>
    %10 = tpu.matmul %7, %9, %cst_7 {dimension_numbers = #tpu.dot_dimension_numbers<[1], [0], [0], [1], [0, 0, 1, 1], [], []>} : vector<160x64xf32>, vector<64x64xf32>, vector<160x64xf32> -> vector<160x64xf32>
    %11 = arith.addf %5, %10 : vector<160x64xf32>
    %12 = vector.extract_strided_slice %4 {offsets = [0, 1, 0], sizes = [10, 16, 64], strides = [1, 1, 1]} : vector<12x18x64xf32> to vector<10x16x64xf32>
    %13 = vector.shape_cast %12 : vector<10x16x64xf32> to vector<160x64xf32>
    %c1 = arith.constant 1 : index
    %c0_8 = arith.constant 0 : index
    %c0_9 = arith.constant 0 : index
    %14 = vector.load %arg4[%c1, %c0_8, %c0_9] : memref<9x64x64xf32, #tpu.memory_space<vmem>>, vector<1x64x64xf32>
    %15 = vector.shape_cast %14 : vector<1x64x64xf32> to vector<64x64xf32>
    %cst_10 = arith.constant dense<0.000000e+00> : vector<160x64xf32>
    %16 = tpu.matmul %13, %15, %cst_10 {dimension_numbers = #tpu.dot_dimension_numbers<[1], [0], [0], [1], [0, 0, 1, 1], [], []>} : vector<160x64xf32>, vector<64x64xf32>, vector<160x64xf32> -> vector<160x64xf32>
    %17 = arith.addf %11, %16 : vector<160x64xf32>
    %18 = vector.extract_strided_slice %4 {offsets = [0, 2, 0], sizes = [10, 16, 64], strides = [1, 1, 1]} : vector<12x18x64xf32> to vector<10x16x64xf32>
    %19 = vector.shape_cast %18 : vector<10x16x64xf32> to vector<160x64xf32>
    %c2 = arith.constant 2 : index
    %c0_11 = arith.constant 0 : index
    %c0_12 = arith.constant 0 : index
    %20 = vector.load %arg4[%c2, %c0_11, %c0_12] : memref<9x64x64xf32, #tpu.memory_space<vmem>>, vector<1x64x64xf32>
    %21 = vector.shape_cast %20 : vector<1x64x64xf32> to vector<64x64xf32>
    %cst_13 = arith.constant dense<0.000000e+00> : vector<160x64xf32>
    %22 = tpu.matmul %19, %21, %cst_13 {dimension_numbers = #tpu.dot_dimension_numbers<[1], [0], [0], [1], [0, 0, 1, 1], [], []>} : vector<160x64xf32>, vector<64x64xf32>, vector<160x64xf32> -> vector<160x64xf32>
    %23 = arith.addf %17, %22 : vector<160x64xf32>
    %24 = vector.extract_strided_slice %4 {offsets = [1, 0, 0], sizes = [10, 16, 64], strides = [1, 1, 1]} : vector<12x18x64xf32> to vector<10x16x64xf32>
    %25 = vector.shape_cast %24 : vector<10x16x64xf32> to vector<160x64xf32>
    %c3 = arith.constant 3 : index
    %c0_14 = arith.constant 0 : index
    %c0_15 = arith.constant 0 : index
    %26 = vector.load %arg4[%c3, %c0_14, %c0_15] : memref<9x64x64xf32, #tpu.memory_space<vmem>>, vector<1x64x64xf32>
    %27 = vector.shape_cast %26 : vector<1x64x64xf32> to vector<64x64xf32>
    %cst_16 = arith.constant dense<0.000000e+00> : vector<160x64xf32>
    %28 = tpu.matmul %25, %27, %cst_16 {dimension_numbers = #tpu.dot_dimension_numbers<[1], [0], [0], [1], [0, 0, 1, 1], [], []>} : vector<160x64xf32>, vector<64x64xf32>, vector<160x64xf32> -> vector<160x64xf32>
    %29 = arith.addf %23, %28 : vector<160x64xf32>
    %30 = vector.extract_strided_slice %4 {offsets = [1, 1, 0], sizes = [10, 16, 64], strides = [1, 1, 1]} : vector<12x18x64xf32> to vector<10x16x64xf32>
    %31 = vector.shape_cast %30 : vector<10x16x64xf32> to vector<160x64xf32>
    %c4 = arith.constant 4 : index
    %c0_17 = arith.constant 0 : index
    %c0_18 = arith.constant 0 : index
    %32 = vector.load %arg4[%c4, %c0_17, %c0_18] : memref<9x64x64xf32, #tpu.memory_space<vmem>>, vector<1x64x64xf32>
    %33 = vector.shape_cast %32 : vector<1x64x64xf32> to vector<64x64xf32>
    %cst_19 = arith.constant dense<0.000000e+00> : vector<160x64xf32>
    %34 = tpu.matmul %31, %33, %cst_19 {dimension_numbers = #tpu.dot_dimension_numbers<[1], [0], [0], [1], [0, 0, 1, 1], [], []>} : vector<160x64xf32>, vector<64x64xf32>, vector<160x64xf32> -> vector<160x64xf32>
    %35 = arith.addf %29, %34 : vector<160x64xf32>
    %36 = vector.extract_strided_slice %4 {offsets = [1, 2, 0], sizes = [10, 16, 64], strides = [1, 1, 1]} : vector<12x18x64xf32> to vector<10x16x64xf32>
    %37 = vector.shape_cast %36 : vector<10x16x64xf32> to vector<160x64xf32>
    %c5 = arith.constant 5 : index
    %c0_20 = arith.constant 0 : index
    %c0_21 = arith.constant 0 : index
    %38 = vector.load %arg4[%c5, %c0_20, %c0_21] : memref<9x64x64xf32, #tpu.memory_space<vmem>>, vector<1x64x64xf32>
    %39 = vector.shape_cast %38 : vector<1x64x64xf32> to vector<64x64xf32>
    %cst_22 = arith.constant dense<0.000000e+00> : vector<160x64xf32>
    %40 = tpu.matmul %37, %39, %cst_22 {dimension_numbers = #tpu.dot_dimension_numbers<[1], [0], [0], [1], [0, 0, 1, 1], [], []>} : vector<160x64xf32>, vector<64x64xf32>, vector<160x64xf32> -> vector<160x64xf32>
    %41 = arith.addf %35, %40 : vector<160x64xf32>
    %42 = vector.extract_strided_slice %4 {offsets = [2, 0, 0], sizes = [10, 16, 64], strides = [1, 1, 1]} : vector<12x18x64xf32> to vector<10x16x64xf32>
    %43 = vector.shape_cast %42 : vector<10x16x64xf32> to vector<160x64xf32>
    %c6 = arith.constant 6 : index
    %c0_23 = arith.constant 0 : index
    %c0_24 = arith.constant 0 : index
    %44 = vector.load %arg4[%c6, %c0_23, %c0_24] : memref<9x64x64xf32, #tpu.memory_space<vmem>>, vector<1x64x64xf32>
    %45 = vector.shape_cast %44 : vector<1x64x64xf32> to vector<64x64xf32>
    %cst_25 = arith.constant dense<0.000000e+00> : vector<160x64xf32>
    %46 = tpu.matmul %43, %45, %cst_25 {dimension_numbers = #tpu.dot_dimension_numbers<[1], [0], [0], [1], [0, 0, 1, 1], [], []>} : vector<160x64xf32>, vector<64x64xf32>, vector<160x64xf32> -> vector<160x64xf32>
    %47 = arith.addf %41, %46 : vector<160x64xf32>
    %48 = vector.extract_strided_slice %4 {offsets = [2, 1, 0], sizes = [10, 16, 64], strides = [1, 1, 1]} : vector<12x18x64xf32> to vector<10x16x64xf32>
    %49 = vector.shape_cast %48 : vector<10x16x64xf32> to vector<160x64xf32>
    %c7 = arith.constant 7 : index
    %c0_26 = arith.constant 0 : index
    %c0_27 = arith.constant 0 : index
    %50 = vector.load %arg4[%c7, %c0_26, %c0_27] : memref<9x64x64xf32, #tpu.memory_space<vmem>>, vector<1x64x64xf32>
    %51 = vector.shape_cast %50 : vector<1x64x64xf32> to vector<64x64xf32>
    %cst_28 = arith.constant dense<0.000000e+00> : vector<160x64xf32>
    %52 = tpu.matmul %49, %51, %cst_28 {dimension_numbers = #tpu.dot_dimension_numbers<[1], [0], [0], [1], [0, 0, 1, 1], [], []>} : vector<160x64xf32>, vector<64x64xf32>, vector<160x64xf32> -> vector<160x64xf32>
    %53 = arith.addf %47, %52 : vector<160x64xf32>
    %54 = vector.extract_strided_slice %4 {offsets = [2, 2, 0], sizes = [10, 16, 64], strides = [1, 1, 1]} : vector<12x18x64xf32> to vector<10x16x64xf32>
    %55 = vector.shape_cast %54 : vector<10x16x64xf32> to vector<160x64xf32>
    %c8 = arith.constant 8 : index
    %c0_29 = arith.constant 0 : index
    %c0_30 = arith.constant 0 : index
    %56 = vector.load %arg4[%c8, %c0_29, %c0_30] : memref<9x64x64xf32, #tpu.memory_space<vmem>>, vector<1x64x64xf32>
    %57 = vector.shape_cast %56 : vector<1x64x64xf32> to vector<64x64xf32>
    %cst_31 = arith.constant dense<0.000000e+00> : vector<160x64xf32>
    %58 = tpu.matmul %55, %57, %cst_31 {dimension_numbers = #tpu.dot_dimension_numbers<[1], [0], [0], [1], [0, 0, 1, 1], [], []>} : vector<160x64xf32>, vector<64x64xf32>, vector<160x64xf32> -> vector<160x64xf32>
    %59 = arith.addf %53, %58 : vector<160x64xf32>
    %c0_32 = arith.constant 0 : index
    %c0_33 = arith.constant 0 : index
    %60 = vector.load %arg5[%c0_32, %c0_33] : memref<1x64xf32, #tpu.memory_space<vmem>>, vector<1x64xf32>
    %61 = vector.broadcast %60 : vector<1x64xf32> to vector<160x64xf32>
    %62 = arith.addf %59, %61 : vector<160x64xf32>
    %cst_34 = arith.constant 0.000000e+00 : f32
    %63 = vector.broadcast %cst_34 : f32 to vector<160x64xf32>
    %64 = arith.maximumf %62, %63 : vector<160x64xf32>
    %65 = vector.shape_cast %64 : vector<160x64xf32> to vector<10x16x64xf32>
    %c0_35 = arith.constant 0 : index
    %c1_36 = arith.constant 1 : index
    %c0_37 = arith.constant 0 : index
    %66 = vector.load %arg9[%c0_35, %c1_36, %c0_37] : memref<10x18x64xf32, #tpu.memory_space<vmem>>, vector<10x16x64xf32>
    tpu.vector_store %arg9[%c0_35, %c1_36, %c0_37], %65 {strides = array<i32>} : memref<10x18x64xf32, #tpu.memory_space<vmem>>, vector<10x16x64xf32>,
    %c0_i32_38 = arith.constant 0 : i32
    %67 = arith.cmpi eq, %arg1, %c0_i32_38 : i32
    %68 = arith.extui %67 : i1 to i32
    %c0_i32_39 = arith.constant 0 : i32
    %69 = arith.cmpi ne, %68, %c0_i32_39 : i32
    scf.if %69 {
      %cst_114 = arith.constant 0.000000e+00 : f32
      %173 = vector.broadcast %cst_114 : f32 to vector<1x16x64xf32>
      %c0_115 = arith.constant 0 : index
      %c1_116 = arith.constant 1 : index
      %c0_117 = arith.constant 0 : index
      %174 = vector.load %arg9[%c0_115, %c1_116, %c0_117] : memref<10x18x64xf32, #tpu.memory_space<vmem>>, vector<1x16x64xf32>
      tpu.vector_store %arg9[%c0_115, %c1_116, %c0_117], %173 {strides = array<i32>} : memref<10x18x64xf32, #tpu.memory_space<vmem>>, vector<1x16x64xf32>,
    } else {
    }
    %c1_i32 = arith.constant 1 : i32
    %70 = arith.cmpi eq, %arg1, %c1_i32 : i32
    %71 = arith.extui %70 : i1 to i32
    %c0_i32_40 = arith.constant 0 : i32
    %72 = arith.cmpi ne, %71, %c0_i32_40 : i32
    scf.if %72 {
      %cst_114 = arith.constant 0.000000e+00 : f32
      %173 = vector.broadcast %cst_114 : f32 to vector<1x16x64xf32>
      %c9 = arith.constant 9 : index
      %c1_115 = arith.constant 1 : index
      %c0_116 = arith.constant 0 : index
      %174 = vector.load %arg9[%c9, %c1_115, %c0_116] : memref<10x18x64xf32, #tpu.memory_space<vmem>>, vector<1x16x64xf32>
      tpu.vector_store %arg9[%c9, %c1_115, %c0_116], %173 {strides = array<i32>} : memref<10x18x64xf32, #tpu.memory_space<vmem>>, vector<1x16x64xf32>,
    } else {
    }
    %cst_41 = arith.constant 0.000000e+00 : f32
    %73 = vector.broadcast %cst_41 : f32 to vector<128x64xf32>
    %c0_42 = arith.constant 0 : index
    %c0_43 = arith.constant 0 : index
    %c0_44 = arith.constant 0 : index
    %74 = vector.load %arg9[%c0_42, %c0_43, %c0_44] : memref<10x18x64xf32, #tpu.memory_space<vmem>>, vector<8x16x64xf32>
    %75 = vector.shape_cast %74 : vector<8x16x64xf32> to vector<128x64xf32>
    %c0_45 = arith.constant 0 : index
    %c0_46 = arith.constant 0 : index
    %c0_47 = arith.constant 0 : index
    %76 = vector.load %arg6[%c0_45, %c0_46, %c0_47] : memref<9x64x64xf32, #tpu.memory_space<vmem>>, vector<1x64x64xf32>
    %77 = vector.shape_cast %76 : vector<1x64x64xf32> to vector<64x64xf32>
    %cst_48 = arith.constant dense<0.000000e+00> : vector<128x64xf32>
    %78 = tpu.matmul %75, %77, %cst_48 {dimension_numbers = #tpu.dot_dimension_numbers<[1], [0], [0], [1], [0, 0, 1, 1], [], []>} : vector<128x64xf32>, vector<64x64xf32>, vector<128x64xf32> -> vector<128x64xf32>
    %79 = arith.addf %73, %78 : vector<128x64xf32>
    %c0_49 = arith.constant 0 : index
    %c1_50 = arith.constant 1 : index
    %c0_51 = arith.constant 0 : index
    %80 = vector.load %arg9[%c0_49, %c1_50, %c0_51] : memref<10x18x64xf32, #tpu.memory_space<vmem>>, vector<8x16x64xf32>
    %81 = vector.shape_cast %80 : vector<8x16x64xf32> to vector<128x64xf32>
    %c1_52 = arith.constant 1 : index
    %c0_53 = arith.constant 0 : index
    %c0_54 = arith.constant 0 : index
    %82 = vector.load %arg6[%c1_52, %c0_53, %c0_54] : memref<9x64x64xf32, #tpu.memory_space<vmem>>, vector<1x64x64xf32>
    %83 = vector.shape_cast %82 : vector<1x64x64xf32> to vector<64x64xf32>
    %cst_55 = arith.constant dense<0.000000e+00> : vector<128x64xf32>
    %84 = tpu.matmul %81, %83, %cst_55 {dimension_numbers = #tpu.dot_dimension_numbers<[1], [0], [0], [1], [0, 0, 1, 1], [], []>} : vector<128x64xf32>, vector<64x64xf32>, vector<128x64xf32> -> vector<128x64xf32>
    %85 = arith.addf %79, %84 : vector<128x64xf32>
    %c0_56 = arith.constant 0 : index
    %c2_57 = arith.constant 2 : index
    %c0_58 = arith.constant 0 : index
    %86 = vector.load %arg9[%c0_56, %c2_57, %c0_58] : memref<10x18x64xf32, #tpu.memory_space<vmem>>, vector<8x16x64xf32>
    %87 = vector.shape_cast %86 : vector<8x16x64xf32> to vector<128x64xf32>
    %c2_59 = arith.constant 2 : index
    %c0_60 = arith.constant 0 : index
    %c0_61 = arith.constant 0 : index
    %88 = vector.load %arg6[%c2_59, %c0_60, %c0_61] : memref<9x64x64xf32, #tpu.memory_space<vmem>>, vector<1x64x64xf32>
    %89 = vector.shape_cast %88 : vector<1x64x64xf32> to vector<64x64xf32>
    %cst_62 = arith.constant dense<0.000000e+00> : vector<128x64xf32>
    %90 = tpu.matmul %87, %89, %cst_62 {dimension_numbers = #tpu.dot_dimension_numbers<[1], [0], [0], [1], [0, 0, 1, 1], [], []>} : vector<128x64xf32>, vector<64x64xf32>, vector<128x64xf32> -> vector<128x64xf32>
    %91 = arith.addf %85, %90 : vector<128x64xf32>
    %c1_63 = arith.constant 1 : index
    %c0_64 = arith.constant 0 : index
    %c0_65 = arith.constant 0 : index
    %92 = vector.load %arg9[%c1_63, %c0_64, %c0_65] : memref<10x18x64xf32, #tpu.memory_space<vmem>>, vector<8x16x64xf32>
    %93 = vector.shape_cast %92 : vector<8x16x64xf32> to vector<128x64xf32>
    %c3_66 = arith.constant 3 : index
    %c0_67 = arith.constant 0 : index
    %c0_68 = arith.constant 0 : index
    %94 = vector.load %arg6[%c3_66, %c0_67, %c0_68] : memref<9x64x64xf32, #tpu.memory_space<vmem>>, vector<1x64x64xf32>
    %95 = vector.shape_cast %94 : vector<1x64x64xf32> to vector<64x64xf32>
    %cst_69 = arith.constant dense<0.000000e+00> : vector<128x64xf32>
    %96 = tpu.matmul %93, %95, %cst_69 {dimension_numbers = #tpu.dot_dimension_numbers<[1], [0], [0], [1], [0, 0, 1, 1], [], []>} : vector<128x64xf32>, vector<64x64xf32>, vector<128x64xf32> -> vector<128x64xf32>
    %97 = arith.addf %91, %96 : vector<128x64xf32>
    %c1_70 = arith.constant 1 : index
    %c1_71 = arith.constant 1 : index
    %c0_72 = arith.constant 0 : index
    %98 = vector.load %arg9[%c1_70, %c1_71, %c0_72] : memref<10x18x64xf32, #tpu.memory_space<vmem>>, vector<8x16x64xf32>
    %99 = vector.shape_cast %98 : vector<8x16x64xf32> to vector<128x64xf32>
    %c4_73 = arith.constant 4 : index
    %c0_74 = arith.constant 0 : index
    %c0_75 = arith.constant 0 : index
    %100 = vector.load %arg6[%c4_73, %c0_74, %c0_75] : memref<9x64x64xf32, #tpu.memory_space<vmem>>, vector<1x64x64xf32>
    %101 = vector.shape_cast %100 : vector<1x64x64xf32> to vector<64x64xf32>
    %cst_76 = arith.constant dense<0.000000e+00> : vector<128x64xf32>
    %102 = tpu.matmul %99, %101, %cst_76 {dimension_numbers = #tpu.dot_dimension_numbers<[1], [0], [0], [1], [0, 0, 1, 1], [], []>} : vector<128x64xf32>, vector<64x64xf32>, vector<128x64xf32> -> vector<128x64xf32>
    %103 = arith.addf %97, %102 : vector<128x64xf32>
    %c1_77 = arith.constant 1 : index
    %c2_78 = arith.constant 2 : index
    %c0_79 = arith.constant 0 : index
    %104 = vector.load %arg9[%c1_77, %c2_78, %c0_79] : memref<10x18x64xf32, #tpu.memory_space<vmem>>, vector<8x16x64xf32>
    %105 = vector.shape_cast %104 : vector<8x16x64xf32> to vector<128x64xf32>
    %c5_80 = arith.constant 5 : index
    %c0_81 = arith.constant 0 : index
    %c0_82 = arith.constant 0 : index
    %106 = vector.load %arg6[%c5_80, %c0_81, %c0_82] : memref<9x64x64xf32, #tpu.memory_space<vmem>>, vector<1x64x64xf32>
    %107 = vector.shape_cast %106 : vector<1x64x64xf32> to vector<64x64xf32>
    %cst_83 = arith.constant dense<0.000000e+00> : vector<128x64xf32>
    %108 = tpu.matmul %105, %107, %cst_83 {dimension_numbers = #tpu.dot_dimension_numbers<[1], [0], [0], [1], [0, 0, 1, 1], [], []>} : vector<128x64xf32>, vector<64x64xf32>, vector<128x64xf32> -> vector<128x64xf32>
    %109 = arith.addf %103, %108 : vector<128x64xf32>
    %c2_84 = arith.constant 2 : index
    %c0_85 = arith.constant 0 : index
    %c0_86 = arith.constant 0 : index
    %110 = vector.load %arg9[%c2_84, %c0_85, %c0_86] : memref<10x18x64xf32, #tpu.memory_space<vmem>>, vector<8x16x64xf32>
    %111 = vector.shape_cast %110 : vector<8x16x64xf32> to vector<128x64xf32>
    %c6_87 = arith.constant 6 : index
    %c0_88 = arith.constant 0 : index
    %c0_89 = arith.constant 0 : index
    %112 = vector.load %arg6[%c6_87, %c0_88, %c0_89] : memref<9x64x64xf32, #tpu.memory_space<vmem>>, vector<1x64x64xf32>
    %113 = vector.shape_cast %112 : vector<1x64x64xf32> to vector<64x64xf32>
    %cst_90 = arith.constant dense<0.000000e+00> : vector<128x64xf32>
    %114 = tpu.matmul %111, %113, %cst_90 {dimension_numbers = #tpu.dot_dimension_numbers<[1], [0], [0], [1], [0, 0, 1, 1], [], []>} : vector<128x64xf32>, vector<64x64xf32>, vector<128x64xf32> -> vector<128x64xf32>
    %115 = arith.addf %109, %114 : vector<128x64xf32>
    %c2_91 = arith.constant 2 : index
    %c1_92 = arith.constant 1 : index
    %c0_93 = arith.constant 0 : index
    %116 = vector.load %arg9[%c2_91, %c1_92, %c0_93] : memref<10x18x64xf32, #tpu.memory_space<vmem>>, vector<8x16x64xf32>
    %117 = vector.shape_cast %116 : vector<8x16x64xf32> to vector<128x64xf32>
    %c7_94 = arith.constant 7 : index
    %c0_95 = arith.constant 0 : index
    %c0_96 = arith.constant 0 : index
    %118 = vector.load %arg6[%c7_94, %c0_95, %c0_96] : memref<9x64x64xf32, #tpu.memory_space<vmem>>, vector<1x64x64xf32>
    %119 = vector.shape_cast %118 : vector<1x64x64xf32> to vector<64x64xf32>
    %cst_97 = arith.constant dense<0.000000e+00> : vector<128x64xf32>
    %120 = tpu.matmul %117, %119, %cst_97 {dimension_numbers = #tpu.dot_dimension_numbers<[1], [0], [0], [1], [0, 0, 1, 1], [], []>} : vector<128x64xf32>, vector<64x64xf32>, vector<128x64xf32> -> vector<128x64xf32>
    %121 = arith.addf %115, %120 : vector<128x64xf32>
    %c2_98 = arith.constant 2 : index
    %c2_99 = arith.constant 2 : index
    %c0_100 = arith.constant 0 : index
    %122 = vector.load %arg9[%c2_98, %c2_99, %c0_100] : memref<10x18x64xf32, #tpu.memory_space<vmem>>, vector<8x16x64xf32>
    %123 = vector.shape_cast %122 : vector<8x16x64xf32> to vector<128x64xf32>
    %c8_101 = arith.constant 8 : index
    %c0_102 = arith.constant 0 : index
    %c0_103 = arith.constant 0 : index
    %124 = vector.load %arg6[%c8_101, %c0_102, %c0_103] : memref<9x64x64xf32, #tpu.memory_space<vmem>>, vector<1x64x64xf32>
    %125 = vector.shape_cast %124 : vector<1x64x64xf32> to vector<64x64xf32>
    %cst_104 = arith.constant dense<0.000000e+00> : vector<128x64xf32>
    %126 = tpu.matmul %123, %125, %cst_104 {dimension_numbers = #tpu.dot_dimension_numbers<[1], [0], [0], [1], [0, 0, 1, 1], [], []>} : vector<128x64xf32>, vector<64x64xf32>, vector<128x64xf32> -> vector<128x64xf32>
    %127 = arith.addf %121, %126 : vector<128x64xf32>
    %c0_105 = arith.constant 0 : index
    %c0_106 = arith.constant 0 : index
    %128 = vector.load %arg7[%c0_105, %c0_106] : memref<1x64xf32, #tpu.memory_space<vmem>>, vector<1x64xf32>
    %129 = vector.broadcast %128 : vector<1x64xf32> to vector<128x64xf32>
    %130 = arith.addf %127, %129 : vector<128x64xf32>
    %131 = vector.shape_cast %130 : vector<128x64xf32> to vector<8x16x64xf32>
    %132 = vector.extract_strided_slice %131 {offsets = [0, 0, 0], sizes = [8, 1, 64], strides = [1, 1, 1]} : vector<8x16x64xf32> to vector<8x1x64xf32>
    %133 = vector.shape_cast %132 : vector<8x1x64xf32> to vector<8x64xf32>
    %134 = vector.extract_strided_slice %131 {offsets = [0, 1, 0], sizes = [8, 1, 64], strides = [1, 1, 1]} : vector<8x16x64xf32> to vector<8x1x64xf32>
    %135 = vector.shape_cast %134 : vector<8x1x64xf32> to vector<8x64xf32>
    %136 = vector.extract_strided_slice %131 {offsets = [0, 2, 0], sizes = [8, 1, 64], strides = [1, 1, 1]} : vector<8x16x64xf32> to vector<8x1x64xf32>
    %137 = vector.shape_cast %136 : vector<8x1x64xf32> to vector<8x64xf32>
    %138 = vector.extract_strided_slice %131 {offsets = [0, 3, 0], sizes = [8, 1, 64], strides = [1, 1, 1]} : vector<8x16x64xf32> to vector<8x1x64xf32>
    %139 = vector.shape_cast %138 : vector<8x1x64xf32> to vector<8x64xf32>
    %140 = vector.extract_strided_slice %131 {offsets = [0, 4, 0], sizes = [8, 1, 64], strides = [1, 1, 1]} : vector<8x16x64xf32> to vector<8x1x64xf32>
    %141 = vector.shape_cast %140 : vector<8x1x64xf32> to vector<8x64xf32>
    %142 = vector.extract_strided_slice %131 {offsets = [0, 5, 0], sizes = [8, 1, 64], strides = [1, 1, 1]} : vector<8x16x64xf32> to vector<8x1x64xf32>
    %143 = vector.shape_cast %142 : vector<8x1x64xf32> to vector<8x64xf32>
    %144 = vector.extract_strided_slice %131 {offsets = [0, 6, 0], sizes = [8, 1, 64], strides = [1, 1, 1]} : vector<8x16x64xf32> to vector<8x1x64xf32>
    %145 = vector.shape_cast %144 : vector<8x1x64xf32> to vector<8x64xf32>
    %146 = vector.extract_strided_slice %131 {offsets = [0, 7, 0], sizes = [8, 1, 64], strides = [1, 1, 1]} : vector<8x16x64xf32> to vector<8x1x64xf32>
    %147 = vector.shape_cast %146 : vector<8x1x64xf32> to vector<8x64xf32>
    %148 = vector.extract_strided_slice %131 {offsets = [0, 8, 0], sizes = [8, 1, 64], strides = [1, 1, 1]} : vector<8x16x64xf32> to vector<8x1x64xf32>
    %149 = vector.shape_cast %148 : vector<8x1x64xf32> to vector<8x64xf32>
    %150 = vector.extract_strided_slice %131 {offsets = [0, 9, 0], sizes = [8, 1, 64], strides = [1, 1, 1]} : vector<8x16x64xf32> to vector<8x1x64xf32>
    %151 = vector.shape_cast %150 : vector<8x1x64xf32> to vector<8x64xf32>
    %152 = vector.extract_strided_slice %131 {offsets = [0, 10, 0], sizes = [8, 1, 64], strides = [1, 1, 1]} : vector<8x16x64xf32> to vector<8x1x64xf32>
    %153 = vector.shape_cast %152 : vector<8x1x64xf32> to vector<8x64xf32>
    %154 = vector.extract_strided_slice %131 {offsets = [0, 11, 0], sizes = [8, 1, 64], strides = [1, 1, 1]} : vector<8x16x64xf32> to vector<8x1x64xf32>
    %155 = vector.shape_cast %154 : vector<8x1x64xf32> to vector<8x64xf32>
    %156 = vector.extract_strided_slice %131 {offsets = [0, 12, 0], sizes = [8, 1, 64], strides = [1, 1, 1]} : vector<8x16x64xf32> to vector<8x1x64xf32>
    %157 = vector.shape_cast %156 : vector<8x1x64xf32> to vector<8x64xf32>
    %158 = vector.extract_strided_slice %131 {offsets = [0, 13, 0], sizes = [8, 1, 64], strides = [1, 1, 1]} : vector<8x16x64xf32> to vector<8x1x64xf32>
    %159 = vector.shape_cast %158 : vector<8x1x64xf32> to vector<8x64xf32>
    %160 = vector.extract_strided_slice %131 {offsets = [0, 14, 0], sizes = [8, 1, 64], strides = [1, 1, 1]} : vector<8x16x64xf32> to vector<8x1x64xf32>
    %161 = vector.shape_cast %160 : vector<8x1x64xf32> to vector<8x64xf32>
    %162 = vector.extract_strided_slice %131 {offsets = [0, 15, 0], sizes = [8, 1, 64], strides = [1, 1, 1]} : vector<8x16x64xf32> to vector<8x1x64xf32>
    %163 = vector.shape_cast %162 : vector<8x1x64xf32> to vector<8x64xf32>
    %164 = tpu.concatenate %133, %135, %137, %139, %141, %143, %145, %147, %149, %151, %153, %155, %157, %159, %161, %163 in 1 : vector<8x64xf32>, vector<8x64xf32>, vector<8x64xf32>, vector<8x64xf32>, vector<8x64xf32>, vector<8x64xf32>, vector<8x64xf32>, vector<8x64xf32>, vector<8x64xf32>, vector<8x64xf32>, vector<8x64xf32>, vector<8x64xf32>, vector<8x64xf32>, vector<8x64xf32>, vector<8x64xf32>, vector<8x64xf32> -> vector<8x1024xf32>
    %c0_107 = arith.constant 0 : index
    %c0_108 = arith.constant 0 : index
    %c0_109 = arith.constant 0 : index
    %165 = vector.load %arg3[%c0_107, %c0_108, %c0_109] : memref<1x8x1024xf32, #tpu.memory_space<vmem>>, vector<1x8x1024xf32>
    %166 = vector.shape_cast %165 : vector<1x8x1024xf32> to vector<8x1024xf32>
    %167 = arith.addf %164, %166 : vector<8x1024xf32>
    %cst_110 = arith.constant 0.000000e+00 : f32
    %168 = vector.broadcast %cst_110 : f32 to vector<8x1024xf32>
    %169 = arith.maximumf %167, %168 : vector<8x1024xf32>
    %c0_111 = arith.constant 0 : index
    %c0_112 = arith.constant 0 : index
    %c0_113 = arith.constant 0 : index
    %170 = vector.load %arg8[%c0_111, %c0_112, %c0_113] : memref<1x8x1024xf32, #tpu.memory_space<vmem>>, vector<1x8x1024xf32>
    %171 = vector.shape_cast %170 : vector<1x8x1024xf32> to vector<8x1024xf32>
    %172 = vector.shape_cast %169 : vector<8x1024xf32> to vector<1x8x1024xf32>
    tpu.vector_store %arg8[%c0_111, %c0_112, %c0_113], %172 {strides = array<i32>} : memref<1x8x1024xf32, #tpu.memory_space<vmem>>, vector<1x8x1024xf32>,
    return
  }
  func.func @transform_0(%arg0: i32, %arg1: i32) -> (i32, i32, i32, i32) {
    %c2_i32 = arith.constant 2 : i32
    %0 = arith.muli %arg0, %c2_i32 : i32
    %1 = arith.addi %0, %arg1 : i32
    %c0_i32 = arith.constant 0 : i32
    %c0_i32_0 = arith.constant 0 : i32
    %c0_i32_1 = arith.constant 0 : i32
    %c0_i32_2 = arith.constant 0 : i32
    return %1, %c0_i32, %c0_i32_0, %c0_i32_1 : i32, i32, i32, i32
  }
  func.func @transform_1(%arg0: i32, %arg1: i32) -> (i32, i32, i32) {
    %c0_i32 = arith.constant 0 : i32
    %c0_i32_0 = arith.constant 0 : i32
    return %arg0, %arg1, %c0_i32 : i32, i32, i32
  }
  func.func @transform_2(%arg0: i32, %arg1: i32) -> (i32, i32, i32) {
    %c0_i32 = arith.constant 0 : i32
    %c0_i32_0 = arith.constant 0 : i32
    %c0_i32_1 = arith.constant 0 : i32
    %c0_i32_2 = arith.constant 0 : i32
    return %c0_i32, %c0_i32_0, %c0_i32_1 : i32, i32, i32
  }
  func.func @transform_3(%arg0: i32, %arg1: i32) -> (i32, i32) {
    %c0_i32 = arith.constant 0 : i32
    %c0_i32_0 = arith.constant 0 : i32
    %c0_i32_1 = arith.constant 0 : i32
    return %c0_i32, %c0_i32_0 : i32, i32
  }
  func.func @transform_4(%arg0: i32, %arg1: i32) -> (i32, i32, i32) {
    %c0_i32 = arith.constant 0 : i32
    %c0_i32_0 = arith.constant 0 : i32
    %c0_i32_1 = arith.constant 0 : i32
    %c0_i32_2 = arith.constant 0 : i32
    return %c0_i32, %c0_i32_0, %c0_i32_1 : i32, i32, i32
  }
  func.func @transform_5(%arg0: i32, %arg1: i32) -> (i32, i32) {
    %c0_i32 = arith.constant 0 : i32
    %c0_i32_0 = arith.constant 0 : i32
    %c0_i32_1 = arith.constant 0 : i32
    return %c0_i32, %c0_i32_0 : i32, i32
  }
  func.func @transform_6(%arg0: i32, %arg1: i32) -> (i32, i32, i32) {
    %c0_i32 = arith.constant 0 : i32
    %c0_i32_0 = arith.constant 0 : i32
    return %arg0, %arg1, %c0_i32 : i32, i32, i32
  }
}

</mosaic_0001>

<llo_original>
// kernel: tpu_custom_call.1
$region0: #{tpu_custom_call.1}
  #allocation0 [shape = 'u32[]', space=smem, size = 0x4, offset = 0x4, fixed_abs, tag = 'smem constant byte address 0x4 - core index']
  #allocation1 [shape = 'u32[144,128]{1,0:T(1,128)}', space=vmem, size = 0x12000, scoped, tag = 'internal scratch']
  #allocation2 [shape = 'f32[10,18,64]{2,1,0:T(8,128)}', space=vmem, size = 0x1e000, scoped, tag = 'scratch operand']
  %s0 = inlined_call_operand.vmem [shape: f32[4,12,18,64], index: 0, kind: input, shape index: {}]
  %s1 = inlined_call_operand.vmem [shape: f32[2,16,1024], index: 1, kind: input, shape index: {}]
  %s2 = inlined_call_operand.vmem [shape: f32[9,64,64], index: 2, kind: input, shape index: {}]
  %s3 = inlined_call_operand.vmem [shape: f32[1,64], index: 3, kind: input, shape index: {}]
  %s4 = inlined_call_operand.vmem [shape: f32[9,64,64], index: 4, kind: input, shape index: {}]
  %s5 = inlined_call_operand.vmem [shape: f32[1,64], index: 5, kind: input, shape index: {}]
  %s6 = inlined_call_operand.hbm [shape: f32[2,16,1024], index: 6, kind: output, shape index: {}]
  %s7 = sld [smem:[#allocation0]]
  $region69: #{tpu_custom_call.1} parent=0
    _
  %s9 = ssub.s32 1, %s7
  %s10 = scalar_select 0, %s9, %s7
  $region1: #{tpu_custom_call.1} parent=0
    #allocation3 [shape = 'u8[65536]{0}', space=vmem, size = 0x10000, scoped, tag = 'output window, operand 0']
    #allocation4 [shape = 's32[2]{0}', space=sflag, size = 0x8, scoped, tag = 'scoped memory for tpu_custom_call.1']
    %11 = vsyncpa [#allocation4], 0
    %s12 = scalar_lea.sflag [#allocation4], 1
    %13 = vsyncpa %s12, 0
    loop: start=0, step=1, limit=6
    $region2: #{tpu_custom_call.1} parent=1 // loop_pre_header
      _
    $region3: #{tpu_custom_call.1} parent=1 // loop_header
      %s15 = sphi 0, %s19
      %p16 = scmp.ge.s32.totalorder %s15, 6
      %s22 = sphi 0, %s34
      %s23 = sphi 0, %s30
      %s24 = sphi 0, %s22
      %s25 = sphi 0, %s23
      %s26 = sphi 0, %s24
      %s27 = sphi 0, %s25
      %s41 = sphi 0, %s43
      %s44 = sphi 0, %s41
      %s45 = sphi 0, %s44
      %s61 = sphi 0, %s45
      %s69 = sphi 0, %s71
      %s72 = sphi 0, %s69
      %s73 = sphi 0, %s72
      %s89 = sphi 0, %s73
      %s93 = sphi 0, %s93
      %s95 = sphi 0, %s93
      %s96 = sphi 0, %s95
      %s110 = sphi 0, %s96
      %s114 = sphi 0, %s114
      %s116 = sphi 0, %s114
      %s117 = sphi 0, %s116
      %s131 = sphi 0, %s117
      %s135 = sphi 0, %s135
      %s137 = sphi 0, %s135
      %s138 = sphi 0, %s137
      %s152 = sphi 0, %s138
      %s156 = sphi 0, %s156
      %s158 = sphi 0, %s156
      %s159 = sphi 0, %s158
      %s173 = sphi 0, %s159
      %s181 = sphi 0, %s183
      %s184 = sphi 0, %s181
      %s185 = sphi 0, %s184
      %s201 = sphi 0, %s185
    $region4: #{tpu_custom_call.1} parent=1 // loop_header_branch
      %18 = sbr.rel (%p16) target = $region8
    $region5: #{tpu_custom_call.1} parent=1 // loop_body
      %s20 = ssub.s32 %s15, 1
      %s21 = ssub.s32 %s15, 2
      %s28 = sadd.s32 1, %s23
      %p29 = scmp.ge.s32.totalorder %s28, 2
      %s30 = scalar_select %p29, 0, %s28
      %s31 = sadd.s32 1, %s22
      %s32 = scalar_select %p29, %s31, %s22
      %p33 = scmp.ge.s32.totalorder %s32, 2
      %s34 = scalar_select %p33, 0, %s32
      %s35 = smul.u32 %s22, 2
      %s36 = sadd.s32 %s35, %s23
      %s37 = smul.u32 %s34, 2
      %s38 = sadd.s32 %s37, %s30
      %s39 = ssub.s32 %s36, %s38
      %p40 = scmp.eq.s32.totalorder %s39, 0
      %s42 = sadd.s32 %s41, 1
      %s43 = scalar_select %p40, %s41, %s42
      %p46 = pneg %p40
      %p47 = scmp.eq.s32.totalorder %s15, 3
      %p48 = por %p46, %p47
      %p49 = scmp.ne.s32.totalorder %s41, %s44
      %p50 = scmp.eq.s32.totalorder %s15, 0
      %p51 = por %p49, %p50
      %p52 = scmp.ne.s32.totalorder %s41, %s44
      %p53 = scmp.eq.s32.totalorder %s20, 3
      %p54 = por %p52, %p53
      %p55 = scmp.ne.s32.totalorder %s44, %s45
      %p56 = scmp.eq.s32.totalorder %s20, 0
      %p57 = por %p55, %p56
      %p58 = scmp.ne.s32.totalorder %s44, %s45
      %p59 = scmp.eq.s32.totalorder %s21, 3
      %p60 = por %p58, %p59
      %p62 = scmp.ne.s32.totalorder %s45, %s61
      %p63 = scmp.eq.s32.totalorder %s21, 0
      %p64 = por %p62, %p63
      %s65 = ssub.s32 %s22, %s34
      %s66 = ssub.s32 %s23, %s30
      %s67 = sor.u32 %s65, %s66
      %p68 = scmp.eq.s32.totalorder %s67, 0
      %s70 = sadd.s32 %s69, 1
      %s71 = scalar_select %p68, %s69, %s70
      %p74 = pneg %p68
      %p75 = scmp.eq.s32.totalorder %s15, 3
      %p76 = por %p74, %p75
      %p77 = scmp.ne.s32.totalorder %s69, %s72
      %p78 = scmp.eq.s32.totalorder %s15, 0
      %p79 = por %p77, %p78
      %p80 = scmp.ne.s32.totalorder %s69, %s72
      %p81 = scmp.eq.s32.totalorder %s20, 3
      %p82 = por %p80, %p81
      %p83 = scmp.ne.s32.totalorder %s72, %s73
      %p84 = scmp.eq.s32.totalorder %s20, 0
      %p85 = por %p83, %p84
      %p86 = scmp.ne.s32.totalorder %s72, %s73
      %p87 = scmp.eq.s32.totalorder %s21, 3
      %p88 = por %p86, %p87
      %p90 = scmp.ne.s32.totalorder %s73, %s89
      %p91 = scmp.eq.s32.totalorder %s21, 0
      %p92 = por %p90, %p91
      %s94 = sadd.s32 %s93, 1
      %p97 = scmp.eq.s32.totalorder %s15, 3
      %p98 = scmp.ne.s32.totalorder %s93, %s95
      %p99 = scmp.eq.s32.totalorder %s15, 0
      %p100 = por %p98, %p99
      %p101 = scmp.ne.s32.totalorder %s93, %s95
      %p102 = scmp.eq.s32.totalorder %s20, 3
      %p103 = por %p101, %p102
      %p104 = scmp.ne.s32.totalorder %s95, %s96
      %p105 = scmp.eq.s32.totalorder %s20, 0
      %p106 = por %p104, %p105
      %p107 = scmp.ne.s32.totalorder %s95, %s96
      %p108 = scmp.eq.s32.totalorder %s21, 3
      %p109 = por %p107, %p108
      %p111 = scmp.ne.s32.totalorder %s96, %s110
      %p112 = scmp.eq.s32.totalorder %s21, 0
      %p113 = por %p111, %p112
      %s115 = sadd.s32 %s114, 1
      %p118 = scmp.eq.s32.totalorder %s15, 3
      %p119 = scmp.ne.s32.totalorder %s114, %s116
      %p120 = scmp.eq.s32.totalorder %s15, 0
      %p121 = por %p119, %p120
      %p122 = scmp.ne.s32.totalorder %s114, %s116
      %p123 = scmp.eq.s32.totalorder %s20, 3
      %p124 = por %p122, %p123
      %p125 = scmp.ne.s32.totalorder %s116, %s117
      %p126 = scmp.eq.s32.totalorder %s20, 0
      %p127 = por %p125, %p126
      %p128 = scmp.ne.s32.totalorder %s116, %s117
      %p129 = scmp.eq.s32.totalorder %s21, 3
      %p130 = por %p128, %p129
      %p132 = scmp.ne.s32.totalorder %s117, %s131
      %p133 = scmp.eq.s32.totalorder %s21, 0
      %p134 = por %p132, %p133
      %s136 = sadd.s32 %s135, 1
      %p139 = scmp.eq.s32.totalorder %s15, 3
      %p140 = scmp.ne.s32.totalorder %s135, %s137
      %p141 = scmp.eq.s32.totalorder %s15, 0
      %p142 = por %p140, %p141
      %p143 = scmp.ne.s32.totalorder %s135, %s137
      %p144 = scmp.eq.s32.totalorder %s20, 3
      %p145 = por %p143, %p144
      %p146 = scmp.ne.s32.totalorder %s137, %s138
      %p147 = scmp.eq.s32.totalorder %s20, 0
      %p148 = por %p146, %p147
      %p149 = scmp.ne.s32.totalorder %s137, %s138
      %p150 = scmp.eq.s32.totalorder %s21, 3
      %p151 = por %p149, %p150
      %p153 = scmp.ne.s32.totalorder %s138, %s152
      %p154 = scmp.eq.s32.totalorder %s21, 0
      %p155 = por %p153, %p154
      %s157 = sadd.s32 %s156, 1
      %p160 = scmp.eq.s32.totalorder %s15, 3
      %p161 = scmp.ne.s32.totalorder %s156, %s158
      %p162 = scmp.eq.s32.totalorder %s15, 0
      %p163 = por %p161, %p162
      %p164 = scmp.ne.s32.totalorder %s156, %s158
      %p165 = scmp.eq.s32.totalorder %s20, 3
      %p166 = por %p164, %p165
      %p167 = scmp.ne.s32.totalorder %s158, %s159
      %p168 = scmp.eq.s32.totalorder %s20, 0
      %p169 = por %p167, %p168
      %p170 = scmp.ne.s32.totalorder %s158, %s159
      %p171 = scmp.eq.s32.totalorder %s21, 3
      %p172 = por %p170, %p171
      %p174 = scmp.ne.s32.totalorder %s159, %s173
      %p175 = scmp.eq.s32.totalorder %s21, 0
      %p176 = por %p174, %p175
      %s177 = ssub.s32 %s22, %s34
      %s178 = ssub.s32 %s23, %s30
      %s179 = sor.u32 %s177, %s178
      %p180 = scmp.eq.s32.totalorder %s179, 0
      %s182 = sadd.s32 %s181, 1
      %s183 = scalar_select %p180, %s181, %s182
      %p186 = pneg %p180
      %p187 = scmp.eq.s32.totalorder %s15, 3
      %p188 = por %p186, %p187
      %p189 = scmp.ne.s32.totalorder %s181, %s184
      %p190 = scmp.eq.s32.totalorder %s15, 0
      %p191 = por %p189, %p190
      %p192 = scmp.ne.s32.totalorder %s181, %s184
      %p193 = scmp.eq.s32.totalorder %s20, 3
      %p194 = por %p192, %p193
      %p195 = scmp.ne.s32.totalorder %s184, %s185
      %p196 = scmp.eq.s32.totalorder %s20, 0
      %p197 = por %p195, %p196
      %p198 = scmp.ne.s32.totalorder %s184, %s185
      %p199 = scmp.eq.s32.totalorder %s21, 3
      %p200 = por %p198, %p199
      %p202 = scmp.ne.s32.totalorder %s185, %s201
      %p203 = scmp.eq.s32.totalorder %s21, 0
      %p204 = por %p202, %p203
      %p205 = scmp.le.s32.totalorder 1, %s15
      %p206 = scmp.lt.s32.totalorder %s15, 5
      %p207 = pnand %p205, %p206
      %p208 = pneg %p207
      // Predicated region
      $region9: #{tpu_custom_call.1} parent=5 // pred_check
        _
      $region10: #{tpu_custom_call.1} parent=5 // pred_check_branch
        %210 = sbr.rel (%p207) target = $region12
      $region11: #{tpu_custom_call.1} parent=5 // pred_region
        %s211 = ssub.s32 %s15, 1
        // Predicated region
        $region13: #{tpu_custom_call.1} parent=11 // pred_check
          %p212 = pneg %p106
        $region14: #{tpu_custom_call.1} parent=11 // pred_check_branch
          %214 = sbr.rel (%p212) target = $region16
        $region15: #{tpu_custom_call.1} parent=11 // pred_region
          _
        $region16: #{tpu_custom_call.1} parent=11 // pred_fallthru
          _
        // Predicated region
        $region17: #{tpu_custom_call.1} parent=11 // pred_check
          %p215 = pneg %p127
        $region18: #{tpu_custom_call.1} parent=11 // pred_check_branch
          %217 = sbr.rel (%p215) target = $region20
        $region19: #{tpu_custom_call.1} parent=11 // pred_region
          _
        $region20: #{tpu_custom_call.1} parent=11 // pred_fallthru
          _
        // Predicated region
        $region21: #{tpu_custom_call.1} parent=11 // pred_check
          %p218 = pneg %p148
        $region22: #{tpu_custom_call.1} parent=11 // pred_check_branch
          %220 = sbr.rel (%p218) target = $region24
        $region23: #{tpu_custom_call.1} parent=11 // pred_region
          _
        $region24: #{tpu_custom_call.1} parent=11 // pred_fallthru
          _
        // Predicated region
        $region25: #{tpu_custom_call.1} parent=11 // pred_check
          %p221 = pneg %p169
        $region26: #{tpu_custom_call.1} parent=11 // pred_check_branch
          %223 = sbr.rel (%p221) target = $region28
        $region27: #{tpu_custom_call.1} parent=11 // pred_region
          _
        $region28: #{tpu_custom_call.1} parent=11 // pred_fallthru
          _
      $region12: #{tpu_custom_call.1} parent=5 // pred_fallthru
        _
      %p224 = scmp.lt.s32.totalorder %s15, 4
      // Predicated region
      $region29: #{tpu_custom_call.1} parent=5 // pred_check
        %p225 = pneg %p224
      $region30: #{tpu_custom_call.1} parent=5 // pred_check_branch
        %227 = sbr.rel (%p225) target = $region32
      $region31: #{tpu_custom_call.1} parent=5 // pred_region
        // Predicated region
        $region33: #{tpu_custom_call.1} parent=31 // pred_check
          %p228 = pneg %p51
        $region34: #{tpu_custom_call.1} parent=31 // pred_check_branch
          %230 = sbr.rel (%p228) target = $region36
        $region35: #{tpu_custom_call.1} parent=31 // pred_region
          %s231 = smul.u32 %s22, 2
          %s232 = sadd.s32 %s231, %s23
          %p233 = scmp.lt.s32.totalorder %s232, 3
          %s234 = scalar_select %p233, %s232, 3
          %s235 = smul.addr %s234, 36
          %s236 = smul.addr %s235, 8
          %s237 = scalar_lea.vmem %s0, %s236
          %s238 = smul.u32 %s22, 2
          %s239 = sadd.s32 %s238, %s23
        $region36: #{tpu_custom_call.1} parent=31 // pred_fallthru
          _
        // Predicated region
        $region37: #{tpu_custom_call.1} parent=31 // pred_check
          %p240 = pneg %p79
        $region38: #{tpu_custom_call.1} parent=31 // pred_check_branch
          %242 = sbr.rel (%p240) target = $region40
        $region39: #{tpu_custom_call.1} parent=31 // pred_region
          %p243 = scmp.lt.s32.totalorder %s22, 1
          %s244 = scalar_select %p243, %s22, 1
          %p245 = scmp.lt.s32.totalorder %s23, 1
          %s246 = scalar_select %p245, %s23, 1
          %s247 = smul.addr %s246, 8
          %s248 = smul.addr %s244, 16
          %s249 = sadd.s32 %s247, %s248
          %s250 = smul.addr %s249, 8
          %s251 = scalar_lea.vmem %s1, %s250
        $region40: #{tpu_custom_call.1} parent=31 // pred_fallthru
          _
      $region32: #{tpu_custom_call.1} parent=5 // pred_fallthru
        _
      %p252 = scmp.le.s32.totalorder 1, %s15
      %p253 = scmp.lt.s32.totalorder %s15, 5
      %p254 = pnand %p252, %p253
      %p255 = pneg %p254
      // Predicated region
      $region41: #{tpu_custom_call.1} parent=5 // pred_check
        _
      $region42: #{tpu_custom_call.1} parent=5 // pred_check_branch
        %257 = sbr.rel (%p254) target = $region44
      $region43: #{tpu_custom_call.1} parent=5 // pred_region
        %s258 = ssub.s32 %s15, 1
        %s259 = smul.u32 %s24, 2
        %s260 = sadd.s32 %s259, %s25
        %p261 = scmp.lt.s32.totalorder %s260, 3
        %s262 = scalar_select %p261, %s260, 3
        %s263 = smul.addr %s262, 36
        %s264 = smul.addr %s263, 8
        %s265 = scalar_lea.vmem %s0, %s264
        %p266 = pneg %p57
        %p267 = pneg %p54
        %p268 = scmp.lt.s32.totalorder %s24, 1
        %s269 = scalar_select %p268, %s24, 1
        %p270 = scmp.lt.s32.totalorder %s25, 1
        %s271 = scalar_select %p270, %s25, 1
        %s272 = smul.addr %s271, 8
        %s273 = smul.addr %s269, 16
        %s274 = sadd.s32 %s272, %s273
        %s275 = smul.addr %s274, 8
        %s276 = scalar_lea.vmem %s1, %s275
        %p277 = pneg %p85
        %p278 = pneg %p82
        %p279 = pneg %p106
        %p280 = pneg %p103
        %p281 = pneg %p127
        %p282 = pneg %p124
        %p283 = pneg %p148
        %p284 = pneg %p145
        %p285 = pneg %p169
        %p286 = pneg %p166
        %p287 = pneg %p197
        %p288 = pneg %p194
        %s289 = sand.u32 %s184, 1
        %s290 = scalar_lea.sflag [#allocation4], %s289
        %s291 = sand.u32 %s184, 1
        %s292 = smul.addr %s291, 64
        %s293 = scalar_lea.vmem [#allocation3], %s292
        %s294 = smul.u32 %s24, 2
        %s295 = sadd.s32 %s294, %s25
        %p296 = scmp.lt.s32.totalorder %s295, 3
        %s297 = scalar_select %p296, %s295, 3
        %s298 = smul.addr %s297, 36
        %s299 = smul.addr %s298, 8
        %s300 = scalar_lea.vmem %s0, %s299
        %s301 = smul.u32 %s24, 2
        %s302 = sadd.s32 %s301, %s25
        %p303 = scmp.lt.s32.totalorder %s24, 1
        %s304 = scalar_select %p303, %s24, 1
        %p305 = scmp.lt.s32.totalorder %s25, 1
        %s306 = scalar_select %p305, %s25, 1
        %s307 = smul.addr %s306, 8
        %s308 = smul.addr %s304, 16
        %s309 = sadd.s32 %s307, %s308
        %s310 = smul.addr %s309, 8
        %s311 = scalar_lea.vmem %s1, %s310
        %p312 = scmp.eq.s32.totalorder %s25, 0
        // Predicated region
        $region45: #{tpu_custom_call.1} parent=43 // pred_check
          %p313 = pneg %p312
        $region46: #{tpu_custom_call.1} parent=43 // pred_check_branch
          %315 = sbr.rel (%p313) target = $region48
        $region47: #{tpu_custom_call.1} parent=43 // pred_region
          %vm316 = vcmask 516096
          %317 = vst.msk [vmem:[#allocation2] sm:$0x1] %vm316, 0.0
          %318 = vst.msk [vmem:[#allocation2 + $0x18] sm:$0x1] %vm316, 0.0
          %319 = vst.msk [vmem:[#allocation2 + $0x30] sm:$0x1] %vm316, 0.0
          %320 = vst.msk [vmem:[#allocation2 + $0x48] sm:$0x1] %vm316, 0.0
          %321 = vst.msk [vmem:[#allocation2 + $0x60] sm:$0x1] %vm316, 0.0
          %322 = vst.msk [vmem:[#allocation2 + $0x78] sm:$0x1] %vm316, 0.0
          %323 = vst.msk [vmem:[#allocation2 + $0x90] sm:$0x1] %vm316, 0.0
          %324 = vst.msk [vmem:[#allocation2 + $0xa8] sm:$0x1] %vm316, 0.0
          %325 = vst.msk [vmem:[#allocation2 + $0xc0] sm:$0x1] %vm316, 0.0
          %326 = vst.msk [vmem:[#allocation2 + $0xd8] sm:$0x1] %vm316, 0.0
          %327 = vst.msk [vmem:[#allocation2 + $0x11] sm:$0x1] %vm316, 0.0
          %328 = vst.msk [vmem:[#allocation2 + $0x29] sm:$0x1] %vm316, 0.0
          %329 = vst.msk [vmem:[#allocation2 + $0x41] sm:$0x1] %vm316, 0.0
          %330 = vst.msk [vmem:[#allocation2 + $0x59] sm:$0x1] %vm316, 0.0
          %331 = vst.msk [vmem:[#allocation2 + $0x71] sm:$0x1] %vm316, 0.0
          %332 = vst.msk [vmem:[#allocation2 + $0x89] sm:$0x1] %vm316, 0.0
          %333 = vst.msk [vmem:[#allocation2 + $0xa1] sm:$0x1] %vm316, 0.0
          %334 = vst.msk [vmem:[#allocation2 + $0xb9] sm:$0x1] %vm316, 0.0
          %335 = vst.msk [vmem:[#allocation2 + $0xd1] sm:$0x1] %vm316, 0.0
          %336 = vst.msk [vmem:[#allocation2 + $0xe9] sm:$0x1] %vm316, 0.0
        $region48: #{tpu_custom_call.1} parent=43 // pred_fallthru
          _
        %v337 = vld [vmem:[%s300] sm:$0xff]
        %v338 = vld [vmem:[%s300 + $0x8] sm:$0xff]
        %v339 = vld [vmem:[%s300 + $0x10] sm:$0x3]
        %v340 = vld [vmem:[%s300 + $0x18] sm:$0xff]
        %v341 = vld [vmem:[%s300 + $0x20] sm:$0xff]
        %v342 = vld [vmem:[%s300 + $0x28] sm:$0x3]
        %v343 = vld [vmem:[%s300 + $0x30] sm:$0xff]
        %v344 = vld [vmem:[%s300 + $0x38] sm:$0xff]
        %v345 = vld [vmem:[%s300 + $0x40] sm:$0x3]
        %v346 = vld [vmem:[%s300 + $0x48] sm:$0xff]
        %v347 = vld [vmem:[%s300 + $0x50] sm:$0xff]
        %v348 = vld [vmem:[%s300 + $0x58] sm:$0x3]
        %v349 = vld [vmem:[%s300 + $0x60] sm:$0xff]
        %v350 = vld [vmem:[%s300 + $0x68] sm:$0xff]
        %v351 = vld [vmem:[%s300 + $0x70] sm:$0x3]
        %v352 = vld [vmem:[%s300 + $0x78] sm:$0xff]
        %v353 = vld [vmem:[%s300 + $0x80] sm:$0xff]
        %v354 = vld [vmem:[%s300 + $0x88] sm:$0x3]
        %v355 = vld [vmem:[%s300 + $0x90] sm:$0xff]
        %v356 = vld [vmem:[%s300 + $0x98] sm:$0xff]
        %v357 = vld [vmem:[%s300 + $0xa0] sm:$0x3]
        %v358 = vld [vmem:[%s300 + $0xa8] sm:$0xff]
        %v359 = vld [vmem:[%s300 + $0xb0] sm:$0xff]
        %v360 = vld [vmem:[%s300 + $0xb8] sm:$0x3]
        %v361 = vld [vmem:[%s300 + $0xc0] sm:$0xff]
        %v362 = vld [vmem:[%s300 + $0xc8] sm:$0xff]
        %v363 = vld [vmem:[%s300 + $0xd0] sm:$0x3]
        %v364 = vld [vmem:[%s300 + $0xd8] sm:$0xff]
        %v365 = vld [vmem:[%s300 + $0xe0] sm:$0xff]
        %v366 = vld [vmem:[%s300 + $0xe8] sm:$0x3]
        %v367 = vld [vmem:[%s300 + $0xf0] sm:$0xff]
        %v368 = vld [vmem:[%s300 + $0xf8] sm:$0xff]
        %v369 = vld [vmem:[%s300 + $0x100] sm:$0x3]
        %v370 = vld [vmem:[%s300 + $0x108] sm:$0xff]
        %v371 = vld [vmem:[%s300 + $0x110] sm:$0xff]
        %v372 = vld [vmem:[%s300 + $0x118] sm:$0x3]
        %v373 = vld [vmem:[%s2] sm:$0xff]
        %v374 = vld [vmem:[%s2 + $0x8] sm:$0xff]
        %v375 = vld [vmem:[%s2 + $0x10] sm:$0xff]
        %v376 = vld [vmem:[%s2 + $0x18] sm:$0xff]
        %v377 = vld [vmem:[%s2 + $0x20] sm:$0xff]
        %v378 = vld [vmem:[%s2 + $0x28] sm:$0xff]
        %v379 = vld [vmem:[%s2 + $0x30] sm:$0xff]
        %v380 = vld [vmem:[%s2 + $0x38] sm:$0xff]
        %vm411 = vcmask 1046528
        %v412 = vrot.slane %v337, 1
        %v413 = vrot.slane %v338, 1
        %v414 = vsel %vm411, %v412, %v413
        %v415 = vrot.slane %v339, 1
        %v416 = vsel %vm411, %v413, %v415
        %v417 = vrot.slane %v340, 1
        %v418 = vrot.slane %v341, 1
        %v419 = vsel %vm411, %v417, %v418
        %v420 = vrot.slane %v342, 1
        %v421 = vsel %vm411, %v418, %v420
        %v422 = vrot.slane %v343, 1
        %v423 = vrot.slane %v344, 1
        %v424 = vsel %vm411, %v422, %v423
        %v425 = vrot.slane %v345, 1
        %v426 = vsel %vm411, %v423, %v425
        %v427 = vrot.slane %v346, 1
        %v428 = vrot.slane %v347, 1
        %v429 = vsel %vm411, %v427, %v428
        %v430 = vrot.slane %v348, 1
        %v431 = vsel %vm411, %v428, %v430
        %v432 = vrot.slane %v349, 1
        %v433 = vrot.slane %v350, 1
        %v434 = vsel %vm411, %v432, %v433
        %v435 = vrot.slane %v351, 1
        %v436 = vsel %vm411, %v433, %v435
        %v437 = vrot.slane %v352, 1
        %v438 = vrot.slane %v353, 1
        %v439 = vsel %vm411, %v437, %v438
        %v440 = vrot.slane %v354, 1
        %v441 = vsel %vm411, %v438, %v440
        %v442 = vrot.slane %v355, 1
        %v443 = vrot.slane %v356, 1
        %v444 = vsel %vm411, %v442, %v443
        %v445 = vrot.slane %v357, 1
        %v446 = vsel %vm411, %v443, %v445
        %v447 = vrot.slane %v358, 1
        %v448 = vrot.slane %v359, 1
        %v449 = vsel %vm411, %v447, %v448
        %v450 = vrot.slane %v360, 1
        %v451 = vsel %vm411, %v448, %v450
        %v452 = vrot.slane %v361, 1
        %v453 = vrot.slane %v362, 1
        %v454 = vsel %vm411, %v452, %v453
        %v455 = vrot.slane %v363, 1
        %v456 = vsel %vm411, %v453, %v455
        %v457 = vrot.slane %v364, 1
        %v458 = vrot.slane %v365, 1
        %v459 = vsel %vm411, %v457, %v458
        %v460 = vrot.slane %v366, 1
        %v461 = vsel %vm411, %v458, %v460
        %s462 = scalar_lea.vmem %s2, 64
        %v463 = vld [vmem:[%s462] sm:$0xff]
        %v464 = vld [vmem:[%s462 + $0x8] sm:$0xff]
        %v465 = vld [vmem:[%s462 + $0x10] sm:$0xff]
        %v466 = vld [vmem:[%s462 + $0x18] sm:$0xff]
        %v467 = vld [vmem:[%s462 + $0x20] sm:$0xff]
        %v468 = vld [vmem:[%s462 + $0x28] sm:$0xff]
        %v469 = vld [vmem:[%s462 + $0x30] sm:$0xff]
        %v470 = vld [vmem:[%s462 + $0x38] sm:$0xff]
        %vm471 = vcmask 523264
        %v472 = vsel %vm471, %v414, 0
        %v474 = vsel %vm471, %v416, 0
        %v476 = vsel %vm471, %v419, 0
        %v478 = vsel %vm471, %v421, 0
        %v480 = vsel %vm471, %v424, 0
        %v482 = vsel %vm471, %v426, 0
        %v484 = vsel %vm471, %v429, 0
        %v486 = vsel %vm471, %v431, 0
        %v488 = vsel %vm471, %v434, 0
        %v490 = vsel %vm471, %v436, 0
        %v492 = vsel %vm471, %v439, 0
        %v494 = vsel %vm471, %v441, 0
        %v496 = vsel %vm471, %v444, 0
        %v498 = vsel %vm471, %v446, 0
        %v500 = vsel %vm471, %v449, 0
        %v502 = vsel %vm471, %v451, 0
        %v504 = vsel %vm471, %v454, 0
        %v506 = vsel %vm471, %v456, 0
        %v508 = vsel %vm471, %v459, 0
        %v510 = vsel %vm471, %v461, 0
        %512 = vmatprep.subr.mxu0 0.0
        %513 = vmatpush1.msra.mxu0 %v463
        %514 = vmatprep.subr.mxu0 0.0
        %515 = vmatpush1.msra.mxu0 %v464
        %516 = vmatprep.subr.mxu0 0.0
        %517 = vmatpush1.msra.mxu0 %v465
        %518 = vmatprep.subr.mxu0 0.0
        %519 = vmatpush1.msra.mxu0 %v466
        %520 = vmatprep.subr.mxu0 0.0
        %521 = vmatpush1.msra.mxu0 %v467
        %522 = vmatprep.subr.mxu0 0.0
        %523 = vmatpush1.msra.mxu0 %v468
        %524 = vmatprep.subr.mxu0 0.0
        %525 = vmatpush1.msra.mxu0 %v469
        %526 = vmatprep.subr.mxu0 0.0
        %527 = vmatpush1.msra.mxu0 %v470
        %528 = vmatprep.subr.mxu0 0.0
        %529 = vmatpush1.msra.mxu0 0.0
        %530 = vmatprep.subr.mxu0 0.0
        %531 = vmatpush1.msra.mxu0 0.0
        %532 = vmatprep.subr.mxu0 0.0
        %533 = vmatpush1.msra.mxu0 0.0
        %534 = vmatprep.subr.mxu0 0.0
        %535 = vmatpush1.msra.mxu0 0.0
        %536 = vmatprep.subr.mxu0 0.0
        %537 = vmatpush1.msra.mxu0 0.0
        %538 = vmatprep.subr.mxu0 0.0
        %539 = vmatpush1.msra.mxu0 0.0
        %540 = vmatprep.subr.mxu0 0.0
        %541 = vmatpush1.msra.mxu0 0.0
        %542 = vmatprep.subr.mxu0 0.0
        %543 = vmatpush1.msra.mxu0 0.0
        %544 = vmatprep.subr.mxu0 0.0
        %545 = vmatpush1.msra.mxu0 0.0
        %546 = vmatprep.subr.mxu0 0.0
        %547 = vmatpush1.msra.mxu0 0.0
        %548 = vmatprep.subr.mxu0 0.0
        %549 = vmatpush1.msra.mxu0 0.0
        %550 = vmatprep.subr.mxu0 0.0
        %551 = vmatpush1.msra.mxu0 0.0
        %552 = vmatprep.subr.mxu0 0.0
        %553 = vmatpush1.msra.mxu0 0.0
        %554 = vmatprep.subr.mxu0 0.0
        %555 = vmatpush1.msra.mxu0 0.0
        %556 = vmatprep.subr.mxu0 0.0
        %557 = vmatpush1.msra.mxu0 0.0
        %558 = vmatprep.subr.mxu0 0.0
        %559 = vmatpush1.msra.mxu0 0.0
        %560 = vmatprep.subr.mxu0 0.0
        %561 = vmatpush1.msra.mxu0 0.0
        %562 = vmatprep.subr.mxu0 0.0
        %563 = vmatpush1.msra.mxu0 0.0
        %564 = vmatprep.subr.mxu0 0.0
        %565 = vmatpush1.msra.mxu0 0.0
        %566 = vmatprep.subr.mxu0 0.0
        %567 = vmatpush1.msra.mxu0 0.0
        %568 = vmatprep.subr.mxu0 0.0
        %569 = vmatpush1.msra.mxu0 0.0
        %570 = vmatprep.subr.mxu0 0.0
        %571 = vmatpush1.msra.mxu0 0.0
        %572 = vmatprep.subr.mxu0 0.0
        %573 = vmatpush1.msra.mxu0 0.0
        %574 = vmatprep.subr.mxu0 0.0
        %575 = vmatpush1.msra.mxu0 0.0
        %576 = vmatprep.mubr.f32.mxu0 0.0
        %577 = vmatmul.mubr.f32.gmra.mrb[0].mxu0 %v472
        %v578 = vpop.f32.mrb[0].mxu0
        %v579 = vadd.f32 0.0, %v578
        %v580 = vpop.f32.mrb[0].mxu0
        %581 = vmatprep.mubr.f32.mxu0 0.0
        %582 = vmatmul.mubr.f32.gmra.mrb[0].mxu0 %v474
        %v583 = vpop.f32.mrb[0].mxu0
        %v584 = vadd.f32 0.0, %v583
        %v585 = vpop.f32.mrb[0].mxu0
        %586 = vmatprep.mubr.f32.mxu0 0.0
        %587 = vmatmul.mubr.f32.gmra.mrb[0].mxu0 %v476
        %v588 = vpop.f32.mrb[0].mxu0
        %v589 = vadd.f32 0.0, %v588
        %v590 = vpop.f32.mrb[0].mxu0
        %591 = vmatprep.mubr.f32.mxu0 0.0
        %592 = vmatmul.mubr.f32.gmra.mrb[0].mxu0 %v478
        %v593 = vpop.f32.mrb[0].mxu0
        %v594 = vadd.f32 0.0, %v593
        %v595 = vpop.f32.mrb[0].mxu0
        %596 = vmatprep.mubr.f32.mxu0 0.0
        %597 = vmatmul.mubr.f32.gmra.mrb[0].mxu0 %v480
        %v598 = vpop.f32.mrb[0].mxu0
        %v599 = vadd.f32 0.0, %v598
        %v600 = vpop.f32.mrb[0].mxu0
        %601 = vmatprep.mubr.f32.mxu0 0.0
        %602 = vmatmul.mubr.f32.gmra.mrb[0].mxu0 %v482
        %v603 = vpop.f32.mrb[0].mxu0
        %v604 = vadd.f32 0.0, %v603
        %v605 = vpop.f32.mrb[0].mxu0
        %606 = vmatprep.mubr.f32.mxu0 0.0
        %607 = vmatmul.mubr.f32.gmra.mrb[0].mxu0 %v484
        %v608 = vpop.f32.mrb[0].mxu0
        %v609 = vadd.f32 0.0, %v608
        %v610 = vpop.f32.mrb[0].mxu0
        %611 = vmatprep.mubr.f32.mxu0 0.0
        %612 = vmatmul.mubr.f32.gmra.mrb[0].mxu0 %v486
        %v613 = vpop.f32.mrb[0].mxu0
        %v614 = vadd.f32 0.0, %v613
        %v615 = vpop.f32.mrb[0].mxu0
        %616 = vmatprep.mubr.f32.mxu0 0.0
        %617 = vmatmul.mubr.f32.gmra.mrb[0].mxu0 %v488
        %v618 = vpop.f32.mrb[0].mxu0
        %v619 = vadd.f32 0.0, %v618
        %v620 = vpop.f32.mrb[0].mxu0
        %621 = vmatprep.mubr.f32.mxu0 0.0
        %622 = vmatmul.mubr.f32.gmra.mrb[0].mxu0 %v490
        %v623 = vpop.f32.mrb[0].mxu0
        %v624 = vadd.f32 0.0, %v623
        %v625 = vpop.f32.mrb[0].mxu0
        %626 = vmatprep.mubr.f32.mxu0 0.0
        %627 = vmatmul.mubr.f32.gmra.mrb[0].mxu0 %v492
        %v628 = vpop.f32.mrb[0].mxu0
        %v629 = vadd.f32 0.0, %v628
        %v630 = vpop.f32.mrb[0].mxu0
        %631 = vmatprep.mubr.f32.mxu0 0.0
        %632 = vmatmul.mubr.f32.gmra.mrb[0].mxu0 %v494
        %v633 = vpop.f32.mrb[0].mxu0
        %v634 = vadd.f32 0.0, %v633
        %v635 = vpop.f32.mrb[0].mxu0
        %636 = vmatprep.mubr.f32.mxu0 0.0
        %637 = vmatmul.mubr.f32.gmra.mrb[0].mxu0 %v496
        %v638 = vpop.f32.mrb[0].mxu0
        %v639 = vadd.f32 0.0, %v638
        %v640 = vpop.f32.mrb[0].mxu0
        %641 = vmatprep.mubr.f32.mxu0 0.0
        %642 = vmatmul.mubr.f32.gmra.mrb[0].mxu0 %v498
        %v643 = vpop.f32.mrb[0].mxu0
        %v644 = vadd.f32 0.0, %v643
        %v645 = vpop.f32.mrb[0].mxu0
        %646 = vmatprep.mubr.f32.mxu0 0.0
        %647 = vmatmul.mubr.f32.gmra.mrb[0].mxu0 %v500
        %v648 = vpop.f32.mrb[0].mxu0
        %v649 = vadd.f32 0.0, %v648
        %v650 = vpop.f32.mrb[0].mxu0
        %651 = vmatprep.mubr.f32.mxu0 0.0
        %652 = vmatmul.mubr.f32.gmra.mrb[0].mxu0 %v502
        %v653 = vpop.f32.mrb[0].mxu0
        %v654 = vadd.f32 0.0, %v653
        %v655 = vpop.f32.mrb[0].mxu0
        %656 = vmatprep.mubr.f32.mxu0 0.0
        %657 = vmatmul.mubr.f32.gmra.mrb[0].mxu0 %v504
        %v658 = vpop.f32.mrb[0].mxu0
        %v659 = vadd.f32 0.0, %v658
        %v660 = vpop.f32.mrb[0].mxu0
        %661 = vmatprep.mubr.f32.mxu0 0.0
        %662 = vmatmul.mubr.f32.gmra.mrb[0].mxu0 %v506
        %v663 = vpop.f32.mrb[0].mxu0
        %v664 = vadd.f32 0.0, %v663
        %v665 = vpop.f32.mrb[0].mxu0
        %666 = vmatprep.mubr.f32.mxu0 0.0
        %667 = vmatmul.mubr.f32.gmra.mrb[0].mxu0 %v508
        %v668 = vpop.f32.mrb[0].mxu0
        %v669 = vadd.f32 0.0, %v668
        %v670 = vpop.f32.mrb[0].mxu0
        %671 = vmatprep.mubr.f32.mxu0 0.0
        %672 = vmatmul.mubr.f32.gmra.mrb[0].mxu0 %v510
        %v673 = vpop.f32.mrb[0].mxu0
        %v674 = vadd.f32 0.0, %v673
        %v675 = vpop.f32.mrb[0].mxu0
        %676 = vdwg.mxu0
        %v677 = vsel %vm471, %v337, 0
        %v679 = vsel %vm471, %v338, 0
        %v681 = vsel %vm471, %v340, 0
        %v683 = vsel %vm471, %v341, 0
        %v685 = vsel %vm471, %v343, 0
        %v687 = vsel %vm471, %v344, 0
        %v689 = vsel %vm471, %v346, 0
        %v691 = vsel %vm471, %v347, 0
        %v693 = vsel %vm471, %v349, 0
        %v695 = vsel %vm471, %v350, 0
        %v697 = vsel %vm471, %v352, 0
        %v699 = vsel %vm471, %v353, 0
        %v701 = vsel %vm471, %v355, 0
        %v703 = vsel %vm471, %v356, 0
        %v705 = vsel %vm471, %v358, 0
        %v707 = vsel %vm471, %v359, 0
        %v709 = vsel %vm471, %v361, 0
        %v711 = vsel %vm471, %v362, 0
        %v713 = vsel %vm471, %v364, 0
        %v715 = vsel %vm471, %v365, 0
        %717 = vmatprep.subr.mxu0 0.0
        %718 = vmatpush1.msra.mxu0 %v373
        %719 = vmatprep.subr.mxu0 0.0
        %720 = vmatpush1.msra.mxu0 %v374
        %721 = vmatprep.subr.mxu0 0.0
        %722 = vmatpush1.msra.mxu0 %v375
        %723 = vmatprep.subr.mxu0 0.0
        %724 = vmatpush1.msra.mxu0 %v376
        %725 = vmatprep.subr.mxu0 0.0
        %726 = vmatpush1.msra.mxu0 %v377
        %727 = vmatprep.subr.mxu0 0.0
        %728 = vmatpush1.msra.mxu0 %v378
        %729 = vmatprep.subr.mxu0 0.0
        %730 = vmatpush1.msra.mxu0 %v379
        %731 = vmatprep.subr.mxu0 0.0
        %732 = vmatpush1.msra.mxu0 %v380
        %733 = vmatprep.subr.mxu0 0.0
        %734 = vmatpush1.msra.mxu0 0.0
        %735 = vmatprep.subr.mxu0 0.0
        %736 = vmatpush1.msra.mxu0 0.0
        %737 = vmatprep.subr.mxu0 0.0
        %738 = vmatpush1.msra.mxu0 0.0
        %739 = vmatprep.subr.mxu0 0.0
        %740 = vmatpush1.msra.mxu0 0.0
        %741 = vmatprep.subr.mxu0 0.0
        %742 = vmatpush1.msra.mxu0 0.0
        %743 = vmatprep.subr.mxu0 0.0
        %744 = vmatpush1.msra.mxu0 0.0
        %745 = vmatprep.subr.mxu0 0.0
        %746 = vmatpush1.msra.mxu0 0.0
        %747 = vmatprep.subr.mxu0 0.0
        %748 = vmatpush1.msra.mxu0 0.0
        %749 = vmatprep.subr.mxu0 0.0
        %750 = vmatpush1.msra.mxu0 0.0
        %751 = vmatprep.subr.mxu0 0.0
        %752 = vmatpush1.msra.mxu0 0.0
        %753 = vmatprep.subr.mxu0 0.0
        %754 = vmatpush1.msra.mxu0 0.0
        %755 = vmatprep.subr.mxu0 0.0
        %756 = vmatpush1.msra.mxu0 0.0
        %757 = vmatprep.subr.mxu0 0.0
        %758 = vmatpush1.msra.mxu0 0.0
        %759 = vmatprep.subr.mxu0 0.0
        %760 = vmatpush1.msra.mxu0 0.0
        %761 = vmatprep.subr.mxu0 0.0
        %762 = vmatpush1.msra.mxu0 0.0
        %763 = vmatprep.subr.mxu0 0.0
        %764 = vmatpush1.msra.mxu0 0.0
        %765 = vmatprep.subr.mxu0 0.0
        %766 = vmatpush1.msra.mxu0 0.0
        %767 = vmatprep.subr.mxu0 0.0
        %768 = vmatpush1.msra.mxu0 0.0
        %769 = vmatprep.subr.mxu0 0.0
        %770 = vmatpush1.msra.mxu0 0.0
        %771 = vmatprep.subr.mxu0 0.0
        %772 = vmatpush1.msra.mxu0 0.0
        %773 = vmatprep.subr.mxu0 0.0
        %774 = vmatpush1.msra.mxu0 0.0
        %775 = vmatprep.subr.mxu0 0.0
        %776 = vmatpush1.msra.mxu0 0.0
        %777 = vmatprep.subr.mxu0 0.0
        %778 = vmatpush1.msra.mxu0 0.0
        %779 = vmatprep.subr.mxu0 0.0
        %780 = vmatpush1.msra.mxu0 0.0
        %781 = vmatprep.mubr.f32.mxu0 0.0
        %782 = vmatmul.mubr.f32.gmra.mrb[0].mxu0 %v677
        %v783 = vpop.f32.mrb[0].mxu0
        %v784 = vadd.f32 %v579, %v783
        %v785 = vpop.f32.mrb[0].mxu0
        %786 = vmatprep.mubr.f32.mxu0 0.0
        %787 = vmatmul.mubr.f32.gmra.mrb[0].mxu0 %v679
        %v788 = vpop.f32.mrb[0].mxu0
        %v789 = vadd.f32 %v584, %v788
        %v790 = vpop.f32.mrb[0].mxu0
        %791 = vmatprep.mubr.f32.mxu0 0.0
        %792 = vmatmul.mubr.f32.gmra.mrb[0].mxu0 %v681
        %v793 = vpop.f32.mrb[0].mxu0
        %v794 = vadd.f32 %v589, %v793
        %v795 = vpop.f32.mrb[0].mxu0
        %796 = vmatprep.mubr.f32.mxu0 0.0
        %797 = vmatmul.mubr.f32.gmra.mrb[0].mxu0 %v683
        %v798 = vpop.f32.mrb[0].mxu0
        %v799 = vadd.f32 %v594, %v798
        %v800 = vpop.f32.mrb[0].mxu0
        %801 = vmatprep.mubr.f32.mxu0 0.0
        %802 = vmatmul.mubr.f32.gmra.mrb[0].mxu0 %v685
        %v803 = vpop.f32.mrb[0].mxu0
        %v804 = vadd.f32 %v599, %v803
        %v805 = vpop.f32.mrb[0].mxu0
        %806 = vmatprep.mubr.f32.mxu0 0.0
        %807 = vmatmul.mubr.f32.gmra.mrb[0].mxu0 %v687
        %v808 = vpop.f32.mrb[0].mxu0
        %v809 = vadd.f32 %v604, %v808
        %v810 = vpop.f32.mrb[0].mxu0
        %811 = vmatprep.mubr.f32.mxu0 0.0
        %812 = vmatmul.mubr.f32.gmra.mrb[0].mxu0 %v689
        %v813 = vpop.f32.mrb[0].mxu0
        %v814 = vadd.f32 %v609, %v813
        %v815 = vpop.f32.mrb[0].mxu0
        %816 = vmatprep.mubr.f32.mxu0 0.0
        %817 = vmatmul.mubr.f32.gmra.mrb[0].mxu0 %v691
        %v818 = vpop.f32.mrb[0].mxu0
        %v819 = vadd.f32 %v614, %v818
        %v820 = vpop.f32.mrb[0].mxu0
        %821 = vmatprep.mubr.f32.mxu0 0.0
        %822 = vmatmul.mubr.f32.gmra.mrb[0].mxu0 %v693
        %v823 = vpop.f32.mrb[0].mxu0
        %v824 = vadd.f32 %v619, %v823
        %v825 = vpop.f32.mrb[0].mxu0
        %826 = vmatprep.mubr.f32.mxu0 0.0
        %827 = vmatmul.mubr.f32.gmra.mrb[0].mxu0 %v695
        %v828 = vpop.f32.mrb[0].mxu0
        %v829 = vadd.f32 %v624, %v828
        %v830 = vpop.f32.mrb[0].mxu0
        %831 = vmatprep.mubr.f32.mxu0 0.0
        %832 = vmatmul.mubr.f32.gmra.mrb[0].mxu0 %v697
        %v833 = vpop.f32.mrb[0].mxu0
        %v834 = vadd.f32 %v629, %v833
        %v835 = vpop.f32.mrb[0].mxu0
        %836 = vmatprep.mubr.f32.mxu0 0.0
        %837 = vmatmul.mubr.f32.gmra.mrb[0].mxu0 %v699
        %v838 = vpop.f32.mrb[0].mxu0
        %v839 = vadd.f32 %v634, %v838
        %v840 = vpop.f32.mrb[0].mxu0
        %841 = vmatprep.mubr.f32.mxu0 0.0
        %842 = vmatmul.mubr.f32.gmra.mrb[0].mxu0 %v701
        %v843 = vpop.f32.mrb[0].mxu0
        %v844 = vadd.f32 %v639, %v843
        %v845 = vpop.f32.mrb[0].mxu0
        %846 = vmatprep.mubr.f32.mxu0 0.0
        %847 = vmatmul.mubr.f32.gmra.mrb[0].mxu0 %v703
        %v848 = vpop.f32.mrb[0].mxu0
        %v849 = vadd.f32 %v644, %v848
        %v850 = vpop.f32.mrb[0].mxu0
        %851 = vmatprep.mubr.f32.mxu0 0.0
        %852 = vmatmul.mubr.f32.gmra.mrb[0].mxu0 %v705
        %v853 = vpop.f32.mrb[0].mxu0
        %v854 = vadd.f32 %v649, %v853
        %v855 = vpop.f32.mrb[0].mxu0
        %856 = vmatprep.mubr.f32.mxu0 0.0
        %857 = vmatmul.mubr.f32.gmra.mrb[0].mxu0 %v707
        %v858 = vpop.f32.mrb[0].mxu0
        %v859 = vadd.f32 %v654, %v858
        %v860 = vpop.f32.mrb[0].mxu0
        %861 = vmatprep.mubr.f32.mxu0 0.0
        %862 = vmatmul.mubr.f32.gmra.mrb[0].mxu0 %v709
        %v863 = vpop.f32.mrb[0].mxu0
        %v864 = vadd.f32 %v659, %v863
        %v865 = vpop.f32.mrb[0].mxu0
        %866 = vmatprep.mubr.f32.mxu0 0.0
        %867 = vmatmul.mubr.f32.gmra.mrb[0].mxu0 %v711
        %v868 = vpop.f32.mrb[0].mxu0
        %v869 = vadd.f32 %v664, %v868
        %v870 = vpop.f32.mrb[0].mxu0
        %871 = vmatprep.mubr.f32.mxu0 0.0
        %872 = vmatmul.mubr.f32.gmra.mrb[0].mxu0 %v713
        %v873 = vpop.f32.mrb[0].mxu0
        %v874 = vadd.f32 %v669, %v873
        %v875 = vpop.f32.mrb[0].mxu0
        %876 = vmatprep.mubr.f32.mxu0 0.0
        %877 = vmatmul.mubr.f32.gmra.mrb[0].mxu0 %v715
        %v878 = vpop.f32.mrb[0].mxu0
        %v879 = vadd.f32 %v674, %v878
        %v880 = vpop.f32.mrb[0].mxu0
        %881 = vdwg.mxu0
        %vm882 = vcmask 1045504
        %v883 = vrot.slane %v337, 2
        %v884 = vrot.slane %v338, 2
        %v885 = vsel %vm882, %v883, %v884
        %v886 = vrot.slane %v339, 2
        %v887 = vsel %vm882, %v884, %v886
        %v888 = vrot.slane %v340, 2
        %v889 = vrot.slane %v341, 2
        %v890 = vsel %vm882, %v888, %v889
        %v891 = vrot.slane %v342, 2
        %v892 = vsel %vm882, %v889, %v891
        %v893 = vrot.slane %v343, 2
        %v894 = vrot.slane %v344, 2
        %v895 = vsel %vm882, %v893, %v894
        %v896 = vrot.slane %v345, 2
        %v897 = vsel %vm882, %v894, %v896
        %v898 = vrot.slane %v346, 2
        %v899 = vrot.slane %v347, 2
        %v900 = vsel %vm882, %v898, %v899
        %v901 = vrot.slane %v348, 2
        %v902 = vsel %vm882, %v899, %v901
        %v903 = vrot.slane %v349, 2
        %v904 = vrot.slane %v350, 2
        %v905 = vsel %vm882, %v903, %v904
        %v906 = vrot.slane %v351, 2
        %v907 = vsel %vm882, %v904, %v906
        %v908 = vrot.slane %v352, 2
        %v909 = vrot.slane %v353, 2
        %v910 = vsel %vm882, %v908, %v909
        %v911 = vrot.slane %v354, 2
        %v912 = vsel %vm882, %v909, %v911
        %v913 = vrot.slane %v355, 2
        %v914 = vrot.slane %v356, 2
        %v915 = vsel %vm882, %v913, %v914
        %v916 = vrot.slane %v357, 2
        %v917 = vsel %vm882, %v914, %v916
        %v918 = vrot.slane %v358, 2
        %v919 = vrot.slane %v359, 2
        %v920 = vsel %vm882, %v918, %v919
        %v921 = vrot.slane %v360, 2
        %v922 = vsel %vm882, %v919, %v921
        %v923 = vrot.slane %v361, 2
        %v924 = vrot.slane %v362, 2
        %v925 = vsel %vm882, %v923, %v924
        %v926 = vrot.slane %v363, 2
        %v927 = vsel %vm882, %v924, %v926
        %v928 = vrot.slane %v364, 2
        %v929 = vrot.slane %v365, 2
        %v930 = vsel %vm882, %v928, %v929
        %v931 = vrot.slane %v366, 2
        %v932 = vsel %vm882, %v929, %v931
        %s933 = scalar_lea.vmem %s2, 128
        %v934 = vld [vmem:[%s933] sm:$0xff]
        %v935 = vld [vmem:[%s933 + $0x8] sm:$0xff]
        %v936 = vld [vmem:[%s933 + $0x10] sm:$0xff]
        %v937 = vld [vmem:[%s933 + $0x18] sm:$0xff]
        %v938 = vld [vmem:[%s933 + $0x20] sm:$0xff]
        %v939 = vld [vmem:[%s933 + $0x28] sm:$0xff]
        %v940 = vld [vmem:[%s933 + $0x30] sm:$0xff]
        %v941 = vld [vmem:[%s933 + $0x38] sm:$0xff]
        %v942 = vsel %vm471, %v885, 0
        %v944 = vsel %vm471, %v887, 0
        %v946 = vsel %vm471, %v890, 0
        %v948 = vsel %vm471, %v892, 0
        %v950 = vsel %vm471, %v895, 0
        %v952 = vsel %vm471, %v897, 0
        %v954 = vsel %vm471, %v900, 0
        %v956 = vsel %vm471, %v902, 0
        %v958 = vsel %vm471, %v905, 0
        %v960 = vsel %vm471, %v907, 0
        %v962 = vsel %vm471, %v910, 0
        %v964 = vsel %vm471, %v912, 0
        %v966 = vsel %vm471, %v915, 0
        %v968 = vsel %vm471, %v917, 0
        %v970 = vsel %vm471, %v920, 0
        %v972 = vsel %vm471, %v922, 0
        %v974 = vsel %vm471, %v925, 0
        %v976 = vsel %vm471, %v927, 0
        %v978 = vsel %vm471, %v930, 0
        %v980 = vsel %vm471, %v932, 0
        %982 = vmatprep.subr.mxu0 0.0
        %983 = vmatpush1.msra.mxu0 %v934
        %984 = vmatprep.subr.mxu0 0.0
        %985 = vmatpush1.msra.mxu0 %v935
        %986 = vmatprep.subr.mxu0 0.0
        %987 = vmatpush1.msra.mxu0 %v936
        %988 = vmatprep.subr.mxu0 0.0
        %989 = vmatpush1.msra.mxu0 %v937
        %990 = vmatprep.subr.mxu0 0.0
        %991 = vmatpush1.msra.mxu0 %v938
        %992 = vmatprep.subr.mxu0 0.0
        %993 = vmatpush1.msra.mxu0 %v939
        %994 = vmatprep.subr.mxu0 0.0
        %995 = vmatpush1.msra.mxu0 %v940
        %996 = vmatprep.subr.mxu0 0.0
        %997 = vmatpush1.msra.mxu0 %v941
        %998 = vmatprep.subr.mxu0 0.0
        %999 = vmatpush1.msra.mxu0 0.0
        %1000 = vmatprep.subr.mxu0 0.0
        %1001 = vmatpush1.msra.mxu0 0.0
        %1002 = vmatprep.subr.mxu0 0.0
        %1003 = vmatpush1.msra.mxu0 0.0
        %1004 = vmatprep.subr.mxu0 0.0
        %1005 = vmatpush1.msra.mxu0 0.0
        %1006 = vmatprep.subr.mxu0 0.0
        %1007 = vmatpush1.msra.mxu0 0.0
        %1008 = vmatprep.subr.mxu0 0.0
        %1009 = vmatpush1.msra.mxu0 0.0
        %1010 = vmatprep.subr.mxu0 0.0
        %1011 = vmatpush1.msra.mxu0 0.0
        %1012 = vmatprep.subr.mxu0 0.0
        %1013 = vmatpush1.msra.mxu0 0.0
        %1014 = vmatprep.subr.mxu0 0.0
        %1015 = vmatpush1.msra.mxu0 0.0
        %1016 = vmatprep.subr.mxu0 0.0
        %1017 = vmatpush1.msra.mxu0 0.0
        %1018 = vmatprep.subr.mxu0 0.0
        %1019 = vmatpush1.msra.mxu0 0.0
        %1020 = vmatprep.subr.mxu0 0.0
        %1021 = vmatpush1.msra.mxu0 0.0
        %1022 = vmatprep.subr.mxu0 0.0
        %1023 = vmatpush1.msra.mxu0 0.0
        %1024 = vmatprep.subr.mxu0 0.0
        %1025 = vmatpush1.msra.mxu0 0.0
        %1026 = vmatprep.subr.mxu0 0.0
        %1027 = vmatpush1.msra.mxu0 0.0
        %1028 = vmatprep.subr.mxu0 0.0
        %1029 = vmatpush1.msra.mxu0 0.0
        %1030 = vmatprep.subr.mxu0 0.0
        %1031 = vmatpush1.msra.mxu0 0.0
        %1032 = vmatprep.subr.mxu0 0.0
        %1033 = vmatpush1.msra.mxu0 0.0
        %1034 = vmatprep.subr.mxu0 0.0
        %1035 = vmatpush1.msra.mxu0 0.0
        %1036 = vmatprep.subr.mxu0 0.0
        %1037 = vmatpush1.msra.mxu0 0.0
        %1038 = vmatprep.subr.mxu0 0.0
        %1039 = vmatpush1.msra.mxu0 0.0
        %1040 = vmatprep.subr.mxu0 0.0
        %1041 = vmatpush1.msra.mxu0 0.0
        %1042 = vmatprep.subr.mxu0 0.0
        %1043 = vmatpush1.msra.mxu0 0.0
        %1044 = vmatprep.subr.mxu0 0.0
        %1045 = vmatpush1.msra.mxu0 0.0
        %1046 = vmatprep.mubr.f32.mxu0 0.0
        %1047 = vmatmul.mubr.f32.gmra.mrb[0].mxu0 %v942
        %v1048 = vpop.f32.mrb[0].mxu0
        %v1049 = vadd.f32 0.0, %v1048
        %v1050 = vpop.f32.mrb[0].mxu0
        %1051 = vmatprep.mubr.f32.mxu0 0.0
        %1052 = vmatmul.mubr.f32.gmra.mrb[0].mxu0 %v944
        %v1053 = vpop.f32.mrb[0].mxu0
        %v1054 = vadd.f32 0.0, %v1053
        %v1055 = vpop.f32.mrb[0].mxu0
        %1056 = vmatprep.mubr.f32.mxu0 0.0
        %1057 = vmatmul.mubr.f32.gmra.mrb[0].mxu0 %v946
        %v1058 = vpop.f32.mrb[0].mxu0
        %v1059 = vadd.f32 0.0, %v1058
        %v1060 = vpop.f32.mrb[0].mxu0
        %1061 = vmatprep.mubr.f32.mxu0 0.0
        %1062 = vmatmul.mubr.f32.gmra.mrb[0].mxu0 %v948
        %v1063 = vpop.f32.mrb[0].mxu0
        %v1064 = vadd.f32 0.0, %v1063
        %v1065 = vpop.f32.mrb[0].mxu0
        %1066 = vmatprep.mubr.f32.mxu0 0.0
        %1067 = vmatmul.mubr.f32.gmra.mrb[0].mxu0 %v950
        %v1068 = vpop.f32.mrb[0].mxu0
        %v1069 = vadd.f32 0.0, %v1068
        %v1070 = vpop.f32.mrb[0].mxu0
        %1071 = vmatprep.mubr.f32.mxu0 0.0
        %1072 = vmatmul.mubr.f32.gmra.mrb[0].mxu0 %v952
        %v1073 = vpop.f32.mrb[0].mxu0
        %v1074 = vadd.f32 0.0, %v1073
        %v1075 = vpop.f32.mrb[0].mxu0
        %1076 = vmatprep.mubr.f32.mxu0 0.0
        %1077 = vmatmul.mubr.f32.gmra.mrb[0].mxu0 %v954
        %v1078 = vpop.f32.mrb[0].mxu0
        %v1079 = vadd.f32 0.0, %v1078
        %v1080 = vpop.f32.mrb[0].mxu0
        %1081 = vmatprep.mubr.f32.mxu0 0.0
        %1082 = vmatmul.mubr.f32.gmra.mrb[0].mxu0 %v956
        %v1083 = vpop.f32.mrb[0].mxu0
        %v1084 = vadd.f32 0.0, %v1083
        %v1085 = vpop.f32.mrb[0].mxu0
        %1086 = vmatprep.mubr.f32.mxu0 0.0
        %1087 = vmatmul.mubr.f32.gmra.mrb[0].mxu0 %v958
        %v1088 = vpop.f32.mrb[0].mxu0
        %v1089 = vadd.f32 0.0, %v1088
        %v1090 = vpop.f32.mrb[0].mxu0
        %1091 = vmatprep.mubr.f32.mxu0 0.0
        %1092 = vmatmul.mubr.f32.gmra.mrb[0].mxu0 %v960
        %v1093 = vpop.f32.mrb[0].mxu0
        %v1094 = vadd.f32 0.0, %v1093
        %v1095 = vpop.f32.mrb[0].mxu0
        %1096 = vmatprep.mubr.f32.mxu0 0.0
        %1097 = vmatmul.mubr.f32.gmra.mrb[0].mxu0 %v962
        %v1098 = vpop.f32.mrb[0].mxu0
        %v1099 = vadd.f32 0.0, %v1098
        %v1100 = vpop.f32.mrb[0].mxu0
        %1101 = vmatprep.mubr.f32.mxu0 0.0
        %1102 = vmatmul.mubr.f32.gmra.mrb[0].mxu0 %v964
        %v1103 = vpop.f32.mrb[0].mxu0
        %v1104 = vadd.f32 0.0, %v1103
        %v1105 = vpop.f32.mrb[0].mxu0
        %1106 = vmatprep.mubr.f32.mxu0 0.0
        %1107 = vmatmul.mubr.f32.gmra.mrb[0].mxu0 %v966
        %v1108 = vpop.f32.mrb[0].mxu0
        %v1109 = vadd.f32 0.0, %v1108
        %v1110 = vpop.f32.mrb[0].mxu0
        %1111 = vmatprep.mubr.f32.mxu0 0.0
        %1112 = vmatmul.mubr.f32.gmra.mrb[0].mxu0 %v968
        %v1113 = vpop.f32.mrb[0].mxu0
        %v1114 = vadd.f32 0.0, %v1113
        %v1115 = vpop.f32.mrb[0].mxu0
        %1116 = vmatprep.mubr.f32.mxu0 0.0
        %1117 = vmatmul.mubr.f32.gmra.mrb[0].mxu0 %v970
        %v1118 = vpop.f32.mrb[0].mxu0
        %v1119 = vadd.f32 0.0, %v1118
        %v1120 = vpop.f32.mrb[0].mxu0
        %1121 = vmatprep.mubr.f32.mxu0 0.0
        %1122 = vmatmul.mubr.f32.gmra.mrb[0].mxu0 %v972
        %v1123 = vpop.f32.mrb[0].mxu0
        %v1124 = vadd.f32 0.0, %v1123
        %v1125 = vpop.f32.mrb[0].mxu0
        %1126 = vmatprep.mubr.f32.mxu0 0.0
        %1127 = vmatmul.mubr.f32.gmra.mrb[0].mxu0 %v974
        %v1128 = vpop.f32.mrb[0].mxu0
        %v1129 = vadd.f32 0.0, %v1128
        %v1130 = vpop.f32.mrb[0].mxu0
        %1131 = vmatprep.mubr.f32.mxu0 0.0
        %1132 = vmatmul.mubr.f32.gmra.mrb[0].mxu0 %v976
        %v1133 = vpop.f32.mrb[0].mxu0
        %v1134 = vadd.f32 0.0, %v1133
        %v1135 = vpop.f32.mrb[0].mxu0
        %1136 = vmatprep.mubr.f32.mxu0 0.0
        %1137 = vmatmul.mubr.f32.gmra.mrb[0].mxu0 %v978
        %v1138 = vpop.f32.mrb[0].mxu0
        %v1139 = vadd.f32 0.0, %v1138
        %v1140 = vpop.f32.mrb[0].mxu0
        %1141 = vmatprep.mubr.f32.mxu0 0.0
        %1142 = vmatmul.mubr.f32.gmra.mrb[0].mxu0 %v980
        %v1143 = vpop.f32.mrb[0].mxu0
        %v1144 = vadd.f32 0.0, %v1143
        %v1145 = vpop.f32.mrb[0].mxu0
        %1146 = vdwg.mxu0
        %v1147 = vadd.f32 %v784, %v1049
        %v1148 = vadd.f32 %v789, %v1054
        %v1149 = vadd.f32 %v794, %v1059
        %v1150 = vadd.f32 %v799, %v1064
        %v1151 = vadd.f32 %v804, %v1069
        %v1152 = vadd.f32 %v809, %v1074
        %v1153 = vadd.f32 %v814, %v1079
        %v1154 = vadd.f32 %v819, %v1084
        %v1155 = vadd.f32 %v824, %v1089
        %v1156 = vadd.f32 %v829, %v1094
        %v1157 = vadd.f32 %v834, %v1099
        %v1158 = vadd.f32 %v839, %v1104
        %v1159 = vadd.f32 %v844, %v1109
        %v1160 = vadd.f32 %v849, %v1114
        %v1161 = vadd.f32 %v854, %v1119
        %v1162 = vadd.f32 %v859, %v1124
        %v1163 = vadd.f32 %v864, %v1129
        %v1164 = vadd.f32 %v869, %v1134
        %v1165 = vadd.f32 %v874, %v1139
        %v1166 = vadd.f32 %v879, %v1144
        %s1167 = scalar_lea.vmem %s2, 192
        %v1168 = vld [vmem:[%s1167] sm:$0xff]
        %v1169 = vld [vmem:[%s1167 + $0x8] sm:$0xff]
        %v1170 = vld [vmem:[%s1167 + $0x10] sm:$0xff]
        %v1171 = vld [vmem:[%s1167 + $0x18] sm:$0xff]
        %v1172 = vld [vmem:[%s1167 + $0x20] sm:$0xff]
        %v1173 = vld [vmem:[%s1167 + $0x28] sm:$0xff]
        %v1174 = vld [vmem:[%s1167 + $0x30] sm:$0xff]
        %v1175 = vld [vmem:[%s1167 + $0x38] sm:$0xff]
        %v1177 = vsel %vm471, %v367, 0
        %v1180 = vsel %vm471, %v368, 0
        %1182 = vmatprep.subr.mxu0 0.0
        %1183 = vmatpush1.msra.mxu0 %v1168
        %1184 = vmatprep.subr.mxu0 0.0
        %1185 = vmatpush1.msra.mxu0 %v1169
        %1186 = vmatprep.subr.mxu0 0.0
        %1187 = vmatpush1.msra.mxu0 %v1170
        %1188 = vmatprep.subr.mxu0 0.0
        %1189 = vmatpush1.msra.mxu0 %v1171
        %1190 = vmatprep.subr.mxu0 0.0
        %1191 = vmatpush1.msra.mxu0 %v1172
        %1192 = vmatprep.subr.mxu0 0.0
        %1193 = vmatpush1.msra.mxu0 %v1173
        %1194 = vmatprep.subr.mxu0 0.0
        %1195 = vmatpush1.msra.mxu0 %v1174
        %1196 = vmatprep.subr.mxu0 0.0
        %1197 = vmatpush1.msra.mxu0 %v1175
        %1198 = vmatprep.subr.mxu0 0.0
        %1199 = vmatpush1.msra.mxu0 0.0
        %1200 = vmatprep.subr.mxu0 0.0
        %1201 = vmatpush1.msra.mxu0 0.0
        %1202 = vmatprep.subr.mxu0 0.0
        %1203 = vmatpush1.msra.mxu0 0.0
        %1204 = vmatprep.subr.mxu0 0.0
        %1205 = vmatpush1.msra.mxu0 0.0
        %1206 = vmatprep.subr.mxu0 0.0
        %1207 = vmatpush1.msra.mxu0 0.0
        %1208 = vmatprep.subr.mxu0 0.0
        %1209 = vmatpush1.msra.mxu0 0.0
        %1210 = vmatprep.subr.mxu0 0.0
        %1211 = vmatpush1.msra.mxu0 0.0
        %1212 = vmatprep.subr.mxu0 0.0
        %1213 = vmatpush1.msra.mxu0 0.0
        %1214 = vmatprep.subr.mxu0 0.0
        %1215 = vmatpush1.msra.mxu0 0.0
        %1216 = vmatprep.subr.mxu0 0.0
        %1217 = vmatpush1.msra.mxu0 0.0
        %1218 = vmatprep.subr.mxu0 0.0
        %1219 = vmatpush1.msra.mxu0 0.0
        %1220 = vmatprep.subr.mxu0 0.0
        %1221 = vmatpush1.msra.mxu0 0.0
        %1222 = vmatprep.subr.mxu0 0.0
        %1223 = vmatpush1.msra.mxu0 0.0
        %1224 = vmatprep.subr.mxu0 0.0
        %1225 = vmatpush1.msra.mxu0 0.0
        %1226 = vmatprep.subr.mxu0 0.0
        %1227 = vmatpush1.msra.mxu0 0.0
        %1228 = vmatprep.subr.mxu0 0.0
        %1229 = vmatpush1.msra.mxu0 0.0
        %1230 = vmatprep.subr.mxu0 0.0
        %1231 = vmatpush1.msra.mxu0 0.0
        %1232 = vmatprep.subr.mxu0 0.0
        %1233 = vmatpush1.msra.mxu0 0.0
        %1234 = vmatprep.subr.mxu0 0.0
        %1235 = vmatpush1.msra.mxu0 0.0
        %1236 = vmatprep.subr.mxu0 0.0
        %1237 = vmatpush1.msra.mxu0 0.0
        %1238 = vmatprep.subr.mxu0 0.0
        %1239 = vmatpush1.msra.mxu0 0.0
        %1240 = vmatprep.subr.mxu0 0.0
        %1241 = vmatpush1.msra.mxu0 0.0
        %1242 = vmatprep.subr.mxu0 0.0
        %1243 = vmatpush1.msra.mxu0 0.0
        %1244 = vmatprep.subr.mxu0 0.0
        %1245 = vmatpush1.msra.mxu0 0.0
        %1246 = vmatprep.mubr.f32.mxu0 0.0
        %1247 = vmatmul.mubr.f32.gmra.mrb[0].mxu0 %v681
        %v1248 = vpop.f32.mrb[0].mxu0
        %v1249 = vadd.f32 0.0, %v1248
        %v1250 = vpop.f32.mrb[0].mxu0
        %1251 = vmatprep.mubr.f32.mxu0 0.0
        %1252 = vmatmul.mubr.f32.gmra.mrb[0].mxu0 %v683
        %v1253 = vpop.f32.mrb[0].mxu0
        %v1254 = vadd.f32 0.0, %v1253
        %v1255 = vpop.f32.mrb[0].mxu0
        %1256 = vmatprep.mubr.f32.mxu0 0.0
        %1257 = vmatmul.mubr.f32.gmra.mrb[0].mxu0 %v685
        %v1258 = vpop.f32.mrb[0].mxu0
        %v1259 = vadd.f32 0.0, %v1258
        %v1260 = vpop.f32.mrb[0].mxu0
        %1261 = vmatprep.mubr.f32.mxu0 0.0
        %1262 = vmatmul.mubr.f32.gmra.mrb[0].mxu0 %v687
        %v1263 = vpop.f32.mrb[0].mxu0
        %v1264 = vadd.f32 0.0, %v1263
        %v1265 = vpop.f32.mrb[0].mxu0
        %1266 = vmatprep.mubr.f32.mxu0 0.0
        %1267 = vmatmul.mubr.f32.gmra.mrb[0].mxu0 %v689
        %v1268 = vpop.f32.mrb[0].mxu0
        %v1269 = vadd.f32 0.0, %v1268
        %v1270 = vpop.f32.mrb[0].mxu0
        %1271 = vmatprep.mubr.f32.mxu0 0.0
        %1272 = vmatmul.mubr.f32.gmra.mrb[0].mxu0 %v691
        %v1273 = vpop.f32.mrb[0].mxu0
        %v1274 = vadd.f32 0.0, %v1273
        %v1275 = vpop.f32.mrb[0].mxu0
        %1276 = vmatprep.mubr.f32.mxu0 0.0
        %1277 = vmatmul.mubr.f32.gmra.mrb[0].mxu0 %v693
        %v1278 = vpop.f32.mrb[0].mxu0
        %v1279 = vadd.f32 0.0, %v1278
        %v1280 = vpop.f32.mrb[0].mxu0
        %1281 = vmatprep.mubr.f32.mxu0 0.0
        %1282 = vmatmul.mubr.f32.gmra.mrb[0].mxu0 %v695
        %v1283 = vpop.f32.mrb[0].mxu0
        %v1284 = vadd.f32 0.0, %v1283
        %v1285 = vpop.f32.mrb[0].mxu0
        %1286 = vmatprep.mubr.f32.mxu0 0.0
        %1287 = vmatmul.mubr.f32.gmra.mrb[0].mxu0 %v697
        %v1288 = vpop.f32.mrb[0].mxu0
        %v1289 = vadd.f32 0.0, %v1288
        %v1290 = vpop.f32.mrb[0].mxu0
        %1291 = vmatprep.mubr.f32.mxu0 0.0
        %1292 = vmatmul.mubr.f32.gmra.mrb[0].mxu0 %v699
        %v1293 = vpop.f32.mrb[0].mxu0
        %v1294 = vadd.f32 0.0, %v1293
        %v1295 = vpop.f32.mrb[0].mxu0
        %1296 = vmatprep.mubr.f32.mxu0 0.0
        %1297 = vmatmul.mubr.f32.gmra.mrb[0].mxu0 %v701
        %v1298 = vpop.f32.mrb[0].mxu0
        %v1299 = vadd.f32 0.0, %v1298
        %v1300 = vpop.f32.mrb[0].mxu0
        %1301 = vmatprep.mubr.f32.mxu0 0.0
        %1302 = vmatmul.mubr.f32.gmra.mrb[0].mxu0 %v703
        %v1303 = vpop.f32.mrb[0].mxu0
        %v1304 = vadd.f32 0.0, %v1303
        %v1305 = vpop.f32.mrb[0].mxu0
        %1306 = vmatprep.mubr.f32.mxu0 0.0
        %1307 = vmatmul.mubr.f32.gmra.mrb[0].mxu0 %v705
        %v1308 = vpop.f32.mrb[0].mxu0
        %v1309 = vadd.f32 0.0, %v1308
        %v1310 = vpop.f32.mrb[0].mxu0
        %1311 = vmatprep.mubr.f32.mxu0 0.0
        %1312 = vmatmul.mubr.f32.gmra.mrb[0].mxu0 %v707
        %v1313 = vpop.f32.mrb[0].mxu0
        %v1314 = vadd.f32 0.0, %v1313
        %v1315 = vpop.f32.mrb[0].mxu0
        %1316 = vmatprep.mubr.f32.mxu0 0.0
        %1317 = vmatmul.mubr.f32.gmra.mrb[0].mxu0 %v709
        %v1318 = vpop.f32.mrb[0].mxu0
        %v1319 = vadd.f32 0.0, %v1318
        %v1320 = vpop.f32.mrb[0].mxu0
        %1321 = vmatprep.mubr.f32.mxu0 0.0
        %1322 = vmatmul.mubr.f32.gmra.mrb[0].mxu0 %v711
        %v1323 = vpop.f32.mrb[0].mxu0
        %v1324 = vadd.f32 0.0, %v1323
        %v1325 = vpop.f32.mrb[0].mxu0
        %1326 = vmatprep.mubr.f32.mxu0 0.0
        %1327 = vmatmul.mubr.f32.gmra.mrb[0].mxu0 %v713
        %v1328 = vpop.f32.mrb[0].mxu0
        %v1329 = vadd.f32 0.0, %v1328
        %v1330 = vpop.f32.mrb[0].mxu0
        %1331 = vmatprep.mubr.f32.mxu0 0.0
        %1332 = vmatmul.mubr.f32.gmra.mrb[0].mxu0 %v715
        %v1333 = vpop.f32.mrb[0].mxu0
        %v1334 = vadd.f32 0.0, %v1333
        %v1335 = vpop.f32.mrb[0].mxu0
        %1336 = vmatprep.mubr.f32.mxu0 0.0
        %1337 = vmatmul.mubr.f32.gmra.mrb[0].mxu0 %v1177
        %v1338 = vpop.f32.mrb[0].mxu0
        %v1339 = vadd.f32 0.0, %v1338
        %v1340 = vpop.f32.mrb[0].mxu0
        %1341 = vmatprep.mubr.f32.mxu0 0.0
        %1342 = vmatmul.mubr.f32.gmra.mrb[0].mxu0 %v1180
        %v1343 = vpop.f32.mrb[0].mxu0
        %v1344 = vadd.f32 0.0, %v1343
        %v1345 = vpop.f32.mrb[0].mxu0
        %1346 = vdwg.mxu0
        %v1347 = vadd.f32 %v1147, %v1249
        %v1348 = vadd.f32 %v1148, %v1254
        %v1349 = vadd.f32 %v1149, %v1259
        %v1350 = vadd.f32 %v1150, %v1264
        %v1351 = vadd.f32 %v1151, %v1269
        %v1352 = vadd.f32 %v1152, %v1274
        %v1353 = vadd.f32 %v1153, %v1279
        %v1354 = vadd.f32 %v1154, %v1284
        %v1355 = vadd.f32 %v1155, %v1289
        %v1356 = vadd.f32 %v1156, %v1294
        %v1357 = vadd.f32 %v1157, %v1299
        %v1358 = vadd.f32 %v1158, %v1304
        %v1359 = vadd.f32 %v1159, %v1309
        %v1360 = vadd.f32 %v1160, %v1314
        %v1361 = vadd.f32 %v1161, %v1319
        %v1362 = vadd.f32 %v1162, %v1324
        %v1363 = vadd.f32 %v1163, %v1329
        %v1364 = vadd.f32 %v1164, %v1334
        %v1365 = vadd.f32 %v1165, %v1339
        %v1366 = vadd.f32 %v1166, %v1344
        %v1368 = vrot.slane %v367, 1
        %v1369 = vrot.slane %v368, 1
        %v1370 = vsel %vm411, %v1368, %v1369
        %v1371 = vrot.slane %v369, 1
        %v1372 = vsel %vm411, %v1369, %v1371
        %s1373 = scalar_lea.vmem %s2, 256
        %v1374 = vld [vmem:[%s1373] sm:$0xff]
        %v1375 = vld [vmem:[%s1373 + $0x8] sm:$0xff]
        %v1376 = vld [vmem:[%s1373 + $0x10] sm:$0xff]
        %v1377 = vld [vmem:[%s1373 + $0x18] sm:$0xff]
        %v1378 = vld [vmem:[%s1373 + $0x20] sm:$0xff]
        %v1379 = vld [vmem:[%s1373 + $0x28] sm:$0xff]
        %v1380 = vld [vmem:[%s1373 + $0x30] sm:$0xff]
        %v1381 = vld [vmem:[%s1373 + $0x38] sm:$0xff]
        %v1382 = vsel %vm471, %v1370, 0
        %v1384 = vsel %vm471, %v1372, 0
        %1386 = vmatprep.subr.mxu0 0.0
        %1387 = vmatpush1.msra.mxu0 %v1374
        %1388 = vmatprep.subr.mxu0 0.0
        %1389 = vmatpush1.msra.mxu0 %v1375
        %1390 = vmatprep.subr.mxu0 0.0
        %1391 = vmatpush1.msra.mxu0 %v1376
        %1392 = vmatprep.subr.mxu0 0.0
        %1393 = vmatpush1.msra.mxu0 %v1377
        %1394 = vmatprep.subr.mxu0 0.0
        %1395 = vmatpush1.msra.mxu0 %v1378
        %1396 = vmatprep.subr.mxu0 0.0
        %1397 = vmatpush1.msra.mxu0 %v1379
        %1398 = vmatprep.subr.mxu0 0.0
        %1399 = vmatpush1.msra.mxu0 %v1380
        %1400 = vmatprep.subr.mxu0 0.0
        %1401 = vmatpush1.msra.mxu0 %v1381
        %1402 = vmatprep.subr.mxu0 0.0
        %1403 = vmatpush1.msra.mxu0 0.0
        %1404 = vmatprep.subr.mxu0 0.0
        %1405 = vmatpush1.msra.mxu0 0.0
        %1406 = vmatprep.subr.mxu0 0.0
        %1407 = vmatpush1.msra.mxu0 0.0
        %1408 = vmatprep.subr.mxu0 0.0
        %1409 = vmatpush1.msra.mxu0 0.0
        %1410 = vmatprep.subr.mxu0 0.0
        %1411 = vmatpush1.msra.mxu0 0.0
        %1412 = vmatprep.subr.mxu0 0.0
        %1413 = vmatpush1.msra.mxu0 0.0
        %1414 = vmatprep.subr.mxu0 0.0
        %1415 = vmatpush1.msra.mxu0 0.0
        %1416 = vmatprep.subr.mxu0 0.0
        %1417 = vmatpush1.msra.mxu0 0.0
        %1418 = vmatprep.subr.mxu0 0.0
        %1419 = vmatpush1.msra.mxu0 0.0
        %1420 = vmatprep.subr.mxu0 0.0
        %1421 = vmatpush1.msra.mxu0 0.0
        %1422 = vmatprep.subr.mxu0 0.0
        %1423 = vmatpush1.msra.mxu0 0.0
        %1424 = vmatprep.subr.mxu0 0.0
        %1425 = vmatpush1.msra.mxu0 0.0
        %1426 = vmatprep.subr.mxu0 0.0
        %1427 = vmatpush1.msra.mxu0 0.0
        %1428 = vmatprep.subr.mxu0 0.0
        %1429 = vmatpush1.msra.mxu0 0.0
        %1430 = vmatprep.subr.mxu0 0.0
        %1431 = vmatpush1.msra.mxu0 0.0
        %1432 = vmatprep.subr.mxu0 0.0
        %1433 = vmatpush1.msra.mxu0 0.0
        %1434 = vmatprep.subr.mxu0 0.0
        %1435 = vmatpush1.msra.mxu0 0.0
        %1436 = vmatprep.subr.mxu0 0.0
        %1437 = vmatpush1.msra.mxu0 0.0
        %1438 = vmatprep.subr.mxu0 0.0
        %1439 = vmatpush1.msra.mxu0 0.0
        %1440 = vmatprep.subr.mxu0 0.0
        %1441 = vmatpush1.msra.mxu0 0.0
        %1442 = vmatprep.subr.mxu0 0.0
        %1443 = vmatpush1.msra.mxu0 0.0
        %1444 = vmatprep.subr.mxu0 0.0
        %1445 = vmatpush1.msra.mxu0 0.0
        %1446 = vmatprep.subr.mxu0 0.0
        %1447 = vmatpush1.msra.mxu0 0.0
        %1448 = vmatprep.subr.mxu0 0.0
        %1449 = vmatpush1.msra.mxu0 0.0
        %1450 = vmatprep.mubr.f32.mxu0 0.0
        %1451 = vmatmul.mubr.f32.gmra.mrb[0].mxu0 %v476
        %v1452 = vpop.f32.mrb[0].mxu0
        %v1453 = vadd.f32 0.0, %v1452
        %v1454 = vpop.f32.mrb[0].mxu0
        %1455 = vmatprep.mubr.f32.mxu0 0.0
        %1456 = vmatmul.mubr.f32.gmra.mrb[0].mxu0 %v478
        %v1457 = vpop.f32.mrb[0].mxu0
        %v1458 = vadd.f32 0.0, %v1457
        %v1459 = vpop.f32.mrb[0].mxu0
        %1460 = vmatprep.mubr.f32.mxu0 0.0
        %1461 = vmatmul.mubr.f32.gmra.mrb[0].mxu0 %v480
        %v1462 = vpop.f32.mrb[0].mxu0
        %v1463 = vadd.f32 0.0, %v1462
        %v1464 = vpop.f32.mrb[0].mxu0
        %1465 = vmatprep.mubr.f32.mxu0 0.0
        %1466 = vmatmul.mubr.f32.gmra.mrb[0].mxu0 %v482
        %v1467 = vpop.f32.mrb[0].mxu0
        %v1468 = vadd.f32 0.0, %v1467
        %v1469 = vpop.f32.mrb[0].mxu0
        %1470 = vmatprep.mubr.f32.mxu0 0.0
        %1471 = vmatmul.mubr.f32.gmra.mrb[0].mxu0 %v484
        %v1472 = vpop.f32.mrb[0].mxu0
        %v1473 = vadd.f32 0.0, %v1472
        %v1474 = vpop.f32.mrb[0].mxu0
        %1475 = vmatprep.mubr.f32.mxu0 0.0
        %1476 = vmatmul.mubr.f32.gmra.mrb[0].mxu0 %v486
        %v1477 = vpop.f32.mrb[0].mxu0
        %v1478 = vadd.f32 0.0, %v1477
        %v1479 = vpop.f32.mrb[0].mxu0
        %1480 = vmatprep.mubr.f32.mxu0 0.0
        %1481 = vmatmul.mubr.f32.gmra.mrb[0].mxu0 %v488
        %v1482 = vpop.f32.mrb[0].mxu0
        %v1483 = vadd.f32 0.0, %v1482
        %v1484 = vpop.f32.mrb[0].mxu0
        %1485 = vmatprep.mubr.f32.mxu0 0.0
        %1486 = vmatmul.mubr.f32.gmra.mrb[0].mxu0 %v490
        %v1487 = vpop.f32.mrb[0].mxu0
        %v1488 = vadd.f32 0.0, %v1487
        %v1489 = vpop.f32.mrb[0].mxu0
        %1490 = vmatprep.mubr.f32.mxu0 0.0
        %1491 = vmatmul.mubr.f32.gmra.mrb[0].mxu0 %v492
        %v1492 = vpop.f32.mrb[0].mxu0
        %v1493 = vadd.f32 0.0, %v1492
        %v1494 = vpop.f32.mrb[0].mxu0
        %1495 = vmatprep.mubr.f32.mxu0 0.0
        %1496 = vmatmul.mubr.f32.gmra.mrb[0].mxu0 %v494
        %v1497 = vpop.f32.mrb[0].mxu0
        %v1498 = vadd.f32 0.0, %v1497
        %v1499 = vpop.f32.mrb[0].mxu0
        %1500 = vmatprep.mubr.f32.mxu0 0.0
        %1501 = vmatmul.mubr.f32.gmra.mrb[0].mxu0 %v496
        %v1502 = vpop.f32.mrb[0].mxu0
        %v1503 = vadd.f32 0.0, %v1502
        %v1504 = vpop.f32.mrb[0].mxu0
        %1505 = vmatprep.mubr.f32.mxu0 0.0
        %1506 = vmatmul.mubr.f32.gmra.mrb[0].mxu0 %v498
        %v1507 = vpop.f32.mrb[0].mxu0
        %v1508 = vadd.f32 0.0, %v1507
        %v1509 = vpop.f32.mrb[0].mxu0
        %1510 = vmatprep.mubr.f32.mxu0 0.0
        %1511 = vmatmul.mubr.f32.gmra.mrb[0].mxu0 %v500
        %v1512 = vpop.f32.mrb[0].mxu0
        %v1513 = vadd.f32 0.0, %v1512
        %v1514 = vpop.f32.mrb[0].mxu0
        %1515 = vmatprep.mubr.f32.mxu0 0.0
        %1516 = vmatmul.mubr.f32.gmra.mrb[0].mxu0 %v502
        %v1517 = vpop.f32.mrb[0].mxu0
        %v1518 = vadd.f32 0.0, %v1517
        %v1519 = vpop.f32.mrb[0].mxu0
        %1520 = vmatprep.mubr.f32.mxu0 0.0
        %1521 = vmatmul.mubr.f32.gmra.mrb[0].mxu0 %v504
        %v1522 = vpop.f32.mrb[0].mxu0
        %v1523 = vadd.f32 0.0, %v1522
        %v1524 = vpop.f32.mrb[0].mxu0
        %1525 = vmatprep.mubr.f32.mxu0 0.0
        %1526 = vmatmul.mubr.f32.gmra.mrb[0].mxu0 %v506
        %v1527 = vpop.f32.mrb[0].mxu0
        %v1528 = vadd.f32 0.0, %v1527
        %v1529 = vpop.f32.mrb[0].mxu0
        %1530 = vmatprep.mubr.f32.mxu0 0.0
        %1531 = vmatmul.mubr.f32.gmra.mrb[0].mxu0 %v508
        %v1532 = vpop.f32.mrb[0].mxu0
        %v1533 = vadd.f32 0.0, %v1532
        %v1534 = vpop.f32.mrb[0].mxu0
        %1535 = vmatprep.mubr.f32.mxu0 0.0
        %1536 = vmatmul.mubr.f32.gmra.mrb[0].mxu0 %v510
        %v1537 = vpop.f32.mrb[0].mxu0
        %v1538 = vadd.f32 0.0, %v1537
        %v1539 = vpop.f32.mrb[0].mxu0
        %1540 = vmatprep.mubr.f32.mxu0 0.0
        %1541 = vmatmul.mubr.f32.gmra.mrb[0].mxu0 %v1382
        %v1542 = vpop.f32.mrb[0].mxu0
        %v1543 = vadd.f32 0.0, %v1542
        %v1544 = vpop.f32.mrb[0].mxu0
        %1545 = vmatprep.mubr.f32.mxu0 0.0
        %1546 = vmatmul.mubr.f32.gmra.mrb[0].mxu0 %v1384
        %v1547 = vpop.f32.mrb[0].mxu0
        %v1548 = vadd.f32 0.0, %v1547
        %v1549 = vpop.f32.mrb[0].mxu0
        %1550 = vdwg.mxu0
        %v1551 = vadd.f32 %v1347, %v1453
        %v1552 = vadd.f32 %v1348, %v1458
        %v1553 = vadd.f32 %v1349, %v1463
        %v1554 = vadd.f32 %v1350, %v1468
        %v1555 = vadd.f32 %v1351, %v1473
        %v1556 = vadd.f32 %v1352, %v1478
        %v1557 = vadd.f32 %v1353, %v1483
        %v1558 = vadd.f32 %v1354, %v1488
        %v1559 = vadd.f32 %v1355, %v1493
        %v1560 = vadd.f32 %v1356, %v1498
        %v1561 = vadd.f32 %v1357, %v1503
        %v1562 = vadd.f32 %v1358, %v1508
        %v1563 = vadd.f32 %v1359, %v1513
        %v1564 = vadd.f32 %v1360, %v1518
        %v1565 = vadd.f32 %v1361, %v1523
        %v1566 = vadd.f32 %v1362, %v1528
        %v1567 = vadd.f32 %v1363, %v1533
        %v1568 = vadd.f32 %v1364, %v1538
        %v1569 = vadd.f32 %v1365, %v1543
        %v1570 = vadd.f32 %v1366, %v1548
        %v1571 = vrot.slane %v367, 2
        %v1572 = vrot.slane %v368, 2
        %v1573 = vsel %vm882, %v1571, %v1572
        %v1574 = vrot.slane %v369, 2
        %v1575 = vsel %vm882, %v1572, %v1574
        %s1576 = scalar_lea.vmem %s2, 320
        %v1577 = vld [vmem:[%s1576] sm:$0xff]
        %v1578 = vld [vmem:[%s1576 + $0x8] sm:$0xff]
        %v1579 = vld [vmem:[%s1576 + $0x10] sm:$0xff]
        %v1580 = vld [vmem:[%s1576 + $0x18] sm:$0xff]
        %v1581 = vld [vmem:[%s1576 + $0x20] sm:$0xff]
        %v1582 = vld [vmem:[%s1576 + $0x28] sm:$0xff]
        %v1583 = vld [vmem:[%s1576 + $0x30] sm:$0xff]
        %v1584 = vld [vmem:[%s1576 + $0x38] sm:$0xff]
        %v1585 = vsel %vm471, %v1573, 0
        %v1587 = vsel %vm471, %v1575, 0
        %1589 = vmatprep.subr.mxu0 0.0
        %1590 = vmatpush1.msra.mxu0 %v1577
        %1591 = vmatprep.subr.mxu0 0.0
        %1592 = vmatpush1.msra.mxu0 %v1578
        %1593 = vmatprep.subr.mxu0 0.0
        %1594 = vmatpush1.msra.mxu0 %v1579
        %1595 = vmatprep.subr.mxu0 0.0
        %1596 = vmatpush1.msra.mxu0 %v1580
        %1597 = vmatprep.subr.mxu0 0.0
        %1598 = vmatpush1.msra.mxu0 %v1581
        %1599 = vmatprep.subr.mxu0 0.0
        %1600 = vmatpush1.msra.mxu0 %v1582
        %1601 = vmatprep.subr.mxu0 0.0
        %1602 = vmatpush1.msra.mxu0 %v1583
        %1603 = vmatprep.subr.mxu0 0.0
        %1604 = vmatpush1.msra.mxu0 %v1584
        %1605 = vmatprep.subr.mxu0 0.0
        %1606 = vmatpush1.msra.mxu0 0.0
        %1607 = vmatprep.subr.mxu0 0.0
        %1608 = vmatpush1.msra.mxu0 0.0
        %1609 = vmatprep.subr.mxu0 0.0
        %1610 = vmatpush1.msra.mxu0 0.0
        %1611 = vmatprep.subr.mxu0 0.0
        %1612 = vmatpush1.msra.mxu0 0.0
        %1613 = vmatprep.subr.mxu0 0.0
        %1614 = vmatpush1.msra.mxu0 0.0
        %1615 = vmatprep.subr.mxu0 0.0
        %1616 = vmatpush1.msra.mxu0 0.0
        %1617 = vmatprep.subr.mxu0 0.0
        %1618 = vmatpush1.msra.mxu0 0.0
        %1619 = vmatprep.subr.mxu0 0.0
        %1620 = vmatpush1.msra.mxu0 0.0
        %1621 = vmatprep.subr.mxu0 0.0
        %1622 = vmatpush1.msra.mxu0 0.0
        %1623 = vmatprep.subr.mxu0 0.0
        %1624 = vmatpush1.msra.mxu0 0.0
        %1625 = vmatprep.subr.mxu0 0.0
        %1626 = vmatpush1.msra.mxu0 0.0
        %1627 = vmatprep.subr.mxu0 0.0
        %1628 = vmatpush1.msra.mxu0 0.0
        %1629 = vmatprep.subr.mxu0 0.0
        %1630 = vmatpush1.msra.mxu0 0.0
        %1631 = vmatprep.subr.mxu0 0.0
        %1632 = vmatpush1.msra.mxu0 0.0
        %1633 = vmatprep.subr.mxu0 0.0
        %1634 = vmatpush1.msra.mxu0 0.0
        %1635 = vmatprep.subr.mxu0 0.0
        %1636 = vmatpush1.msra.mxu0 0.0
        %1637 = vmatprep.subr.mxu0 0.0
        %1638 = vmatpush1.msra.mxu0 0.0
        %1639 = vmatprep.subr.mxu0 0.0
        %1640 = vmatpush1.msra.mxu0 0.0
        %1641 = vmatprep.subr.mxu0 0.0
        %1642 = vmatpush1.msra.mxu0 0.0
        %1643 = vmatprep.subr.mxu0 0.0
        %1644 = vmatpush1.msra.mxu0 0.0
        %1645 = vmatprep.subr.mxu0 0.0
        %1646 = vmatpush1.msra.mxu0 0.0
        %1647 = vmatprep.subr.mxu0 0.0
        %1648 = vmatpush1.msra.mxu0 0.0
        %1649 = vmatprep.subr.mxu0 0.0
        %1650 = vmatpush1.msra.mxu0 0.0
        %1651 = vmatprep.subr.mxu0 0.0
        %1652 = vmatpush1.msra.mxu0 0.0
        %1653 = vmatprep.mubr.f32.mxu0 0.0
        %1654 = vmatmul.mubr.f32.gmra.mrb[0].mxu0 %v946
        %v1655 = vpop.f32.mrb[0].mxu0
        %v1656 = vadd.f32 0.0, %v1655
        %v1657 = vpop.f32.mrb[0].mxu0
        %1658 = vmatprep.mubr.f32.mxu0 0.0
        %1659 = vmatmul.mubr.f32.gmra.mrb[0].mxu0 %v948
        %v1660 = vpop.f32.mrb[0].mxu0
        %v1661 = vadd.f32 0.0, %v1660
        %v1662 = vpop.f32.mrb[0].mxu0
        %1663 = vmatprep.mubr.f32.mxu0 0.0
        %1664 = vmatmul.mubr.f32.gmra.mrb[0].mxu0 %v950
        %v1665 = vpop.f32.mrb[0].mxu0
        %v1666 = vadd.f32 0.0, %v1665
        %v1667 = vpop.f32.mrb[0].mxu0
        %1668 = vmatprep.mubr.f32.mxu0 0.0
        %1669 = vmatmul.mubr.f32.gmra.mrb[0].mxu0 %v952
        %v1670 = vpop.f32.mrb[0].mxu0
        %v1671 = vadd.f32 0.0, %v1670
        %v1672 = vpop.f32.mrb[0].mxu0
        %1673 = vmatprep.mubr.f32.mxu0 0.0
        %1674 = vmatmul.mubr.f32.gmra.mrb[0].mxu0 %v954
        %v1675 = vpop.f32.mrb[0].mxu0
        %v1676 = vadd.f32 0.0, %v1675
        %v1677 = vpop.f32.mrb[0].mxu0
        %1678 = vmatprep.mubr.f32.mxu0 0.0
        %1679 = vmatmul.mubr.f32.gmra.mrb[0].mxu0 %v956
        %v1680 = vpop.f32.mrb[0].mxu0
        %v1681 = vadd.f32 0.0, %v1680
        %v1682 = vpop.f32.mrb[0].mxu0
        %1683 = vmatprep.mubr.f32.mxu0 0.0
        %1684 = vmatmul.mubr.f32.gmra.mrb[0].mxu0 %v958
        %v1685 = vpop.f32.mrb[0].mxu0
        %v1686 = vadd.f32 0.0, %v1685
        %v1687 = vpop.f32.mrb[0].mxu0
        %1688 = vmatprep.mubr.f32.mxu0 0.0
        %1689 = vmatmul.mubr.f32.gmra.mrb[0].mxu0 %v960
        %v1690 = vpop.f32.mrb[0].mxu0
        %v1691 = vadd.f32 0.0, %v1690
        %v1692 = vpop.f32.mrb[0].mxu0
        %1693 = vmatprep.mubr.f32.mxu0 0.0
        %1694 = vmatmul.mubr.f32.gmra.mrb[0].mxu0 %v962
        %v1695 = vpop.f32.mrb[0].mxu0
        %v1696 = vadd.f32 0.0, %v1695
        %v1697 = vpop.f32.mrb[0].mxu0
        %1698 = vmatprep.mubr.f32.mxu0 0.0
        %1699 = vmatmul.mubr.f32.gmra.mrb[0].mxu0 %v964
        %v1700 = vpop.f32.mrb[0].mxu0
        %v1701 = vadd.f32 0.0, %v1700
        %v1702 = vpop.f32.mrb[0].mxu0
        %1703 = vmatprep.mubr.f32.mxu0 0.0
        %1704 = vmatmul.mubr.f32.gmra.mrb[0].mxu0 %v966
        %v1705 = vpop.f32.mrb[0].mxu0
        %v1706 = vadd.f32 0.0, %v1705
        %v1707 = vpop.f32.mrb[0].mxu0
        %1708 = vmatprep.mubr.f32.mxu0 0.0
        %1709 = vmatmul.mubr.f32.gmra.mrb[0].mxu0 %v968
        %v1710 = vpop.f32.mrb[0].mxu0
        %v1711 = vadd.f32 0.0, %v1710
        %v1712 = vpop.f32.mrb[0].mxu0
        %1713 = vmatprep.mubr.f32.mxu0 0.0
        %1714 = vmatmul.mubr.f32.gmra.mrb[0].mxu0 %v970
        %v1715 = vpop.f32.mrb[0].mxu0
        %v1716 = vadd.f32 0.0, %v1715
        %v1717 = vpop.f32.mrb[0].mxu0
        %1718 = vmatprep.mubr.f32.mxu0 0.0
        %1719 = vmatmul.mubr.f32.gmra.mrb[0].mxu0 %v972
        %v1720 = vpop.f32.mrb[0].mxu0
        %v1721 = vadd.f32 0.0, %v1720
        %v1722 = vpop.f32.mrb[0].mxu0
        %1723 = vmatprep.mubr.f32.mxu0 0.0
        %1724 = vmatmul.mubr.f32.gmra.mrb[0].mxu0 %v974
        %v1725 = vpop.f32.mrb[0].mxu0
        %v1726 = vadd.f32 0.0, %v1725
        %v1727 = vpop.f32.mrb[0].mxu0
        %1728 = vmatprep.mubr.f32.mxu0 0.0
        %1729 = vmatmul.mubr.f32.gmra.mrb[0].mxu0 %v976
        %v1730 = vpop.f32.mrb[0].mxu0
        %v1731 = vadd.f32 0.0, %v1730
        %v1732 = vpop.f32.mrb[0].mxu0
        %1733 = vmatprep.mubr.f32.mxu0 0.0
        %1734 = vmatmul.mubr.f32.gmra.mrb[0].mxu0 %v978
        %v1735 = vpop.f32.mrb[0].mxu0
        %v1736 = vadd.f32 0.0, %v1735
        %v1737 = vpop.f32.mrb[0].mxu0
        %1738 = vmatprep.mubr.f32.mxu0 0.0
        %1739 = vmatmul.mubr.f32.gmra.mrb[0].mxu0 %v980
        %v1740 = vpop.f32.mrb[0].mxu0
        %v1741 = vadd.f32 0.0, %v1740
        %v1742 = vpop.f32.mrb[0].mxu0
        %1743 = vmatprep.mubr.f32.mxu0 0.0
        %1744 = vmatmul.mubr.f32.gmra.mrb[0].mxu0 %v1585
        %v1745 = vpop.f32.mrb[0].mxu0
        %v1746 = vadd.f32 0.0, %v1745
        %v1747 = vpop.f32.mrb[0].mxu0
        %1748 = vmatprep.mubr.f32.mxu0 0.0
        %1749 = vmatmul.mubr.f32.gmra.mrb[0].mxu0 %v1587
        %v1750 = vpop.f32.mrb[0].mxu0
        %v1751 = vadd.f32 0.0, %v1750
        %v1752 = vpop.f32.mrb[0].mxu0
        %1753 = vdwg.mxu0
        %v1754 = vadd.f32 %v1551, %v1656
        %v1755 = vadd.f32 %v1552, %v1661
        %v1756 = vadd.f32 %v1553, %v1666
        %v1757 = vadd.f32 %v1554, %v1671
        %v1758 = vadd.f32 %v1555, %v1676
        %v1759 = vadd.f32 %v1556, %v1681
        %v1760 = vadd.f32 %v1557, %v1686
        %v1761 = vadd.f32 %v1558, %v1691
        %v1762 = vadd.f32 %v1559, %v1696
        %v1763 = vadd.f32 %v1560, %v1701
        %v1764 = vadd.f32 %v1561, %v1706
        %v1765 = vadd.f32 %v1562, %v1711
        %v1766 = vadd.f32 %v1563, %v1716
        %v1767 = vadd.f32 %v1564, %v1721
        %v1768 = vadd.f32 %v1565, %v1726
        %v1769 = vadd.f32 %v1566, %v1731
        %v1770 = vadd.f32 %v1567, %v1736
        %v1771 = vadd.f32 %v1568, %v1741
        %v1772 = vadd.f32 %v1569, %v1746
        %v1773 = vadd.f32 %v1570, %v1751
        %s1774 = scalar_lea.vmem %s2, 384
        %v1775 = vld [vmem:[%s1774] sm:$0xff]
        %v1776 = vld [vmem:[%s1774 + $0x8] sm:$0xff]
        %v1777 = vld [vmem:[%s1774 + $0x10] sm:$0xff]
        %v1778 = vld [vmem:[%s1774 + $0x18] sm:$0xff]
        %v1779 = vld [vmem:[%s1774 + $0x20] sm:$0xff]
        %v1780 = vld [vmem:[%s1774 + $0x28] sm:$0xff]
        %v1781 = vld [vmem:[%s1774 + $0x30] sm:$0xff]
        %v1782 = vld [vmem:[%s1774 + $0x38] sm:$0xff]
        %v1784 = vsel %vm471, %v370, 0
        %v1787 = vsel %vm471, %v371, 0
        %1789 = vmatprep.subr.mxu0 0.0
        %1790 = vmatpush1.msra.mxu0 %v1775
        %1791 = vmatprep.subr.mxu0 0.0
        %1792 = vmatpush1.msra.mxu0 %v1776
        %1793 = vmatprep.subr.mxu0 0.0
        %1794 = vmatpush1.msra.mxu0 %v1777
        %1795 = vmatprep.subr.mxu0 0.0
        %1796 = vmatpush1.msra.mxu0 %v1778
        %1797 = vmatprep.subr.mxu0 0.0
        %1798 = vmatpush1.msra.mxu0 %v1779
        %1799 = vmatprep.subr.mxu0 0.0
        %1800 = vmatpush1.msra.mxu0 %v1780
        %1801 = vmatprep.subr.mxu0 0.0
        %1802 = vmatpush1.msra.mxu0 %v1781
        %1803 = vmatprep.subr.mxu0 0.0
        %1804 = vmatpush1.msra.mxu0 %v1782
        %1805 = vmatprep.subr.mxu0 0.0
        %1806 = vmatpush1.msra.mxu0 0.0
        %1807 = vmatprep.subr.mxu0 0.0
        %1808 = vmatpush1.msra.mxu0 0.0
        %1809 = vmatprep.subr.mxu0 0.0
        %1810 = vmatpush1.msra.mxu0 0.0
        %1811 = vmatprep.subr.mxu0 0.0
        %1812 = vmatpush1.msra.mxu0 0.0
        %1813 = vmatprep.subr.mxu0 0.0
        %1814 = vmatpush1.msra.mxu0 0.0
        %1815 = vmatprep.subr.mxu0 0.0
        %1816 = vmatpush1.msra.mxu0 0.0
        %1817 = vmatprep.subr.mxu0 0.0
        %1818 = vmatpush1.msra.mxu0 0.0
        %1819 = vmatprep.subr.mxu0 0.0
        %1820 = vmatpush1.msra.mxu0 0.0
        %1821 = vmatprep.subr.mxu0 0.0
        %1822 = vmatpush1.msra.mxu0 0.0
        %1823 = vmatprep.subr.mxu0 0.0
        %1824 = vmatpush1.msra.mxu0 0.0
        %1825 = vmatprep.subr.mxu0 0.0
        %1826 = vmatpush1.msra.mxu0 0.0
        %1827 = vmatprep.subr.mxu0 0.0
        %1828 = vmatpush1.msra.mxu0 0.0
        %1829 = vmatprep.subr.mxu0 0.0
        %1830 = vmatpush1.msra.mxu0 0.0
        %1831 = vmatprep.subr.mxu0 0.0
        %1832 = vmatpush1.msra.mxu0 0.0
        %1833 = vmatprep.subr.mxu0 0.0
        %1834 = vmatpush1.msra.mxu0 0.0
        %1835 = vmatprep.subr.mxu0 0.0
        %1836 = vmatpush1.msra.mxu0 0.0
        %1837 = vmatprep.subr.mxu0 0.0
        %1838 = vmatpush1.msra.mxu0 0.0
        %1839 = vmatprep.subr.mxu0 0.0
        %1840 = vmatpush1.msra.mxu0 0.0
        %1841 = vmatprep.subr.mxu0 0.0
        %1842 = vmatpush1.msra.mxu0 0.0
        %1843 = vmatprep.subr.mxu0 0.0
        %1844 = vmatpush1.msra.mxu0 0.0
        %1845 = vmatprep.subr.mxu0 0.0
        %1846 = vmatpush1.msra.mxu0 0.0
        %1847 = vmatprep.subr.mxu0 0.0
        %1848 = vmatpush1.msra.mxu0 0.0
        %1849 = vmatprep.subr.mxu0 0.0
        %1850 = vmatpush1.msra.mxu0 0.0
        %1851 = vmatprep.subr.mxu0 0.0
        %1852 = vmatpush1.msra.mxu0 0.0
        %1853 = vmatprep.mubr.f32.mxu0 0.0
        %1854 = vmatmul.mubr.f32.gmra.mrb[0].mxu0 %v685
        %v1855 = vpop.f32.mrb[0].mxu0
        %v1856 = vadd.f32 0.0, %v1855
        %v1857 = vpop.f32.mrb[0].mxu0
        %1858 = vmatprep.mubr.f32.mxu0 0.0
        %1859 = vmatmul.mubr.f32.gmra.mrb[0].mxu0 %v687
        %v1860 = vpop.f32.mrb[0].mxu0
        %v1861 = vadd.f32 0.0, %v1860
        %v1862 = vpop.f32.mrb[0].mxu0
        %1863 = vmatprep.mubr.f32.mxu0 0.0
        %1864 = vmatmul.mubr.f32.gmra.mrb[0].mxu0 %v689
        %v1865 = vpop.f32.mrb[0].mxu0
        %v1866 = vadd.f32 0.0, %v1865
        %v1867 = vpop.f32.mrb[0].mxu0
        %1868 = vmatprep.mubr.f32.mxu0 0.0
        %1869 = vmatmul.mubr.f32.gmra.mrb[0].mxu0 %v691
        %v1870 = vpop.f32.mrb[0].mxu0
        %v1871 = vadd.f32 0.0, %v1870
        %v1872 = vpop.f32.mrb[0].mxu0
        %1873 = vmatprep.mubr.f32.mxu0 0.0
        %1874 = vmatmul.mubr.f32.gmra.mrb[0].mxu0 %v693
        %v1875 = vpop.f32.mrb[0].mxu0
        %v1876 = vadd.f32 0.0, %v1875
        %v1877 = vpop.f32.mrb[0].mxu0
        %1878 = vmatprep.mubr.f32.mxu0 0.0
        %1879 = vmatmul.mubr.f32.gmra.mrb[0].mxu0 %v695
        %v1880 = vpop.f32.mrb[0].mxu0
        %v1881 = vadd.f32 0.0, %v1880
        %v1882 = vpop.f32.mrb[0].mxu0
        %1883 = vmatprep.mubr.f32.mxu0 0.0
        %1884 = vmatmul.mubr.f32.gmra.mrb[0].mxu0 %v697
        %v1885 = vpop.f32.mrb[0].mxu0
        %v1886 = vadd.f32 0.0, %v1885
        %v1887 = vpop.f32.mrb[0].mxu0
        %1888 = vmatprep.mubr.f32.mxu0 0.0
        %1889 = vmatmul.mubr.f32.gmra.mrb[0].mxu0 %v699
        %v1890 = vpop.f32.mrb[0].mxu0
        %v1891 = vadd.f32 0.0, %v1890
        %v1892 = vpop.f32.mrb[0].mxu0
        %1893 = vmatprep.mubr.f32.mxu0 0.0
        %1894 = vmatmul.mubr.f32.gmra.mrb[0].mxu0 %v701
        %v1895 = vpop.f32.mrb[0].mxu0
        %v1896 = vadd.f32 0.0, %v1895
        %v1897 = vpop.f32.mrb[0].mxu0
        %1898 = vmatprep.mubr.f32.mxu0 0.0
        %1899 = vmatmul.mubr.f32.gmra.mrb[0].mxu0 %v703
        %v1900 = vpop.f32.mrb[0].mxu0
        %v1901 = vadd.f32 0.0, %v1900
        %v1902 = vpop.f32.mrb[0].mxu0
        %1903 = vmatprep.mubr.f32.mxu0 0.0
        %1904 = vmatmul.mubr.f32.gmra.mrb[0].mxu0 %v705
        %v1905 = vpop.f32.mrb[0].mxu0
        %v1906 = vadd.f32 0.0, %v1905
        %v1907 = vpop.f32.mrb[0].mxu0
        %1908 = vmatprep.mubr.f32.mxu0 0.0
        %1909 = vmatmul.mubr.f32.gmra.mrb[0].mxu0 %v707
        %v1910 = vpop.f32.mrb[0].mxu0
        %v1911 = vadd.f32 0.0, %v1910
        %v1912 = vpop.f32.mrb[0].mxu0
        %1913 = vmatprep.mubr.f32.mxu0 0.0
        %1914 = vmatmul.mubr.f32.gmra.mrb[0].mxu0 %v709
        %v1915 = vpop.f32.mrb[0].mxu0
        %v1916 = vadd.f32 0.0, %v1915
        %v1917 = vpop.f32.mrb[0].mxu0
        %1918 = vmatprep.mubr.f32.mxu0 0.0
        %1919 = vmatmul.mubr.f32.gmra.mrb[0].mxu0 %v711
        %v1920 = vpop.f32.mrb[0].mxu0
        %v1921 = vadd.f32 0.0, %v1920
        %v1922 = vpop.f32.mrb[0].mxu0
        %1923 = vmatprep.mubr.f32.mxu0 0.0
        %1924 = vmatmul.mubr.f32.gmra.mrb[0].mxu0 %v713
        %v1925 = vpop.f32.mrb[0].mxu0
        %v1926 = vadd.f32 0.0, %v1925
        %v1927 = vpop.f32.mrb[0].mxu0
        %1928 = vmatprep.mubr.f32.mxu0 0.0
        %1929 = vmatmul.mubr.f32.gmra.mrb[0].mxu0 %v715
        %v1930 = vpop.f32.mrb[0].mxu0
        %v1931 = vadd.f32 0.0, %v1930
        %v1932 = vpop.f32.mrb[0].mxu0
        %1933 = vmatprep.mubr.f32.mxu0 0.0
        %1934 = vmatmul.mubr.f32.gmra.mrb[0].mxu0 %v1177
        %v1935 = vpop.f32.mrb[0].mxu0
        %v1936 = vadd.f32 0.0, %v1935
        %v1937 = vpop.f32.mrb[0].mxu0
        %1938 = vmatprep.mubr.f32.mxu0 0.0
        %1939 = vmatmul.mubr.f32.gmra.mrb[0].mxu0 %v1180
        %v1940 = vpop.f32.mrb[0].mxu0
        %v1941 = vadd.f32 0.0, %v1940
        %v1942 = vpop.f32.mrb[0].mxu0
        %1943 = vmatprep.mubr.f32.mxu0 0.0
        %1944 = vmatmul.mubr.f32.gmra.mrb[0].mxu0 %v1784
        %v1945 = vpop.f32.mrb[0].mxu0
        %v1946 = vadd.f32 0.0, %v1945
        %v1947 = vpop.f32.mrb[0].mxu0
        %1948 = vmatprep.mubr.f32.mxu0 0.0
        %1949 = vmatmul.mubr.f32.gmra.mrb[0].mxu0 %v1787
        %v1950 = vpop.f32.mrb[0].mxu0
        %v1951 = vadd.f32 0.0, %v1950
        %v1952 = vpop.f32.mrb[0].mxu0
        %1953 = vdwg.mxu0
        %v1954 = vadd.f32 %v1754, %v1856
        %v1955 = vadd.f32 %v1755, %v1861
        %v1956 = vadd.f32 %v1756, %v1866
        %v1957 = vadd.f32 %v1757, %v1871
        %v1958 = vadd.f32 %v1758, %v1876
        %v1959 = vadd.f32 %v1759, %v1881
        %v1960 = vadd.f32 %v1760, %v1886
        %v1961 = vadd.f32 %v1761, %v1891
        %v1962 = vadd.f32 %v1762, %v1896
        %v1963 = vadd.f32 %v1763, %v1901
        %v1964 = vadd.f32 %v1764, %v1906
        %v1965 = vadd.f32 %v1765, %v1911
        %v1966 = vadd.f32 %v1766, %v1916
        %v1967 = vadd.f32 %v1767, %v1921
        %v1968 = vadd.f32 %v1768, %v1926
        %v1969 = vadd.f32 %v1769, %v1931
        %v1970 = vadd.f32 %v1770, %v1936
        %v1971 = vadd.f32 %v1771, %v1941
        %v1972 = vadd.f32 %v1772, %v1946
        %v1973 = vadd.f32 %v1773, %v1951
        %v1975 = vrot.slane %v370, 1
        %v1976 = vrot.slane %v371, 1
        %v1977 = vsel %vm411, %v1975, %v1976
        %v1978 = vrot.slane %v372, 1
        %v1979 = vsel %vm411, %v1976, %v1978
        %s1980 = scalar_lea.vmem %s2, 448
        %v1981 = vld [vmem:[%s1980] sm:$0xff]
        %v1982 = vld [vmem:[%s1980 + $0x8] sm:$0xff]
        %v1983 = vld [vmem:[%s1980 + $0x10] sm:$0xff]
        %v1984 = vld [vmem:[%s1980 + $0x18] sm:$0xff]
        %v1985 = vld [vmem:[%s1980 + $0x20] sm:$0xff]
        %v1986 = vld [vmem:[%s1980 + $0x28] sm:$0xff]
        %v1987 = vld [vmem:[%s1980 + $0x30] sm:$0xff]
        %v1988 = vld [vmem:[%s1980 + $0x38] sm:$0xff]
        %v1989 = vsel %vm471, %v1977, 0
        %v1991 = vsel %vm471, %v1979, 0
        %1993 = vmatprep.subr.mxu0 0.0
        %1994 = vmatpush1.msra.mxu0 %v1981
        %1995 = vmatprep.subr.mxu0 0.0
        %1996 = vmatpush1.msra.mxu0 %v1982
        %1997 = vmatprep.subr.mxu0 0.0
        %1998 = vmatpush1.msra.mxu0 %v1983
        %1999 = vmatprep.subr.mxu0 0.0
        %2000 = vmatpush1.msra.mxu0 %v1984
        %2001 = vmatprep.subr.mxu0 0.0
        %2002 = vmatpush1.msra.mxu0 %v1985
        %2003 = vmatprep.subr.mxu0 0.0
        %2004 = vmatpush1.msra.mxu0 %v1986
        %2005 = vmatprep.subr.mxu0 0.0
        %2006 = vmatpush1.msra.mxu0 %v1987
        %2007 = vmatprep.subr.mxu0 0.0
        %2008 = vmatpush1.msra.mxu0 %v1988
        %2009 = vmatprep.subr.mxu0 0.0
        %2010 = vmatpush1.msra.mxu0 0.0
        %2011 = vmatprep.subr.mxu0 0.0
        %2012 = vmatpush1.msra.mxu0 0.0
        %2013 = vmatprep.subr.mxu0 0.0
        %2014 = vmatpush1.msra.mxu0 0.0
        %2015 = vmatprep.subr.mxu0 0.0
        %2016 = vmatpush1.msra.mxu0 0.0
        %2017 = vmatprep.subr.mxu0 0.0
        %2018 = vmatpush1.msra.mxu0 0.0
        %2019 = vmatprep.subr.mxu0 0.0
        %2020 = vmatpush1.msra.mxu0 0.0
        %2021 = vmatprep.subr.mxu0 0.0
        %2022 = vmatpush1.msra.mxu0 0.0
        %2023 = vmatprep.subr.mxu0 0.0
        %2024 = vmatpush1.msra.mxu0 0.0
        %2025 = vmatprep.subr.mxu0 0.0
        %2026 = vmatpush1.msra.mxu0 0.0
        %2027 = vmatprep.subr.mxu0 0.0
        %2028 = vmatpush1.msra.mxu0 0.0
        %2029 = vmatprep.subr.mxu0 0.0
        %2030 = vmatpush1.msra.mxu0 0.0
        %2031 = vmatprep.subr.mxu0 0.0
        %2032 = vmatpush1.msra.mxu0 0.0
        %2033 = vmatprep.subr.mxu0 0.0
        %2034 = vmatpush1.msra.mxu0 0.0
        %2035 = vmatprep.subr.mxu0 0.0
        %2036 = vmatpush1.msra.mxu0 0.0
        %2037 = vmatprep.subr.mxu0 0.0
        %2038 = vmatpush1.msra.mxu0 0.0
        %2039 = vmatprep.subr.mxu0 0.0
        %2040 = vmatpush1.msra.mxu0 0.0
        %2041 = vmatprep.subr.mxu0 0.0
        %2042 = vmatpush1.msra.mxu0 0.0
        %2043 = vmatprep.subr.mxu0 0.0
        %2044 = vmatpush1.msra.mxu0 0.0
        %2045 = vmatprep.subr.mxu0 0.0
        %2046 = vmatpush1.msra.mxu0 0.0
        %2047 = vmatprep.subr.mxu0 0.0
        %2048 = vmatpush1.msra.mxu0 0.0
        %2049 = vmatprep.subr.mxu0 0.0
        %2050 = vmatpush1.msra.mxu0 0.0
        %2051 = vmatprep.subr.mxu0 0.0
        %2052 = vmatpush1.msra.mxu0 0.0
        %2053 = vmatprep.subr.mxu0 0.0
        %2054 = vmatpush1.msra.mxu0 0.0
        %2055 = vmatprep.subr.mxu0 0.0
        %2056 = vmatpush1.msra.mxu0 0.0
        %2057 = vmatprep.mubr.f32.mxu0 0.0
        %2058 = vmatmul.mubr.f32.gmra.mrb[0].mxu0 %v480
        %v2059 = vpop.f32.mrb[0].mxu0
        %v2060 = vadd.f32 0.0, %v2059
        %v2061 = vpop.f32.mrb[0].mxu0
        %2062 = vmatprep.mubr.f32.mxu0 0.0
        %2063 = vmatmul.mubr.f32.gmra.mrb[0].mxu0 %v482
        %v2064 = vpop.f32.mrb[0].mxu0
        %v2065 = vadd.f32 0.0, %v2064
        %v2066 = vpop.f32.mrb[0].mxu0
        %2067 = vmatprep.mubr.f32.mxu0 0.0
        %2068 = vmatmul.mubr.f32.gmra.mrb[0].mxu0 %v484
        %v2069 = vpop.f32.mrb[0].mxu0
        %v2070 = vadd.f32 0.0, %v2069
        %v2071 = vpop.f32.mrb[0].mxu0
        %2072 = vmatprep.mubr.f32.mxu0 0.0
        %2073 = vmatmul.mubr.f32.gmra.mrb[0].mxu0 %v486
        %v2074 = vpop.f32.mrb[0].mxu0
        %v2075 = vadd.f32 0.0, %v2074
        %v2076 = vpop.f32.mrb[0].mxu0
        %2077 = vmatprep.mubr.f32.mxu0 0.0
        %2078 = vmatmul.mubr.f32.gmra.mrb[0].mxu0 %v488
        %v2079 = vpop.f32.mrb[0].mxu0
        %v2080 = vadd.f32 0.0, %v2079
        %v2081 = vpop.f32.mrb[0].mxu0
        %2082 = vmatprep.mubr.f32.mxu0 0.0
        %2083 = vmatmul.mubr.f32.gmra.mrb[0].mxu0 %v490
        %v2084 = vpop.f32.mrb[0].mxu0
        %v2085 = vadd.f32 0.0, %v2084
        %v2086 = vpop.f32.mrb[0].mxu0
        %2087 = vmatprep.mubr.f32.mxu0 0.0
        %2088 = vmatmul.mubr.f32.gmra.mrb[0].mxu0 %v492
        %v2089 = vpop.f32.mrb[0].mxu0
        %v2090 = vadd.f32 0.0, %v2089
        %v2091 = vpop.f32.mrb[0].mxu0
        %2092 = vmatprep.mubr.f32.mxu0 0.0
        %2093 = vmatmul.mubr.f32.gmra.mrb[0].mxu0 %v494
        %v2094 = vpop.f32.mrb[0].mxu0
        %v2095 = vadd.f32 0.0, %v2094
        %v2096 = vpop.f32.mrb[0].mxu0
        %2097 = vmatprep.mubr.f32.mxu0 0.0
        %2098 = vmatmul.mubr.f32.gmra.mrb[0].mxu0 %v496
        %v2099 = vpop.f32.mrb[0].mxu0
        %v2100 = vadd.f32 0.0, %v2099
        %v2101 = vpop.f32.mrb[0].mxu0
        %2102 = vmatprep.mubr.f32.mxu0 0.0
        %2103 = vmatmul.mubr.f32.gmra.mrb[0].mxu0 %v498
        %v2104 = vpop.f32.mrb[0].mxu0
        %v2105 = vadd.f32 0.0, %v2104
        %v2106 = vpop.f32.mrb[0].mxu0
        %2107 = vmatprep.mubr.f32.mxu0 0.0
        %2108 = vmatmul.mubr.f32.gmra.mrb[0].mxu0 %v500
        %v2109 = vpop.f32.mrb[0].mxu0
        %v2110 = vadd.f32 0.0, %v2109
        %v2111 = vpop.f32.mrb[0].mxu0
        %2112 = vmatprep.mubr.f32.mxu0 0.0
        %2113 = vmatmul.mubr.f32.gmra.mrb[0].mxu0 %v502
        %v2114 = vpop.f32.mrb[0].mxu0
        %v2115 = vadd.f32 0.0, %v2114
        %v2116 = vpop.f32.mrb[0].mxu0
        %2117 = vmatprep.mubr.f32.mxu0 0.0
        %2118 = vmatmul.mubr.f32.gmra.mrb[0].mxu0 %v504
        %v2119 = vpop.f32.mrb[0].mxu0
        %v2120 = vadd.f32 0.0, %v2119
        %v2121 = vpop.f32.mrb[0].mxu0
        %2122 = vmatprep.mubr.f32.mxu0 0.0
        %2123 = vmatmul.mubr.f32.gmra.mrb[0].mxu0 %v506
        %v2124 = vpop.f32.mrb[0].mxu0
        %v2125 = vadd.f32 0.0, %v2124
        %v2126 = vpop.f32.mrb[0].mxu0
        %2127 = vmatprep.mubr.f32.mxu0 0.0
        %2128 = vmatmul.mubr.f32.gmra.mrb[0].mxu0 %v508
        %v2129 = vpop.f32.mrb[0].mxu0
        %v2130 = vadd.f32 0.0, %v2129
        %v2131 = vpop.f32.mrb[0].mxu0
        %2132 = vmatprep.mubr.f32.mxu0 0.0
        %2133 = vmatmul.mubr.f32.gmra.mrb[0].mxu0 %v510
        %v2134 = vpop.f32.mrb[0].mxu0
        %v2135 = vadd.f32 0.0, %v2134
        %v2136 = vpop.f32.mrb[0].mxu0
        %2137 = vmatprep.mubr.f32.mxu0 0.0
        %2138 = vmatmul.mubr.f32.gmra.mrb[0].mxu0 %v1382
        %v2139 = vpop.f32.mrb[0].mxu0
        %v2140 = vadd.f32 0.0, %v2139
        %v2141 = vpop.f32.mrb[0].mxu0
        %2142 = vmatprep.mubr.f32.mxu0 0.0
        %2143 = vmatmul.mubr.f32.gmra.mrb[0].mxu0 %v1384
        %v2144 = vpop.f32.mrb[0].mxu0
        %v2145 = vadd.f32 0.0, %v2144
        %v2146 = vpop.f32.mrb[0].mxu0
        %2147 = vmatprep.mubr.f32.mxu0 0.0
        %2148 = vmatmul.mubr.f32.gmra.mrb[0].mxu0 %v1989
        %v2149 = vpop.f32.mrb[0].mxu0
        %v2150 = vadd.f32 0.0, %v2149
        %v2151 = vpop.f32.mrb[0].mxu0
        %2152 = vmatprep.mubr.f32.mxu0 0.0
        %2153 = vmatmul.mubr.f32.gmra.mrb[0].mxu0 %v1991
        %v2154 = vpop.f32.mrb[0].mxu0
        %v2155 = vadd.f32 0.0, %v2154
        %v2156 = vpop.f32.mrb[0].mxu0
        %2157 = vdwg.mxu0
        %v2158 = vadd.f32 %v1954, %v2060
        %v2159 = vadd.f32 %v1955, %v2065
        %v2160 = vadd.f32 %v1956, %v2070
        %v2161 = vadd.f32 %v1957, %v2075
        %v2162 = vadd.f32 %v1958, %v2080
        %v2163 = vadd.f32 %v1959, %v2085
        %v2164 = vadd.f32 %v1960, %v2090
        %v2165 = vadd.f32 %v1961, %v2095
        %v2166 = vadd.f32 %v1962, %v2100
        %v2167 = vadd.f32 %v1963, %v2105
        %v2168 = vadd.f32 %v1964, %v2110
        %v2169 = vadd.f32 %v1965, %v2115
        %v2170 = vadd.f32 %v1966, %v2120
        %v2171 = vadd.f32 %v1967, %v2125
        %v2172 = vadd.f32 %v1968, %v2130
        %v2173 = vadd.f32 %v1969, %v2135
        %v2174 = vadd.f32 %v1970, %v2140
        %v2175 = vadd.f32 %v1971, %v2145
        %v2176 = vadd.f32 %v1972, %v2150
        %v2177 = vadd.f32 %v1973, %v2155
        %v2178 = vrot.slane %v370, 2
        %v2179 = vrot.slane %v371, 2
        %v2180 = vsel %vm882, %v2178, %v2179
        %v2181 = vrot.slane %v372, 2
        %v2182 = vsel %vm882, %v2179, %v2181
        %s2183 = scalar_lea.vmem %s2, 512
        %v2184 = vld [vmem:[%s2183] sm:$0xff]
        %v2185 = vld [vmem:[%s2183 + $0x8] sm:$0xff]
        %v2186 = vld [vmem:[%s2183 + $0x10] sm:$0xff]
        %v2187 = vld [vmem:[%s2183 + $0x18] sm:$0xff]
        %v2188 = vld [vmem:[%s2183 + $0x20] sm:$0xff]
        %v2189 = vld [vmem:[%s2183 + $0x28] sm:$0xff]
        %v2190 = vld [vmem:[%s2183 + $0x30] sm:$0xff]
        %v2191 = vld [vmem:[%s2183 + $0x38] sm:$0xff]
        %v2192 = vsel %vm471, %v2180, 0
        %v2194 = vsel %vm471, %v2182, 0
        %2196 = vmatprep.subr.mxu0 0.0
        %2197 = vmatpush1.msra.mxu0 %v2184
        %2198 = vmatprep.subr.mxu0 0.0
        %2199 = vmatpush1.msra.mxu0 %v2185
        %2200 = vmatprep.subr.mxu0 0.0
        %2201 = vmatpush1.msra.mxu0 %v2186
        %2202 = vmatprep.subr.mxu0 0.0
        %2203 = vmatpush1.msra.mxu0 %v2187
        %2204 = vmatprep.subr.mxu0 0.0
        %2205 = vmatpush1.msra.mxu0 %v2188
        %2206 = vmatprep.subr.mxu0 0.0
        %2207 = vmatpush1.msra.mxu0 %v2189
        %2208 = vmatprep.subr.mxu0 0.0
        %2209 = vmatpush1.msra.mxu0 %v2190
        %2210 = vmatprep.subr.mxu0 0.0
        %2211 = vmatpush1.msra.mxu0 %v2191
        %2212 = vmatprep.subr.mxu0 0.0
        %2213 = vmatpush1.msra.mxu0 0.0
        %2214 = vmatprep.subr.mxu0 0.0
        %2215 = vmatpush1.msra.mxu0 0.0
        %2216 = vmatprep.subr.mxu0 0.0
        %2217 = vmatpush1.msra.mxu0 0.0
        %2218 = vmatprep.subr.mxu0 0.0
        %2219 = vmatpush1.msra.mxu0 0.0
        %2220 = vmatprep.subr.mxu0 0.0
        %2221 = vmatpush1.msra.mxu0 0.0
        %2222 = vmatprep.subr.mxu0 0.0
        %2223 = vmatpush1.msra.mxu0 0.0
        %2224 = vmatprep.subr.mxu0 0.0
        %2225 = vmatpush1.msra.mxu0 0.0
        %2226 = vmatprep.subr.mxu0 0.0
        %2227 = vmatpush1.msra.mxu0 0.0
        %2228 = vmatprep.subr.mxu0 0.0
        %2229 = vmatpush1.msra.mxu0 0.0
        %2230 = vmatprep.subr.mxu0 0.0
        %2231 = vmatpush1.msra.mxu0 0.0
        %2232 = vmatprep.subr.mxu0 0.0
        %2233 = vmatpush1.msra.mxu0 0.0
        %2234 = vmatprep.subr.mxu0 0.0
        %2235 = vmatpush1.msra.mxu0 0.0
        %2236 = vmatprep.subr.mxu0 0.0
        %2237 = vmatpush1.msra.mxu0 0.0
        %2238 = vmatprep.subr.mxu0 0.0
        %2239 = vmatpush1.msra.mxu0 0.0
        %2240 = vmatprep.subr.mxu0 0.0
        %2241 = vmatpush1.msra.mxu0 0.0
        %2242 = vmatprep.subr.mxu0 0.0
        %2243 = vmatpush1.msra.mxu0 0.0
        %2244 = vmatprep.subr.mxu0 0.0
        %2245 = vmatpush1.msra.mxu0 0.0
        %2246 = vmatprep.subr.mxu0 0.0
        %2247 = vmatpush1.msra.mxu0 0.0
        %2248 = vmatprep.subr.mxu0 0.0
        %2249 = vmatpush1.msra.mxu0 0.0
        %2250 = vmatprep.subr.mxu0 0.0
        %2251 = vmatpush1.msra.mxu0 0.0
        %2252 = vmatprep.subr.mxu0 0.0
        %2253 = vmatpush1.msra.mxu0 0.0
        %2254 = vmatprep.subr.mxu0 0.0
        %2255 = vmatpush1.msra.mxu0 0.0
        %2256 = vmatprep.subr.mxu0 0.0
        %2257 = vmatpush1.msra.mxu0 0.0
        %2258 = vmatprep.subr.mxu0 0.0
        %2259 = vmatpush1.msra.mxu0 0.0
        %2260 = vmatprep.mubr.f32.mxu0 0.0
        %2261 = vmatmul.mubr.f32.gmra.mrb[0].mxu0 %v950
        %v2262 = vpop.f32.mrb[0].mxu0
        %v2263 = vadd.f32 0.0, %v2262
        %v2264 = vpop.f32.mrb[0].mxu0
        %2265 = vmatprep.mubr.f32.mxu0 0.0
        %2266 = vmatmul.mubr.f32.gmra.mrb[0].mxu0 %v952
        %v2267 = vpop.f32.mrb[0].mxu0
        %v2268 = vadd.f32 0.0, %v2267
        %v2269 = vpop.f32.mrb[0].mxu0
        %2270 = vmatprep.mubr.f32.mxu0 0.0
        %2271 = vmatmul.mubr.f32.gmra.mrb[0].mxu0 %v954
        %v2272 = vpop.f32.mrb[0].mxu0
        %v2273 = vadd.f32 0.0, %v2272
        %v2274 = vpop.f32.mrb[0].mxu0
        %2275 = vmatprep.mubr.f32.mxu0 0.0
        %2276 = vmatmul.mubr.f32.gmra.mrb[0].mxu0 %v956
        %v2277 = vpop.f32.mrb[0].mxu0
        %v2278 = vadd.f32 0.0, %v2277
        %v2279 = vpop.f32.mrb[0].mxu0
        %2280 = vmatprep.mubr.f32.mxu0 0.0
        %2281 = vmatmul.mubr.f32.gmra.mrb[0].mxu0 %v958
        %v2282 = vpop.f32.mrb[0].mxu0
        %v2283 = vadd.f32 0.0, %v2282
        %v2284 = vpop.f32.mrb[0].mxu0
        %2285 = vmatprep.mubr.f32.mxu0 0.0
        %2286 = vmatmul.mubr.f32.gmra.mrb[0].mxu0 %v960
        %v2287 = vpop.f32.mrb[0].mxu0
        %v2288 = vadd.f32 0.0, %v2287
        %v2289 = vpop.f32.mrb[0].mxu0
        %2290 = vmatprep.mubr.f32.mxu0 0.0
        %2291 = vmatmul.mubr.f32.gmra.mrb[0].mxu0 %v962
        %v2292 = vpop.f32.mrb[0].mxu0
        %v2293 = vadd.f32 0.0, %v2292
        %v2294 = vpop.f32.mrb[0].mxu0
        %2295 = vmatprep.mubr.f32.mxu0 0.0
        %2296 = vmatmul.mubr.f32.gmra.mrb[0].mxu0 %v964
        %v2297 = vpop.f32.mrb[0].mxu0
        %v2298 = vadd.f32 0.0, %v2297
        %v2299 = vpop.f32.mrb[0].mxu0
        %2300 = vmatprep.mubr.f32.mxu0 0.0
        %2301 = vmatmul.mubr.f32.gmra.mrb[0].mxu0 %v966
        %v2302 = vpop.f32.mrb[0].mxu0
        %v2303 = vadd.f32 0.0, %v2302
        %v2304 = vpop.f32.mrb[0].mxu0
        %2305 = vmatprep.mubr.f32.mxu0 0.0
        %2306 = vmatmul.mubr.f32.gmra.mrb[0].mxu0 %v968
        %v2307 = vpop.f32.mrb[0].mxu0
        %v2308 = vadd.f32 0.0, %v2307
        %v2309 = vpop.f32.mrb[0].mxu0
        %2310 = vmatprep.mubr.f32.mxu0 0.0
        %2311 = vmatmul.mubr.f32.gmra.mrb[0].mxu0 %v970
        %v2312 = vpop.f32.mrb[0].mxu0
        %v2313 = vadd.f32 0.0, %v2312
        %v2314 = vpop.f32.mrb[0].mxu0
        %2315 = vmatprep.mubr.f32.mxu0 0.0
        %2316 = vmatmul.mubr.f32.gmra.mrb[0].mxu0 %v972
        %v2317 = vpop.f32.mrb[0].mxu0
        %v2318 = vadd.f32 0.0, %v2317
        %v2319 = vpop.f32.mrb[0].mxu0
        %2320 = vmatprep.mubr.f32.mxu0 0.0
        %2321 = vmatmul.mubr.f32.gmra.mrb[0].mxu0 %v974
        %v2322 = vpop.f32.mrb[0].mxu0
        %v2323 = vadd.f32 0.0, %v2322
        %v2324 = vpop.f32.mrb[0].mxu0
        %2325 = vmatprep.mubr.f32.mxu0 0.0
        %2326 = vmatmul.mubr.f32.gmra.mrb[0].mxu0 %v976
        %v2327 = vpop.f32.mrb[0].mxu0
        %v2328 = vadd.f32 0.0, %v2327
        %v2329 = vpop.f32.mrb[0].mxu0
        %2330 = vmatprep.mubr.f32.mxu0 0.0
        %2331 = vmatmul.mubr.f32.gmra.mrb[0].mxu0 %v978
        %v2332 = vpop.f32.mrb[0].mxu0
        %v2333 = vadd.f32 0.0, %v2332
        %v2334 = vpop.f32.mrb[0].mxu0
        %2335 = vmatprep.mubr.f32.mxu0 0.0
        %2336 = vmatmul.mubr.f32.gmra.mrb[0].mxu0 %v980
        %v2337 = vpop.f32.mrb[0].mxu0
        %v2338 = vadd.f32 0.0, %v2337
        %v2339 = vpop.f32.mrb[0].mxu0
        %2340 = vmatprep.mubr.f32.mxu0 0.0
        %2341 = vmatmul.mubr.f32.gmra.mrb[0].mxu0 %v1585
        %v2342 = vpop.f32.mrb[0].mxu0
        %v2343 = vadd.f32 0.0, %v2342
        %v2344 = vpop.f32.mrb[0].mxu0
        %2345 = vmatprep.mubr.f32.mxu0 0.0
        %2346 = vmatmul.mubr.f32.gmra.mrb[0].mxu0 %v1587
        %v2347 = vpop.f32.mrb[0].mxu0
        %v2348 = vadd.f32 0.0, %v2347
        %v2349 = vpop.f32.mrb[0].mxu0
        %2350 = vmatprep.mubr.f32.mxu0 0.0
        %2351 = vmatmul.mubr.f32.gmra.mrb[0].mxu0 %v2192
        %v2352 = vpop.f32.mrb[0].mxu0
        %v2353 = vadd.f32 0.0, %v2352
        %v2354 = vpop.f32.mrb[0].mxu0
        %2355 = vmatprep.mubr.f32.mxu0 0.0
        %2356 = vmatmul.mubr.f32.gmra.mrb[0].mxu0 %v2194
        %v2357 = vpop.f32.mrb[0].mxu0
        %v2358 = vadd.f32 0.0, %v2357
        %v2359 = vpop.f32.mrb[0].mxu0
        %2360 = vdwg.mxu0
        %v2361 = vadd.f32 %v2158, %v2263
        %v2362 = vadd.f32 %v2159, %v2268
        %v2363 = vadd.f32 %v2160, %v2273
        %v2364 = vadd.f32 %v2161, %v2278
        %v2365 = vadd.f32 %v2162, %v2283
        %v2366 = vadd.f32 %v2163, %v2288
        %v2367 = vadd.f32 %v2164, %v2293
        %v2368 = vadd.f32 %v2165, %v2298
        %v2369 = vadd.f32 %v2166, %v2303
        %v2370 = vadd.f32 %v2167, %v2308
        %v2371 = vadd.f32 %v2168, %v2313
        %v2372 = vadd.f32 %v2169, %v2318
        %v2373 = vadd.f32 %v2170, %v2323
        %v2374 = vadd.f32 %v2171, %v2328
        %v2375 = vadd.f32 %v2172, %v2333
        %v2376 = vadd.f32 %v2173, %v2338
        %v2377 = vadd.f32 %v2174, %v2343
        %v2378 = vadd.f32 %v2175, %v2348
        %v2379 = vadd.f32 %v2176, %v2353
        %v2380 = vadd.f32 %v2177, %v2358
        %v2381 = vld [vmem:[%s3] sm:$0x1]
        %v2383 = vlaneseq
        %v2384 = vshrl.u32 %v2383, 7
        %v2385 = vsub.s32 0, %v2384
        %v2386 = vrot.slane %v2381, %v2385
        %v2388 = vadd.f32 %v2361, %v2386
        %v2389 = vadd.f32 %v2362, %v2386
        %v2390 = vadd.f32 %v2363, %v2386
        %v2391 = vadd.f32 %v2364, %v2386
        %v2392 = vadd.f32 %v2365, %v2386
        %v2393 = vadd.f32 %v2366, %v2386
        %v2394 = vadd.f32 %v2367, %v2386
        %v2395 = vadd.f32 %v2368, %v2386
        %v2396 = vadd.f32 %v2369, %v2386
        %v2397 = vadd.f32 %v2370, %v2386
        %v2398 = vadd.f32 %v2371, %v2386
        %v2399 = vadd.f32 %v2372, %v2386
        %v2400 = vadd.f32 %v2373, %v2386
        %v2401 = vadd.f32 %v2374, %v2386
        %v2402 = vadd.f32 %v2375, %v2386
        %v2403 = vadd.f32 %v2376, %v2386
        %v2404 = vadd.f32 %v2377, %v2386
        %v2405 = vadd.f32 %v2378, %v2386
        %v2406 = vadd.f32 %v2379, %v2386
        %v2407 = vadd.f32 %v2380, %v2386
        %v2408 = vmax.f32 %v2388, 0.0
        %v2409 = vmax.f32 %v2389, 0.0
        %v2410 = vmax.f32 %v2390, 0.0
        %v2411 = vmax.f32 %v2391, 0.0
        %v2412 = vmax.f32 %v2392, 0.0
        %v2413 = vmax.f32 %v2393, 0.0
        %v2414 = vmax.f32 %v2394, 0.0
        %v2415 = vmax.f32 %v2395, 0.0
        %v2416 = vmax.f32 %v2396, 0.0
        %v2417 = vmax.f32 %v2397, 0.0
        %v2418 = vmax.f32 %v2398, 0.0
        %v2419 = vmax.f32 %v2399, 0.0
        %v2420 = vmax.f32 %v2400, 0.0
        %v2421 = vmax.f32 %v2401, 0.0
        %v2422 = vmax.f32 %v2402, 0.0
        %v2423 = vmax.f32 %v2403, 0.0
        %v2424 = vmax.f32 %v2404, 0.0
        %v2425 = vmax.f32 %v2405, 0.0
        %v2426 = vmax.f32 %v2406, 0.0
        %v2427 = vmax.f32 %v2407, 0.0
        %2428 = vst.msk [vmem:[#allocation2 + $0x1] sm:$0xff] %vm471, %v2408
        %2429 = vst.msk [vmem:[#allocation2 + $0x9] sm:$0xff] %vm471, %v2409
        %2430 = vst.msk [vmem:[#allocation2 + $0x19] sm:$0xff] %vm471, %v2410
        %2431 = vst.msk [vmem:[#allocation2 + $0x21] sm:$0xff] %vm471, %v2411
        %2432 = vst.msk [vmem:[#allocation2 + $0x31] sm:$0xff] %vm471, %v2412
        %2433 = vst.msk [vmem:[#allocation2 + $0x39] sm:$0xff] %vm471, %v2413
        %2434 = vst.msk [vmem:[#allocation2 + $0x49] sm:$0xff] %vm471, %v2414
        %2435 = vst.msk [vmem:[#allocation2 + $0x51] sm:$0xff] %vm471, %v2415
        %2436 = vst.msk [vmem:[#allocation2 + $0x61] sm:$0xff] %vm471, %v2416
        %2437 = vst.msk [vmem:[#allocation2 + $0x69] sm:$0xff] %vm471, %v2417
        %2438 = vst.msk [vmem:[#allocation2 + $0x79] sm:$0xff] %vm471, %v2418
        %2439 = vst.msk [vmem:[#allocation2 + $0x81] sm:$0xff] %vm471, %v2419
        %2440 = vst.msk [vmem:[#allocation2 + $0x91] sm:$0xff] %vm471, %v2420
        %2441 = vst.msk [vmem:[#allocation2 + $0x99] sm:$0xff] %vm471, %v2421
        %2442 = vst.msk [vmem:[#allocation2 + $0xa9] sm:$0xff] %vm471, %v2422
        %2443 = vst.msk [vmem:[#allocation2 + $0xb1] sm:$0xff] %vm471, %v2423
        %2444 = vst.msk [vmem:[#allocation2 + $0xc1] sm:$0xff] %vm471, %v2424
        %2445 = vst.msk [vmem:[#allocation2 + $0xc9] sm:$0xff] %vm471, %v2425
        %2446 = vst.msk [vmem:[#allocation2 + $0xd9] sm:$0xff] %vm471, %v2426
        %2447 = vst.msk [vmem:[#allocation2 + $0xe1] sm:$0xff] %vm471, %v2427
        // Predicated region
        $region49: #{tpu_custom_call.1} parent=43 // pred_check
          %p2448 = pneg %p312
        $region50: #{tpu_custom_call.1} parent=43 // pred_check_branch
          %2450 = sbr.rel (%p2448) target = $region52
        $region51: #{tpu_custom_call.1} parent=43 // pred_region
          %2451 = vst.msk [vmem:[#allocation2 + $0x1] sm:$0xff] %vm471, 0.0
          %2452 = vst.msk [vmem:[#allocation2 + $0x9] sm:$0xff] %vm471, 0.0
        $region52: #{tpu_custom_call.1} parent=43 // pred_fallthru
          _
        %p2453 = scmp.eq.s32.totalorder %s25, 1
        // Predicated region
        $region53: #{tpu_custom_call.1} parent=43 // pred_check
          %p2454 = pneg %p2453
        $region54: #{tpu_custom_call.1} parent=43 // pred_check_branch
          %2456 = sbr.rel (%p2454) target = $region56
        $region55: #{tpu_custom_call.1} parent=43 // pred_region
          %s2457 = scalar_lea.vmem [#allocation2], 216
          %2458 = vst.msk [vmem:[%s2457 + $0x1] sm:$0xff] %vm471, 0.0
          %2459 = vst.msk [vmem:[%s2457 + $0x9] sm:$0xff] %vm471, 0.0
        $region56: #{tpu_custom_call.1} parent=43 // pred_fallthru
          _
        %v2460 = vld [vmem:[#allocation2] sm:$0xff]
        %v2461 = vld [vmem:[#allocation2 + $0x8] sm:$0xff]
        %v2462 = vld [vmem:[#allocation2 + $0x18] sm:$0xff]
        %v2463 = vld [vmem:[#allocation2 + $0x20] sm:$0xff]
        %v2464 = vld [vmem:[#allocation2 + $0x30] sm:$0xff]
        %v2465 = vld [vmem:[#allocation2 + $0x38] sm:$0xff]
        %v2466 = vld [vmem:[#allocation2 + $0x48] sm:$0xff]
        %v2467 = vld [vmem:[#allocation2 + $0x50] sm:$0xff]
        %v2468 = vld [vmem:[#allocation2 + $0x60] sm:$0xff]
        %v2469 = vld [vmem:[#allocation2 + $0x68] sm:$0xff]
        %v2470 = vld [vmem:[#allocation2 + $0x78] sm:$0xff]
        %v2471 = vld [vmem:[#allocation2 + $0x80] sm:$0xff]
        %v2472 = vld [vmem:[#allocation2 + $0x90] sm:$0xff]
        %v2473 = vld [vmem:[#allocation2 + $0x98] sm:$0xff]
        %v2474 = vld [vmem:[#allocation2 + $0xa8] sm:$0xff]
        %v2475 = vld [vmem:[#allocation2 + $0xb0] sm:$0xff]
        %v2476 = vld [vmem:[%s4] sm:$0xff]
        %v2477 = vld [vmem:[%s4 + $0x8] sm:$0xff]
        %v2478 = vld [vmem:[%s4 + $0x10] sm:$0xff]
        %v2479 = vld [vmem:[%s4 + $0x18] sm:$0xff]
        %v2480 = vld [vmem:[%s4 + $0x20] sm:$0xff]
        %v2481 = vld [vmem:[%s4 + $0x28] sm:$0xff]
        %v2482 = vld [vmem:[%s4 + $0x30] sm:$0xff]
        %v2483 = vld [vmem:[%s4 + $0x38] sm:$0xff]
        %v2484 = vld [vmem:[#allocation2 + $0x1] sm:$0xff]
        %v2485 = vld [vmem:[#allocation2 + $0x9] sm:$0xff]
        %v2486 = vld [vmem:[#allocation2 + $0x19] sm:$0xff]
        %v2487 = vld [vmem:[#allocation2 + $0x21] sm:$0xff]
        %v2488 = vld [vmem:[#allocation2 + $0x31] sm:$0xff]
        %v2489 = vld [vmem:[#allocation2 + $0x39] sm:$0xff]
        %v2490 = vld [vmem:[#allocation2 + $0x49] sm:$0xff]
        %v2491 = vld [vmem:[#allocation2 + $0x51] sm:$0xff]
        %v2492 = vld [vmem:[#allocation2 + $0x61] sm:$0xff]
        %v2493 = vld [vmem:[#allocation2 + $0x69] sm:$0xff]
        %v2494 = vld [vmem:[#allocation2 + $0x79] sm:$0xff]
        %v2495 = vld [vmem:[#allocation2 + $0x81] sm:$0xff]
        %v2496 = vld [vmem:[#allocation2 + $0x91] sm:$0xff]
        %v2497 = vld [vmem:[#allocation2 + $0x99] sm:$0xff]
        %v2498 = vld [vmem:[#allocation2 + $0xa9] sm:$0xff]
        %v2499 = vld [vmem:[#allocation2 + $0xb1] sm:$0xff]
        %s2500 = scalar_lea.vmem %s4, 64
        %v2501 = vld [vmem:[%s2500] sm:$0xff]
        %v2502 = vld [vmem:[%s2500 + $0x8] sm:$0xff]
        %v2503 = vld [vmem:[%s2500 + $0x10] sm:$0xff]
        %v2504 = vld [vmem:[%s2500 + $0x18] sm:$0xff]
        %v2505 = vld [vmem:[%s2500 + $0x20] sm:$0xff]
        %v2506 = vld [vmem:[%s2500 + $0x28] sm:$0xff]
        %v2507 = vld [vmem:[%s2500 + $0x30] sm:$0xff]
        %v2508 = vld [vmem:[%s2500 + $0x38] sm:$0xff]
        %v2510 = vsel %vm471, %v2484, 0
        %v2513 = vsel %vm471, %v2485, 0
        %v2516 = vsel %vm471, %v2486, 0
        %v2519 = vsel %vm471, %v2487, 0
        %v2522 = vsel %vm471, %v2488, 0
        %v2525 = vsel %vm471, %v2489, 0
        %v2528 = vsel %vm471, %v2490, 0
        %v2531 = vsel %vm471, %v2491, 0
        %v2534 = vsel %vm471, %v2492, 0
        %v2537 = vsel %vm471, %v2493, 0
        %v2540 = vsel %vm471, %v2494, 0
        %v2543 = vsel %vm471, %v2495, 0
        %v2546 = vsel %vm471, %v2496, 0
        %v2549 = vsel %vm471, %v2497, 0
        %v2552 = vsel %vm471, %v2498, 0
        %v2555 = vsel %vm471, %v2499, 0
        %2557 = vmatprep.subr.mxu0 0.0
        %2558 = vmatpush1.msra.mxu0 %v2501
        %2559 = vmatprep.subr.mxu0 0.0
        %2560 = vmatpush1.msra.mxu0 %v2502
        %2561 = vmatprep.subr.mxu0 0.0
        %2562 = vmatpush1.msra.mxu0 %v2503
        %2563 = vmatprep.subr.mxu0 0.0
        %2564 = vmatpush1.msra.mxu0 %v2504
        %2565 = vmatprep.subr.mxu0 0.0
        %2566 = vmatpush1.msra.mxu0 %v2505
        %2567 = vmatprep.subr.mxu0 0.0
        %2568 = vmatpush1.msra.mxu0 %v2506
        %2569 = vmatprep.subr.mxu0 0.0
        %2570 = vmatpush1.msra.mxu0 %v2507
        %2571 = vmatprep.subr.mxu0 0.0
        %2572 = vmatpush1.msra.mxu0 %v2508
        %2573 = vmatprep.subr.mxu0 0.0
        %2574 = vmatpush1.msra.mxu0 0.0
        %2575 = vmatprep.subr.mxu0 0.0
        %2576 = vmatpush1.msra.mxu0 0.0
        %2577 = vmatprep.subr.mxu0 0.0
        %2578 = vmatpush1.msra.mxu0 0.0
        %2579 = vmatprep.subr.mxu0 0.0
        %2580 = vmatpush1.msra.mxu0 0.0
        %2581 = vmatprep.subr.mxu0 0.0
        %2582 = vmatpush1.msra.mxu0 0.0
        %2583 = vmatprep.subr.mxu0 0.0
        %2584 = vmatpush1.msra.mxu0 0.0
        %2585 = vmatprep.subr.mxu0 0.0
        %2586 = vmatpush1.msra.mxu0 0.0
        %2587 = vmatprep.subr.mxu0 0.0
        %2588 = vmatpush1.msra.mxu0 0.0
        %2589 = vmatprep.subr.mxu0 0.0
        %2590 = vmatpush1.msra.mxu0 0.0
        %2591 = vmatprep.subr.mxu0 0.0
        %2592 = vmatpush1.msra.mxu0 0.0
        %2593 = vmatprep.subr.mxu0 0.0
        %2594 = vmatpush1.msra.mxu0 0.0
        %2595 = vmatprep.subr.mxu0 0.0
        %2596 = vmatpush1.msra.mxu0 0.0
        %2597 = vmatprep.subr.mxu0 0.0
        %2598 = vmatpush1.msra.mxu0 0.0
        %2599 = vmatprep.subr.mxu0 0.0
        %2600 = vmatpush1.msra.mxu0 0.0
        %2601 = vmatprep.subr.mxu0 0.0
        %2602 = vmatpush1.msra.mxu0 0.0
        %2603 = vmatprep.subr.mxu0 0.0
        %2604 = vmatpush1.msra.mxu0 0.0
        %2605 = vmatprep.subr.mxu0 0.0
        %2606 = vmatpush1.msra.mxu0 0.0
        %2607 = vmatprep.subr.mxu0 0.0
        %2608 = vmatpush1.msra.mxu0 0.0
        %2609 = vmatprep.subr.mxu0 0.0
        %2610 = vmatpush1.msra.mxu0 0.0
        %2611 = vmatprep.subr.mxu0 0.0
        %2612 = vmatpush1.msra.mxu0 0.0
        %2613 = vmatprep.subr.mxu0 0.0
        %2614 = vmatpush1.msra.mxu0 0.0
        %2615 = vmatprep.subr.mxu0 0.0
        %2616 = vmatpush1.msra.mxu0 0.0
        %2617 = vmatprep.subr.mxu0 0.0
        %2618 = vmatpush1.msra.mxu0 0.0
        %2619 = vmatprep.subr.mxu0 0.0
        %2620 = vmatpush1.msra.mxu0 0.0
        %2621 = vmatprep.mubr.f32.mxu0 0.0
        %2622 = vmatmul.mubr.f32.gmra.mrb[0].mxu0 %v2510
        %v2623 = vpop.f32.mrb[0].mxu0
        %v2624 = vadd.f32 0.0, %v2623
        %v2625 = vpop.f32.mrb[0].mxu0
        %2626 = vmatprep.mubr.f32.mxu0 0.0
        %2627 = vmatmul.mubr.f32.gmra.mrb[0].mxu0 %v2513
        %v2628 = vpop.f32.mrb[0].mxu0
        %v2629 = vadd.f32 0.0, %v2628
        %v2630 = vpop.f32.mrb[0].mxu0
        %2631 = vmatprep.mubr.f32.mxu0 0.0
        %2632 = vmatmul.mubr.f32.gmra.mrb[0].mxu0 %v2516
        %v2633 = vpop.f32.mrb[0].mxu0
        %v2634 = vadd.f32 0.0, %v2633
        %v2635 = vpop.f32.mrb[0].mxu0
        %2636 = vmatprep.mubr.f32.mxu0 0.0
        %2637 = vmatmul.mubr.f32.gmra.mrb[0].mxu0 %v2519
        %v2638 = vpop.f32.mrb[0].mxu0
        %v2639 = vadd.f32 0.0, %v2638
        %v2640 = vpop.f32.mrb[0].mxu0
        %2641 = vmatprep.mubr.f32.mxu0 0.0
        %2642 = vmatmul.mubr.f32.gmra.mrb[0].mxu0 %v2522
        %v2643 = vpop.f32.mrb[0].mxu0
        %v2644 = vadd.f32 0.0, %v2643
        %v2645 = vpop.f32.mrb[0].mxu0
        %2646 = vmatprep.mubr.f32.mxu0 0.0
        %2647 = vmatmul.mubr.f32.gmra.mrb[0].mxu0 %v2525
        %v2648 = vpop.f32.mrb[0].mxu0
        %v2649 = vadd.f32 0.0, %v2648
        %v2650 = vpop.f32.mrb[0].mxu0
        %2651 = vmatprep.mubr.f32.mxu0 0.0
        %2652 = vmatmul.mubr.f32.gmra.mrb[0].mxu0 %v2528
        %v2653 = vpop.f32.mrb[0].mxu0
        %v2654 = vadd.f32 0.0, %v2653
        %v2655 = vpop.f32.mrb[0].mxu0
        %2656 = vmatprep.mubr.f32.mxu0 0.0
        %2657 = vmatmul.mubr.f32.gmra.mrb[0].mxu0 %v2531
        %v2658 = vpop.f32.mrb[0].mxu0
        %v2659 = vadd.f32 0.0, %v2658
        %v2660 = vpop.f32.mrb[0].mxu0
        %2661 = vmatprep.mubr.f32.mxu0 0.0
        %2662 = vmatmul.mubr.f32.gmra.mrb[0].mxu0 %v2534
        %v2663 = vpop.f32.mrb[0].mxu0
        %v2664 = vadd.f32 0.0, %v2663
        %v2665 = vpop.f32.mrb[0].mxu0
        %2666 = vmatprep.mubr.f32.mxu0 0.0
        %2667 = vmatmul.mubr.f32.gmra.mrb[0].mxu0 %v2537
        %v2668 = vpop.f32.mrb[0].mxu0
        %v2669 = vadd.f32 0.0, %v2668
        %v2670 = vpop.f32.mrb[0].mxu0
        %2671 = vmatprep.mubr.f32.mxu0 0.0
        %2672 = vmatmul.mubr.f32.gmra.mrb[0].mxu0 %v2540
        %v2673 = vpop.f32.mrb[0].mxu0
        %v2674 = vadd.f32 0.0, %v2673
        %v2675 = vpop.f32.mrb[0].mxu0
        %2676 = vmatprep.mubr.f32.mxu0 0.0
        %2677 = vmatmul.mubr.f32.gmra.mrb[0].mxu0 %v2543
        %v2678 = vpop.f32.mrb[0].mxu0
        %v2679 = vadd.f32 0.0, %v2678
        %v2680 = vpop.f32.mrb[0].mxu0
        %2681 = vmatprep.mubr.f32.mxu0 0.0
        %2682 = vmatmul.mubr.f32.gmra.mrb[0].mxu0 %v2546
        %v2683 = vpop.f32.mrb[0].mxu0
        %v2684 = vadd.f32 0.0, %v2683
        %v2685 = vpop.f32.mrb[0].mxu0
        %2686 = vmatprep.mubr.f32.mxu0 0.0
        %2687 = vmatmul.mubr.f32.gmra.mrb[0].mxu0 %v2549
        %v2688 = vpop.f32.mrb[0].mxu0
        %v2689 = vadd.f32 0.0, %v2688
        %v2690 = vpop.f32.mrb[0].mxu0
        %2691 = vmatprep.mubr.f32.mxu0 0.0
        %2692 = vmatmul.mubr.f32.gmra.mrb[0].mxu0 %v2552
        %v2693 = vpop.f32.mrb[0].mxu0
        %v2694 = vadd.f32 0.0, %v2693
        %v2695 = vpop.f32.mrb[0].mxu0
        %2696 = vmatprep.mubr.f32.mxu0 0.0
        %2697 = vmatmul.mubr.f32.gmra.mrb[0].mxu0 %v2555
        %v2698 = vpop.f32.mrb[0].mxu0
        %v2699 = vadd.f32 0.0, %v2698
        %v2700 = vpop.f32.mrb[0].mxu0
        %2701 = vdwg.mxu0
        %v2703 = vsel %vm471, %v2460, 0
        %v2706 = vsel %vm471, %v2461, 0
        %v2709 = vsel %vm471, %v2462, 0
        %v2712 = vsel %vm471, %v2463, 0
        %v2715 = vsel %vm471, %v2464, 0
        %v2718 = vsel %vm471, %v2465, 0
        %v2721 = vsel %vm471, %v2466, 0
        %v2724 = vsel %vm471, %v2467, 0
        %v2727 = vsel %vm471, %v2468, 0
        %v2730 = vsel %vm471, %v2469, 0
        %v2733 = vsel %vm471, %v2470, 0
        %v2736 = vsel %vm471, %v2471, 0
        %v2739 = vsel %vm471, %v2472, 0
        %v2742 = vsel %vm471, %v2473, 0
        %v2745 = vsel %vm471, %v2474, 0
        %v2748 = vsel %vm471, %v2475, 0
        %2750 = vmatprep.subr.mxu0 0.0
        %2751 = vmatpush1.msra.mxu0 %v2476
        %2752 = vmatprep.subr.mxu0 0.0
        %2753 = vmatpush1.msra.mxu0 %v2477
        %2754 = vmatprep.subr.mxu0 0.0
        %2755 = vmatpush1.msra.mxu0 %v2478
        %2756 = vmatprep.subr.mxu0 0.0
        %2757 = vmatpush1.msra.mxu0 %v2479
        %2758 = vmatprep.subr.mxu0 0.0
        %2759 = vmatpush1.msra.mxu0 %v2480
        %2760 = vmatprep.subr.mxu0 0.0
        %2761 = vmatpush1.msra.mxu0 %v2481
        %2762 = vmatprep.subr.mxu0 0.0
        %2763 = vmatpush1.msra.mxu0 %v2482
        %2764 = vmatprep.subr.mxu0 0.0
        %2765 = vmatpush1.msra.mxu0 %v2483
        %2766 = vmatprep.subr.mxu0 0.0
        %2767 = vmatpush1.msra.mxu0 0.0
        %2768 = vmatprep.subr.mxu0 0.0
        %2769 = vmatpush1.msra.mxu0 0.0
        %2770 = vmatprep.subr.mxu0 0.0
        %2771 = vmatpush1.msra.mxu0 0.0
        %2772 = vmatprep.subr.mxu0 0.0
        %2773 = vmatpush1.msra.mxu0 0.0
        %2774 = vmatprep.subr.mxu0 0.0
        %2775 = vmatpush1.msra.mxu0 0.0
        %2776 = vmatprep.subr.mxu0 0.0
        %2777 = vmatpush1.msra.mxu0 0.0
        %2778 = vmatprep.subr.mxu0 0.0
        %2779 = vmatpush1.msra.mxu0 0.0
        %2780 = vmatprep.subr.mxu0 0.0
        %2781 = vmatpush1.msra.mxu0 0.0
        %2782 = vmatprep.subr.mxu0 0.0
        %2783 = vmatpush1.msra.mxu0 0.0
        %2784 = vmatprep.subr.mxu0 0.0
        %2785 = vmatpush1.msra.mxu0 0.0
        %2786 = vmatprep.subr.mxu0 0.0
        %2787 = vmatpush1.msra.mxu0 0.0
        %2788 = vmatprep.subr.mxu0 0.0
        %2789 = vmatpush1.msra.mxu0 0.0
        %2790 = vmatprep.subr.mxu0 0.0
        %2791 = vmatpush1.msra.mxu0 0.0
        %2792 = vmatprep.subr.mxu0 0.0
        %2793 = vmatpush1.msra.mxu0 0.0
        %2794 = vmatprep.subr.mxu0 0.0
        %2795 = vmatpush1.msra.mxu0 0.0
        %2796 = vmatprep.subr.mxu0 0.0
        %2797 = vmatpush1.msra.mxu0 0.0
        %2798 = vmatprep.subr.mxu0 0.0
        %2799 = vmatpush1.msra.mxu0 0.0
        %2800 = vmatprep.subr.mxu0 0.0
        %2801 = vmatpush1.msra.mxu0 0.0
        %2802 = vmatprep.subr.mxu0 0.0
        %2803 = vmatpush1.msra.mxu0 0.0
        %2804 = vmatprep.subr.mxu0 0.0
        %2805 = vmatpush1.msra.mxu0 0.0
        %2806 = vmatprep.subr.mxu0 0.0
        %2807 = vmatpush1.msra.mxu0 0.0
        %2808 = vmatprep.subr.mxu0 0.0
        %2809 = vmatpush1.msra.mxu0 0.0
        %2810 = vmatprep.subr.mxu0 0.0
        %2811 = vmatpush1.msra.mxu0 0.0
        %2812 = vmatprep.subr.mxu0 0.0
        %2813 = vmatpush1.msra.mxu0 0.0
        %2814 = vmatprep.mubr.f32.mxu0 0.0
        %2815 = vmatmul.mubr.f32.gmra.mrb[0].mxu0 %v2703
        %v2816 = vpop.f32.mrb[0].mxu0
        %v2817 = vadd.f32 %v2624, %v2816
        %v2818 = vpop.f32.mrb[0].mxu0
        %2819 = vmatprep.mubr.f32.mxu0 0.0
        %2820 = vmatmul.mubr.f32.gmra.mrb[0].mxu0 %v2706
        %v2821 = vpop.f32.mrb[0].mxu0
        %v2822 = vadd.f32 %v2629, %v2821
        %v2823 = vpop.f32.mrb[0].mxu0
        %2824 = vmatprep.mubr.f32.mxu0 0.0
        %2825 = vmatmul.mubr.f32.gmra.mrb[0].mxu0 %v2709
        %v2826 = vpop.f32.mrb[0].mxu0
        %v2827 = vadd.f32 %v2634, %v2826
        %v2828 = vpop.f32.mrb[0].mxu0
        %2829 = vmatprep.mubr.f32.mxu0 0.0
        %2830 = vmatmul.mubr.f32.gmra.mrb[0].mxu0 %v2712
        %v2831 = vpop.f32.mrb[0].mxu0
        %v2832 = vadd.f32 %v2639, %v2831
        %v2833 = vpop.f32.mrb[0].mxu0
        %2834 = vmatprep.mubr.f32.mxu0 0.0
        %2835 = vmatmul.mubr.f32.gmra.mrb[0].mxu0 %v2715
        %v2836 = vpop.f32.mrb[0].mxu0
        %v2837 = vadd.f32 %v2644, %v2836
        %v2838 = vpop.f32.mrb[0].mxu0
        %2839 = vmatprep.mubr.f32.mxu0 0.0
        %2840 = vmatmul.mubr.f32.gmra.mrb[0].mxu0 %v2718
        %v2841 = vpop.f32.mrb[0].mxu0
        %v2842 = vadd.f32 %v2649, %v2841
        %v2843 = vpop.f32.mrb[0].mxu0
        %2844 = vmatprep.mubr.f32.mxu0 0.0
        %2845 = vmatmul.mubr.f32.gmra.mrb[0].mxu0 %v2721
        %v2846 = vpop.f32.mrb[0].mxu0
        %v2847 = vadd.f32 %v2654, %v2846
        %v2848 = vpop.f32.mrb[0].mxu0
        %2849 = vmatprep.mubr.f32.mxu0 0.0
        %2850 = vmatmul.mubr.f32.gmra.mrb[0].mxu0 %v2724
        %v2851 = vpop.f32.mrb[0].mxu0
        %v2852 = vadd.f32 %v2659, %v2851
        %v2853 = vpop.f32.mrb[0].mxu0
        %2854 = vmatprep.mubr.f32.mxu0 0.0
        %2855 = vmatmul.mubr.f32.gmra.mrb[0].mxu0 %v2727
        %v2856 = vpop.f32.mrb[0].mxu0
        %v2857 = vadd.f32 %v2664, %v2856
        %v2858 = vpop.f32.mrb[0].mxu0
        %2859 = vmatprep.mubr.f32.mxu0 0.0
        %2860 = vmatmul.mubr.f32.gmra.mrb[0].mxu0 %v2730
        %v2861 = vpop.f32.mrb[0].mxu0
        %v2862 = vadd.f32 %v2669, %v2861
        %v2863 = vpop.f32.mrb[0].mxu0
        %2864 = vmatprep.mubr.f32.mxu0 0.0
        %2865 = vmatmul.mubr.f32.gmra.mrb[0].mxu0 %v2733
        %v2866 = vpop.f32.mrb[0].mxu0
        %v2867 = vadd.f32 %v2674, %v2866
        %v2868 = vpop.f32.mrb[0].mxu0
        %2869 = vmatprep.mubr.f32.mxu0 0.0
        %2870 = vmatmul.mubr.f32.gmra.mrb[0].mxu0 %v2736
        %v2871 = vpop.f32.mrb[0].mxu0
        %v2872 = vadd.f32 %v2679, %v2871
        %v2873 = vpop.f32.mrb[0].mxu0
        %2874 = vmatprep.mubr.f32.mxu0 0.0
        %2875 = vmatmul.mubr.f32.gmra.mrb[0].mxu0 %v2739
        %v2876 = vpop.f32.mrb[0].mxu0
        %v2877 = vadd.f32 %v2684, %v2876
        %v2878 = vpop.f32.mrb[0].mxu0
        %2879 = vmatprep.mubr.f32.mxu0 0.0
        %2880 = vmatmul.mubr.f32.gmra.mrb[0].mxu0 %v2742
        %v2881 = vpop.f32.mrb[0].mxu0
        %v2882 = vadd.f32 %v2689, %v2881
        %v2883 = vpop.f32.mrb[0].mxu0
        %2884 = vmatprep.mubr.f32.mxu0 0.0
        %2885 = vmatmul.mubr.f32.gmra.mrb[0].mxu0 %v2745
        %v2886 = vpop.f32.mrb[0].mxu0
        %v2887 = vadd.f32 %v2694, %v2886
        %v2888 = vpop.f32.mrb[0].mxu0
        %2889 = vmatprep.mubr.f32.mxu0 0.0
        %2890 = vmatmul.mubr.f32.gmra.mrb[0].mxu0 %v2748
        %v2891 = vpop.f32.mrb[0].mxu0
        %v2892 = vadd.f32 %v2699, %v2891
        %v2893 = vpop.f32.mrb[0].mxu0
        %2894 = vdwg.mxu0
        %v2895 = vld [vmem:[#allocation2 + $0x2] sm:$0xff]
        %v2896 = vld [vmem:[#allocation2 + $0xa] sm:$0xff]
        %v2897 = vld [vmem:[#allocation2 + $0x1a] sm:$0xff]
        %v2898 = vld [vmem:[#allocation2 + $0x22] sm:$0xff]
        %v2899 = vld [vmem:[#allocation2 + $0x32] sm:$0xff]
        %v2900 = vld [vmem:[#allocation2 + $0x3a] sm:$0xff]
        %v2901 = vld [vmem:[#allocation2 + $0x4a] sm:$0xff]
        %v2902 = vld [vmem:[#allocation2 + $0x52] sm:$0xff]
        %v2903 = vld [vmem:[#allocation2 + $0x62] sm:$0xff]
        %v2904 = vld [vmem:[#allocation2 + $0x6a] sm:$0xff]
        %v2905 = vld [vmem:[#allocation2 + $0x7a] sm:$0xff]
        %v2906 = vld [vmem:[#allocation2 + $0x82] sm:$0xff]
        %v2907 = vld [vmem:[#allocation2 + $0x92] sm:$0xff]
        %v2908 = vld [vmem:[#allocation2 + $0x9a] sm:$0xff]
        %v2909 = vld [vmem:[#allocation2 + $0xaa] sm:$0xff]
        %v2910 = vld [vmem:[#allocation2 + $0xb2] sm:$0xff]
        %s2911 = scalar_lea.vmem %s4, 128
        %v2912 = vld [vmem:[%s2911] sm:$0xff]
        %v2913 = vld [vmem:[%s2911 + $0x8] sm:$0xff]
        %v2914 = vld [vmem:[%s2911 + $0x10] sm:$0xff]
        %v2915 = vld [vmem:[%s2911 + $0x18] sm:$0xff]
        %v2916 = vld [vmem:[%s2911 + $0x20] sm:$0xff]
        %v2917 = vld [vmem:[%s2911 + $0x28] sm:$0xff]
        %v2918 = vld [vmem:[%s2911 + $0x30] sm:$0xff]
        %v2919 = vld [vmem:[%s2911 + $0x38] sm:$0xff]
        %v2921 = vsel %vm471, %v2895, 0
        %v2924 = vsel %vm471, %v2896, 0
        %v2927 = vsel %vm471, %v2897, 0
        %v2930 = vsel %vm471, %v2898, 0
        %v2933 = vsel %vm471, %v2899, 0
        %v2936 = vsel %vm471, %v2900, 0
        %v2939 = vsel %vm471, %v2901, 0
        %v2942 = vsel %vm471, %v2902, 0
        %v2945 = vsel %vm471, %v2903, 0
        %v2948 = vsel %vm471, %v2904, 0
        %v2951 = vsel %vm471, %v2905, 0
        %v2954 = vsel %vm471, %v2906, 0
        %v2957 = vsel %vm471, %v2907, 0
        %v2960 = vsel %vm471, %v2908, 0
        %v2963 = vsel %vm471, %v2909, 0
        %v2966 = vsel %vm471, %v2910, 0
        %2968 = vmatprep.subr.mxu0 0.0
        %2969 = vmatpush1.msra.mxu0 %v2912
        %2970 = vmatprep.subr.mxu0 0.0
        %2971 = vmatpush1.msra.mxu0 %v2913
        %2972 = vmatprep.subr.mxu0 0.0
        %2973 = vmatpush1.msra.mxu0 %v2914
        %2974 = vmatprep.subr.mxu0 0.0
        %2975 = vmatpush1.msra.mxu0 %v2915
        %2976 = vmatprep.subr.mxu0 0.0
        %2977 = vmatpush1.msra.mxu0 %v2916
        %2978 = vmatprep.subr.mxu0 0.0
        %2979 = vmatpush1.msra.mxu0 %v2917
        %2980 = vmatprep.subr.mxu0 0.0
        %2981 = vmatpush1.msra.mxu0 %v2918
        %2982 = vmatprep.subr.mxu0 0.0
        %2983 = vmatpush1.msra.mxu0 %v2919
        %2984 = vmatprep.subr.mxu0 0.0
        %2985 = vmatpush1.msra.mxu0 0.0
        %2986 = vmatprep.subr.mxu0 0.0
        %2987 = vmatpush1.msra.mxu0 0.0
        %2988 = vmatprep.subr.mxu0 0.0
        %2989 = vmatpush1.msra.mxu0 0.0
        %2990 = vmatprep.subr.mxu0 0.0
        %2991 = vmatpush1.msra.mxu0 0.0
        %2992 = vmatprep.subr.mxu0 0.0
        %2993 = vmatpush1.msra.mxu0 0.0
        %2994 = vmatprep.subr.mxu0 0.0
        %2995 = vmatpush1.msra.mxu0 0.0
        %2996 = vmatprep.subr.mxu0 0.0
        %2997 = vmatpush1.msra.mxu0 0.0
        %2998 = vmatprep.subr.mxu0 0.0
        %2999 = vmatpush1.msra.mxu0 0.0
        %3000 = vmatprep.subr.mxu0 0.0
        %3001 = vmatpush1.msra.mxu0 0.0
        %3002 = vmatprep.subr.mxu0 0.0
        %3003 = vmatpush1.msra.mxu0 0.0
        %3004 = vmatprep.subr.mxu0 0.0
        %3005 = vmatpush1.msra.mxu0 0.0
        %3006 = vmatprep.subr.mxu0 0.0
        %3007 = vmatpush1.msra.mxu0 0.0
        %3008 = vmatprep.subr.mxu0 0.0
        %3009 = vmatpush1.msra.mxu0 0.0
        %3010 = vmatprep.subr.mxu0 0.0
        %3011 = vmatpush1.msra.mxu0 0.0
        %3012 = vmatprep.subr.mxu0 0.0
        %3013 = vmatpush1.msra.mxu0 0.0
        %3014 = vmatprep.subr.mxu0 0.0
        %3015 = vmatpush1.msra.mxu0 0.0
        %3016 = vmatprep.subr.mxu0 0.0
        %3017 = vmatpush1.msra.mxu0 0.0
        %3018 = vmatprep.subr.mxu0 0.0
        %3019 = vmatpush1.msra.mxu0 0.0
        %3020 = vmatprep.subr.mxu0 0.0
        %3021 = vmatpush1.msra.mxu0 0.0
        %3022 = vmatprep.subr.mxu0 0.0
        %3023 = vmatpush1.msra.mxu0 0.0
        %3024 = vmatprep.subr.mxu0 0.0
        %3025 = vmatpush1.msra.mxu0 0.0
        %3026 = vmatprep.subr.mxu0 0.0
        %3027 = vmatpush1.msra.mxu0 0.0
        %3028 = vmatprep.subr.mxu0 0.0
        %3029 = vmatpush1.msra.mxu0 0.0
        %3030 = vmatprep.subr.mxu0 0.0
        %3031 = vmatpush1.msra.mxu0 0.0
        %3032 = vmatprep.mubr.f32.mxu0 0.0
        %3033 = vmatmul.mubr.f32.gmra.mrb[0].mxu0 %v2921
        %v3034 = vpop.f32.mrb[0].mxu0
        %v3035 = vadd.f32 0.0, %v3034
        %v3036 = vpop.f32.mrb[0].mxu0
        %3037 = vmatprep.mubr.f32.mxu0 0.0
        %3038 = vmatmul.mubr.f32.gmra.mrb[0].mxu0 %v2924
        %v3039 = vpop.f32.mrb[0].mxu0
        %v3040 = vadd.f32 0.0, %v3039
        %v3041 = vpop.f32.mrb[0].mxu0
        %3042 = vmatprep.mubr.f32.mxu0 0.0
        %3043 = vmatmul.mubr.f32.gmra.mrb[0].mxu0 %v2927
        %v3044 = vpop.f32.mrb[0].mxu0
        %v3045 = vadd.f32 0.0, %v3044
        %v3046 = vpop.f32.mrb[0].mxu0
        %3047 = vmatprep.mubr.f32.mxu0 0.0
        %3048 = vmatmul.mubr.f32.gmra.mrb[0].mxu0 %v2930
        %v3049 = vpop.f32.mrb[0].mxu0
        %v3050 = vadd.f32 0.0, %v3049
        %v3051 = vpop.f32.mrb[0].mxu0
        %3052 = vmatprep.mubr.f32.mxu0 0.0
        %3053 = vmatmul.mubr.f32.gmra.mrb[0].mxu0 %v2933
        %v3054 = vpop.f32.mrb[0].mxu0
        %v3055 = vadd.f32 0.0, %v3054
        %v3056 = vpop.f32.mrb[0].mxu0
        %3057 = vmatprep.mubr.f32.mxu0 0.0
        %3058 = vmatmul.mubr.f32.gmra.mrb[0].mxu0 %v2936
        %v3059 = vpop.f32.mrb[0].mxu0
        %v3060 = vadd.f32 0.0, %v3059
        %v3061 = vpop.f32.mrb[0].mxu0
        %3062 = vmatprep.mubr.f32.mxu0 0.0
        %3063 = vmatmul.mubr.f32.gmra.mrb[0].mxu0 %v2939
        %v3064 = vpop.f32.mrb[0].mxu0
        %v3065 = vadd.f32 0.0, %v3064
        %v3066 = vpop.f32.mrb[0].mxu0
        %3067 = vmatprep.mubr.f32.mxu0 0.0
        %3068 = vmatmul.mubr.f32.gmra.mrb[0].mxu0 %v2942
        %v3069 = vpop.f32.mrb[0].mxu0
        %v3070 = vadd.f32 0.0, %v3069
        %v3071 = vpop.f32.mrb[0].mxu0
        %3072 = vmatprep.mubr.f32.mxu0 0.0
        %3073 = vmatmul.mubr.f32.gmra.mrb[0].mxu0 %v2945
        %v3074 = vpop.f32.mrb[0].mxu0
        %v3075 = vadd.f32 0.0, %v3074
        %v3076 = vpop.f32.mrb[0].mxu0
        %3077 = vmatprep.mubr.f32.mxu0 0.0
        %3078 = vmatmul.mubr.f32.gmra.mrb[0].mxu0 %v2948
        %v3079 = vpop.f32.mrb[0].mxu0
        %v3080 = vadd.f32 0.0, %v3079
        %v3081 = vpop.f32.mrb[0].mxu0
        %3082 = vmatprep.mubr.f32.mxu0 0.0
        %3083 = vmatmul.mubr.f32.gmra.mrb[0].mxu0 %v2951
        %v3084 = vpop.f32.mrb[0].mxu0
        %v3085 = vadd.f32 0.0, %v3084
        %v3086 = vpop.f32.mrb[0].mxu0
        %3087 = vmatprep.mubr.f32.mxu0 0.0
        %3088 = vmatmul.mubr.f32.gmra.mrb[0].mxu0 %v2954
        %v3089 = vpop.f32.mrb[0].mxu0
        %v3090 = vadd.f32 0.0, %v3089
        %v3091 = vpop.f32.mrb[0].mxu0
        %3092 = vmatprep.mubr.f32.mxu0 0.0
        %3093 = vmatmul.mubr.f32.gmra.mrb[0].mxu0 %v2957
        %v3094 = vpop.f32.mrb[0].mxu0
        %v3095 = vadd.f32 0.0, %v3094
        %v3096 = vpop.f32.mrb[0].mxu0
        %3097 = vmatprep.mubr.f32.mxu0 0.0
        %3098 = vmatmul.mubr.f32.gmra.mrb[0].mxu0 %v2960
        %v3099 = vpop.f32.mrb[0].mxu0
        %v3100 = vadd.f32 0.0, %v3099
        %v3101 = vpop.f32.mrb[0].mxu0
        %3102 = vmatprep.mubr.f32.mxu0 0.0
        %3103 = vmatmul.mubr.f32.gmra.mrb[0].mxu0 %v2963
        %v3104 = vpop.f32.mrb[0].mxu0
        %v3105 = vadd.f32 0.0, %v3104
        %v3106 = vpop.f32.mrb[0].mxu0
        %3107 = vmatprep.mubr.f32.mxu0 0.0
        %3108 = vmatmul.mubr.f32.gmra.mrb[0].mxu0 %v2966
        %v3109 = vpop.f32.mrb[0].mxu0
        %v3110 = vadd.f32 0.0, %v3109
        %v3111 = vpop.f32.mrb[0].mxu0
        %3112 = vdwg.mxu0
        %v3113 = vadd.f32 %v2817, %v3035
        %v3114 = vadd.f32 %v2822, %v3040
        %v3115 = vadd.f32 %v2827, %v3045
        %v3116 = vadd.f32 %v2832, %v3050
        %v3117 = vadd.f32 %v2837, %v3055
        %v3118 = vadd.f32 %v2842, %v3060
        %v3119 = vadd.f32 %v2847, %v3065
        %v3120 = vadd.f32 %v2852, %v3070
        %v3121 = vadd.f32 %v2857, %v3075
        %v3122 = vadd.f32 %v2862, %v3080
        %v3123 = vadd.f32 %v2867, %v3085
        %v3124 = vadd.f32 %v2872, %v3090
        %v3125 = vadd.f32 %v2877, %v3095
        %v3126 = vadd.f32 %v2882, %v3100
        %v3127 = vadd.f32 %v2887, %v3105
        %v3128 = vadd.f32 %v2892, %v3110
        %s3129 = scalar_lea.vmem [#allocation2], 24
        %v3130 = vld [vmem:[%s3129] sm:$0xff]
        %v3131 = vld [vmem:[%s3129 + $0x8] sm:$0xff]
        %v3132 = vld [vmem:[%s3129 + $0x18] sm:$0xff]
        %v3133 = vld [vmem:[%s3129 + $0x20] sm:$0xff]
        %v3134 = vld [vmem:[%s3129 + $0x30] sm:$0xff]
        %v3135 = vld [vmem:[%s3129 + $0x38] sm:$0xff]
        %v3136 = vld [vmem:[%s3129 + $0x48] sm:$0xff]
        %v3137 = vld [vmem:[%s3129 + $0x50] sm:$0xff]
        %v3138 = vld [vmem:[%s3129 + $0x60] sm:$0xff]
        %v3139 = vld [vmem:[%s3129 + $0x68] sm:$0xff]
        %v3140 = vld [vmem:[%s3129 + $0x78] sm:$0xff]
        %v3141 = vld [vmem:[%s3129 + $0x80] sm:$0xff]
        %v3142 = vld [vmem:[%s3129 + $0x90] sm:$0xff]
        %v3143 = vld [vmem:[%s3129 + $0x98] sm:$0xff]
        %v3144 = vld [vmem:[%s3129 + $0xa8] sm:$0xff]
        %v3145 = vld [vmem:[%s3129 + $0xb0] sm:$0xff]
        %s3146 = scalar_lea.vmem %s4, 192
        %v3147 = vld [vmem:[%s3146] sm:$0xff]
        %v3148 = vld [vmem:[%s3146 + $0x8] sm:$0xff]
        %v3149 = vld [vmem:[%s3146 + $0x10] sm:$0xff]
        %v3150 = vld [vmem:[%s3146 + $0x18] sm:$0xff]
        %v3151 = vld [vmem:[%s3146 + $0x20] sm:$0xff]
        %v3152 = vld [vmem:[%s3146 + $0x28] sm:$0xff]
        %v3153 = vld [vmem:[%s3146 + $0x30] sm:$0xff]
        %v3154 = vld [vmem:[%s3146 + $0x38] sm:$0xff]
        %v3156 = vsel %vm471, %v3130, 0
        %v3159 = vsel %vm471, %v3131, 0
        %v3162 = vsel %vm471, %v3132, 0
        %v3165 = vsel %vm471, %v3133, 0
        %v3168 = vsel %vm471, %v3134, 0
        %v3171 = vsel %vm471, %v3135, 0
        %v3174 = vsel %vm471, %v3136, 0
        %v3177 = vsel %vm471, %v3137, 0
        %v3180 = vsel %vm471, %v3138, 0
        %v3183 = vsel %vm471, %v3139, 0
        %v3186 = vsel %vm471, %v3140, 0
        %v3189 = vsel %vm471, %v3141, 0
        %v3192 = vsel %vm471, %v3142, 0
        %v3195 = vsel %vm471, %v3143, 0
        %v3198 = vsel %vm471, %v3144, 0
        %v3201 = vsel %vm471, %v3145, 0
        %3203 = vmatprep.subr.mxu0 0.0
        %3204 = vmatpush1.msra.mxu0 %v3147
        %3205 = vmatprep.subr.mxu0 0.0
        %3206 = vmatpush1.msra.mxu0 %v3148
        %3207 = vmatprep.subr.mxu0 0.0
        %3208 = vmatpush1.msra.mxu0 %v3149
        %3209 = vmatprep.subr.mxu0 0.0
        %3210 = vmatpush1.msra.mxu0 %v3150
        %3211 = vmatprep.subr.mxu0 0.0
        %3212 = vmatpush1.msra.mxu0 %v3151
        %3213 = vmatprep.subr.mxu0 0.0
        %3214 = vmatpush1.msra.mxu0 %v3152
        %3215 = vmatprep.subr.mxu0 0.0
        %3216 = vmatpush1.msra.mxu0 %v3153
        %3217 = vmatprep.subr.mxu0 0.0
        %3218 = vmatpush1.msra.mxu0 %v3154
        %3219 = vmatprep.subr.mxu0 0.0
        %3220 = vmatpush1.msra.mxu0 0.0
        %3221 = vmatprep.subr.mxu0 0.0
        %3222 = vmatpush1.msra.mxu0 0.0
        %3223 = vmatprep.subr.mxu0 0.0
        %3224 = vmatpush1.msra.mxu0 0.0
        %3225 = vmatprep.subr.mxu0 0.0
        %3226 = vmatpush1.msra.mxu0 0.0
        %3227 = vmatprep.subr.mxu0 0.0
        %3228 = vmatpush1.msra.mxu0 0.0
        %3229 = vmatprep.subr.mxu0 0.0
        %3230 = vmatpush1.msra.mxu0 0.0
        %3231 = vmatprep.subr.mxu0 0.0
        %3232 = vmatpush1.msra.mxu0 0.0
        %3233 = vmatprep.subr.mxu0 0.0
        %3234 = vmatpush1.msra.mxu0 0.0
        %3235 = vmatprep.subr.mxu0 0.0
        %3236 = vmatpush1.msra.mxu0 0.0
        %3237 = vmatprep.subr.mxu0 0.0
        %3238 = vmatpush1.msra.mxu0 0.0
        %3239 = vmatprep.subr.mxu0 0.0
        %3240 = vmatpush1.msra.mxu0 0.0
        %3241 = vmatprep.subr.mxu0 0.0
        %3242 = vmatpush1.msra.mxu0 0.0
        %3243 = vmatprep.subr.mxu0 0.0
        %3244 = vmatpush1.msra.mxu0 0.0
        %3245 = vmatprep.subr.mxu0 0.0
        %3246 = vmatpush1.msra.mxu0 0.0
        %3247 = vmatprep.subr.mxu0 0.0
        %3248 = vmatpush1.msra.mxu0 0.0
        %3249 = vmatprep.subr.mxu0 0.0
        %3250 = vmatpush1.msra.mxu0 0.0
        %3251 = vmatprep.subr.mxu0 0.0
        %3252 = vmatpush1.msra.mxu0 0.0
        %3253 = vmatprep.subr.mxu0 0.0
        %3254 = vmatpush1.msra.mxu0 0.0
        %3255 = vmatprep.subr.mxu0 0.0
        %3256 = vmatpush1.msra.mxu0 0.0
        %3257 = vmatprep.subr.mxu0 0.0
        %3258 = vmatpush1.msra.mxu0 0.0
        %3259 = vmatprep.subr.mxu0 0.0
        %3260 = vmatpush1.msra.mxu0 0.0
        %3261 = vmatprep.subr.mxu0 0.0
        %3262 = vmatpush1.msra.mxu0 0.0
        %3263 = vmatprep.subr.mxu0 0.0
        %3264 = vmatpush1.msra.mxu0 0.0
        %3265 = vmatprep.subr.mxu0 0.0
        %3266 = vmatpush1.msra.mxu0 0.0
        %3267 = vmatprep.mubr.f32.mxu0 0.0
        %3268 = vmatmul.mubr.f32.gmra.mrb[0].mxu0 %v3156
        %v3269 = vpop.f32.mrb[0].mxu0
        %v3270 = vadd.f32 0.0, %v3269
        %v3271 = vpop.f32.mrb[0].mxu0
        %3272 = vmatprep.mubr.f32.mxu0 0.0
        %3273 = vmatmul.mubr.f32.gmra.mrb[0].mxu0 %v3159
        %v3274 = vpop.f32.mrb[0].mxu0
        %v3275 = vadd.f32 0.0, %v3274
        %v3276 = vpop.f32.mrb[0].mxu0
        %3277 = vmatprep.mubr.f32.mxu0 0.0
        %3278 = vmatmul.mubr.f32.gmra.mrb[0].mxu0 %v3162
        %v3279 = vpop.f32.mrb[0].mxu0
        %v3280 = vadd.f32 0.0, %v3279
        %v3281 = vpop.f32.mrb[0].mxu0
        %3282 = vmatprep.mubr.f32.mxu0 0.0
        %3283 = vmatmul.mubr.f32.gmra.mrb[0].mxu0 %v3165
        %v3284 = vpop.f32.mrb[0].mxu0
        %v3285 = vadd.f32 0.0, %v3284
        %v3286 = vpop.f32.mrb[0].mxu0
        %3287 = vmatprep.mubr.f32.mxu0 0.0
        %3288 = vmatmul.mubr.f32.gmra.mrb[0].mxu0 %v3168
        %v3289 = vpop.f32.mrb[0].mxu0
        %v3290 = vadd.f32 0.0, %v3289
        %v3291 = vpop.f32.mrb[0].mxu0
        %3292 = vmatprep.mubr.f32.mxu0 0.0
        %3293 = vmatmul.mubr.f32.gmra.mrb[0].mxu0 %v3171
        %v3294 = vpop.f32.mrb[0].mxu0
        %v3295 = vadd.f32 0.0, %v3294
        %v3296 = vpop.f32.mrb[0].mxu0
        %3297 = vmatprep.mubr.f32.mxu0 0.0
        %3298 = vmatmul.mubr.f32.gmra.mrb[0].mxu0 %v3174
        %v3299 = vpop.f32.mrb[0].mxu0
        %v3300 = vadd.f32 0.0, %v3299
        %v3301 = vpop.f32.mrb[0].mxu0
        %3302 = vmatprep.mubr.f32.mxu0 0.0
        %3303 = vmatmul.mubr.f32.gmra.mrb[0].mxu0 %v3177
        %v3304 = vpop.f32.mrb[0].mxu0
        %v3305 = vadd.f32 0.0, %v3304
        %v3306 = vpop.f32.mrb[0].mxu0
        %3307 = vmatprep.mubr.f32.mxu0 0.0
        %3308 = vmatmul.mubr.f32.gmra.mrb[0].mxu0 %v3180
        %v3309 = vpop.f32.mrb[0].mxu0
        %v3310 = vadd.f32 0.0, %v3309
        %v3311 = vpop.f32.mrb[0].mxu0
        %3312 = vmatprep.mubr.f32.mxu0 0.0
        %3313 = vmatmul.mubr.f32.gmra.mrb[0].mxu0 %v3183
        %v3314 = vpop.f32.mrb[0].mxu0
        %v3315 = vadd.f32 0.0, %v3314
        %v3316 = vpop.f32.mrb[0].mxu0
        %3317 = vmatprep.mubr.f32.mxu0 0.0
        %3318 = vmatmul.mubr.f32.gmra.mrb[0].mxu0 %v3186
        %v3319 = vpop.f32.mrb[0].mxu0
        %v3320 = vadd.f32 0.0, %v3319
        %v3321 = vpop.f32.mrb[0].mxu0
        %3322 = vmatprep.mubr.f32.mxu0 0.0
        %3323 = vmatmul.mubr.f32.gmra.mrb[0].mxu0 %v3189
        %v3324 = vpop.f32.mrb[0].mxu0
        %v3325 = vadd.f32 0.0, %v3324
        %v3326 = vpop.f32.mrb[0].mxu0
        %3327 = vmatprep.mubr.f32.mxu0 0.0
        %3328 = vmatmul.mubr.f32.gmra.mrb[0].mxu0 %v3192
        %v3329 = vpop.f32.mrb[0].mxu0
        %v3330 = vadd.f32 0.0, %v3329
        %v3331 = vpop.f32.mrb[0].mxu0
        %3332 = vmatprep.mubr.f32.mxu0 0.0
        %3333 = vmatmul.mubr.f32.gmra.mrb[0].mxu0 %v3195
        %v3334 = vpop.f32.mrb[0].mxu0
        %v3335 = vadd.f32 0.0, %v3334
        %v3336 = vpop.f32.mrb[0].mxu0
        %3337 = vmatprep.mubr.f32.mxu0 0.0
        %3338 = vmatmul.mubr.f32.gmra.mrb[0].mxu0 %v3198
        %v3339 = vpop.f32.mrb[0].mxu0
        %v3340 = vadd.f32 0.0, %v3339
        %v3341 = vpop.f32.mrb[0].mxu0
        %3342 = vmatprep.mubr.f32.mxu0 0.0
        %3343 = vmatmul.mubr.f32.gmra.mrb[0].mxu0 %v3201
        %v3344 = vpop.f32.mrb[0].mxu0
        %v3345 = vadd.f32 0.0, %v3344
        %v3346 = vpop.f32.mrb[0].mxu0
        %3347 = vdwg.mxu0
        %v3348 = vadd.f32 %v3113, %v3270
        %v3349 = vadd.f32 %v3114, %v3275
        %v3350 = vadd.f32 %v3115, %v3280
        %v3351 = vadd.f32 %v3116, %v3285
        %v3352 = vadd.f32 %v3117, %v3290
        %v3353 = vadd.f32 %v3118, %v3295
        %v3354 = vadd.f32 %v3119, %v3300
        %v3355 = vadd.f32 %v3120, %v3305
        %v3356 = vadd.f32 %v3121, %v3310
        %v3357 = vadd.f32 %v3122, %v3315
        %v3358 = vadd.f32 %v3123, %v3320
        %v3359 = vadd.f32 %v3124, %v3325
        %v3360 = vadd.f32 %v3125, %v3330
        %v3361 = vadd.f32 %v3126, %v3335
        %v3362 = vadd.f32 %v3127, %v3340
        %v3363 = vadd.f32 %v3128, %v3345
        %v3364 = vld [vmem:[%s3129 + $0x1] sm:$0xff]
        %v3365 = vld [vmem:[%s3129 + $0x9] sm:$0xff]
        %v3366 = vld [vmem:[%s3129 + $0x19] sm:$0xff]
        %v3367 = vld [vmem:[%s3129 + $0x21] sm:$0xff]
        %v3368 = vld [vmem:[%s3129 + $0x31] sm:$0xff]
        %v3369 = vld [vmem:[%s3129 + $0x39] sm:$0xff]
        %v3370 = vld [vmem:[%s3129 + $0x49] sm:$0xff]
        %v3371 = vld [vmem:[%s3129 + $0x51] sm:$0xff]
        %v3372 = vld [vmem:[%s3129 + $0x61] sm:$0xff]
        %v3373 = vld [vmem:[%s3129 + $0x69] sm:$0xff]
        %v3374 = vld [vmem:[%s3129 + $0x79] sm:$0xff]
        %v3375 = vld [vmem:[%s3129 + $0x81] sm:$0xff]
        %v3376 = vld [vmem:[%s3129 + $0x91] sm:$0xff]
        %v3377 = vld [vmem:[%s3129 + $0x99] sm:$0xff]
        %v3378 = vld [vmem:[%s3129 + $0xa9] sm:$0xff]
        %v3379 = vld [vmem:[%s3129 + $0xb1] sm:$0xff]
        %s3380 = scalar_lea.vmem %s4, 256
        %v3381 = vld [vmem:[%s3380] sm:$0xff]
        %v3382 = vld [vmem:[%s3380 + $0x8] sm:$0xff]
        %v3383 = vld [vmem:[%s3380 + $0x10] sm:$0xff]
        %v3384 = vld [vmem:[%s3380 + $0x18] sm:$0xff]
        %v3385 = vld [vmem:[%s3380 + $0x20] sm:$0xff]
        %v3386 = vld [vmem:[%s3380 + $0x28] sm:$0xff]
        %v3387 = vld [vmem:[%s3380 + $0x30] sm:$0xff]
        %v3388 = vld [vmem:[%s3380 + $0x38] sm:$0xff]
        %v3390 = vsel %vm471, %v3364, 0
        %v3393 = vsel %vm471, %v3365, 0
        %v3396 = vsel %vm471, %v3366, 0
        %v3399 = vsel %vm471, %v3367, 0
        %v3402 = vsel %vm471, %v3368, 0
        %v3405 = vsel %vm471, %v3369, 0
        %v3408 = vsel %vm471, %v3370, 0
        %v3411 = vsel %vm471, %v3371, 0
        %v3414 = vsel %vm471, %v3372, 0
        %v3417 = vsel %vm471, %v3373, 0
        %v3420 = vsel %vm471, %v3374, 0
        %v3423 = vsel %vm471, %v3375, 0
        %v3426 = vsel %vm471, %v3376, 0
        %v3429 = vsel %vm471, %v3377, 0
        %v3432 = vsel %vm471, %v3378, 0
        %v3435 = vsel %vm471, %v3379, 0
        %3437 = vmatprep.subr.mxu0 0.0
        %3438 = vmatpush1.msra.mxu0 %v3381
        %3439 = vmatprep.subr.mxu0 0.0
        %3440 = vmatpush1.msra.mxu0 %v3382
        %3441 = vmatprep.subr.mxu0 0.0
        %3442 = vmatpush1.msra.mxu0 %v3383
        %3443 = vmatprep.subr.mxu0 0.0
        %3444 = vmatpush1.msra.mxu0 %v3384
        %3445 = vmatprep.subr.mxu0 0.0
        %3446 = vmatpush1.msra.mxu0 %v3385
        %3447 = vmatprep.subr.mxu0 0.0
        %3448 = vmatpush1.msra.mxu0 %v3386
        %3449 = vmatprep.subr.mxu0 0.0
        %3450 = vmatpush1.msra.mxu0 %v3387
        %3451 = vmatprep.subr.mxu0 0.0
        %3452 = vmatpush1.msra.mxu0 %v3388
        %3453 = vmatprep.subr.mxu0 0.0
        %3454 = vmatpush1.msra.mxu0 0.0
        %3455 = vmatprep.subr.mxu0 0.0
        %3456 = vmatpush1.msra.mxu0 0.0
        %3457 = vmatprep.subr.mxu0 0.0
        %3458 = vmatpush1.msra.mxu0 0.0
        %3459 = vmatprep.subr.mxu0 0.0
        %3460 = vmatpush1.msra.mxu0 0.0
        %3461 = vmatprep.subr.mxu0 0.0
        %3462 = vmatpush1.msra.mxu0 0.0
        %3463 = vmatprep.subr.mxu0 0.0
        %3464 = vmatpush1.msra.mxu0 0.0
        %3465 = vmatprep.subr.mxu0 0.0
        %3466 = vmatpush1.msra.mxu0 0.0
        %3467 = vmatprep.subr.mxu0 0.0
        %3468 = vmatpush1.msra.mxu0 0.0
        %3469 = vmatprep.subr.mxu0 0.0
        %3470 = vmatpush1.msra.mxu0 0.0
        %3471 = vmatprep.subr.mxu0 0.0
        %3472 = vmatpush1.msra.mxu0 0.0
        %3473 = vmatprep.subr.mxu0 0.0
        %3474 = vmatpush1.msra.mxu0 0.0
        %3475 = vmatprep.subr.mxu0 0.0
        %3476 = vmatpush1.msra.mxu0 0.0
        %3477 = vmatprep.subr.mxu0 0.0
        %3478 = vmatpush1.msra.mxu0 0.0
        %3479 = vmatprep.subr.mxu0 0.0
        %3480 = vmatpush1.msra.mxu0 0.0
        %3481 = vmatprep.subr.mxu0 0.0
        %3482 = vmatpush1.msra.mxu0 0.0
        %3483 = vmatprep.subr.mxu0 0.0
        %3484 = vmatpush1.msra.mxu0 0.0
        %3485 = vmatprep.subr.mxu0 0.0
        %3486 = vmatpush1.msra.mxu0 0.0
        %3487 = vmatprep.subr.mxu0 0.0
        %3488 = vmatpush1.msra.mxu0 0.0
        %3489 = vmatprep.subr.mxu0 0.0
        %3490 = vmatpush1.msra.mxu0 0.0
        %3491 = vmatprep.subr.mxu0 0.0
        %3492 = vmatpush1.msra.mxu0 0.0
        %3493 = vmatprep.subr.mxu0 0.0
        %3494 = vmatpush1.msra.mxu0 0.0
        %3495 = vmatprep.subr.mxu0 0.0
        %3496 = vmatpush1.msra.mxu0 0.0
        %3497 = vmatprep.subr.mxu0 0.0
        %3498 = vmatpush1.msra.mxu0 0.0
        %3499 = vmatprep.subr.mxu0 0.0
        %3500 = vmatpush1.msra.mxu0 0.0
        %3501 = vmatprep.mubr.f32.mxu0 0.0
        %3502 = vmatmul.mubr.f32.gmra.mrb[0].mxu0 %v3390
        %v3503 = vpop.f32.mrb[0].mxu0
        %v3504 = vadd.f32 0.0, %v3503
        %v3505 = vpop.f32.mrb[0].mxu0
        %3506 = vmatprep.mubr.f32.mxu0 0.0
        %3507 = vmatmul.mubr.f32.gmra.mrb[0].mxu0 %v3393
        %v3508 = vpop.f32.mrb[0].mxu0
        %v3509 = vadd.f32 0.0, %v3508
        %v3510 = vpop.f32.mrb[0].mxu0
        %3511 = vmatprep.mubr.f32.mxu0 0.0
        %3512 = vmatmul.mubr.f32.gmra.mrb[0].mxu0 %v3396
        %v3513 = vpop.f32.mrb[0].mxu0
        %v3514 = vadd.f32 0.0, %v3513
        %v3515 = vpop.f32.mrb[0].mxu0
        %3516 = vmatprep.mubr.f32.mxu0 0.0
        %3517 = vmatmul.mubr.f32.gmra.mrb[0].mxu0 %v3399
        %v3518 = vpop.f32.mrb[0].mxu0
        %v3519 = vadd.f32 0.0, %v3518
        %v3520 = vpop.f32.mrb[0].mxu0
        %3521 = vmatprep.mubr.f32.mxu0 0.0
        %3522 = vmatmul.mubr.f32.gmra.mrb[0].mxu0 %v3402
        %v3523 = vpop.f32.mrb[0].mxu0
        %v3524 = vadd.f32 0.0, %v3523
        %v3525 = vpop.f32.mrb[0].mxu0
        %3526 = vmatprep.mubr.f32.mxu0 0.0
        %3527 = vmatmul.mubr.f32.gmra.mrb[0].mxu0 %v3405
        %v3528 = vpop.f32.mrb[0].mxu0
        %v3529 = vadd.f32 0.0, %v3528
        %v3530 = vpop.f32.mrb[0].mxu0
        %3531 = vmatprep.mubr.f32.mxu0 0.0
        %3532 = vmatmul.mubr.f32.gmra.mrb[0].mxu0 %v3408
        %v3533 = vpop.f32.mrb[0].mxu0
        %v3534 = vadd.f32 0.0, %v3533
        %v3535 = vpop.f32.mrb[0].mxu0
        %3536 = vmatprep.mubr.f32.mxu0 0.0
        %3537 = vmatmul.mubr.f32.gmra.mrb[0].mxu0 %v3411
        %v3538 = vpop.f32.mrb[0].mxu0
        %v3539 = vadd.f32 0.0, %v3538
        %v3540 = vpop.f32.mrb[0].mxu0
        %3541 = vmatprep.mubr.f32.mxu0 0.0
        %3542 = vmatmul.mubr.f32.gmra.mrb[0].mxu0 %v3414
        %v3543 = vpop.f32.mrb[0].mxu0
        %v3544 = vadd.f32 0.0, %v3543
        %v3545 = vpop.f32.mrb[0].mxu0
        %3546 = vmatprep.mubr.f32.mxu0 0.0
        %3547 = vmatmul.mubr.f32.gmra.mrb[0].mxu0 %v3417
        %v3548 = vpop.f32.mrb[0].mxu0
        %v3549 = vadd.f32 0.0, %v3548
        %v3550 = vpop.f32.mrb[0].mxu0
        %3551 = vmatprep.mubr.f32.mxu0 0.0
        %3552 = vmatmul.mubr.f32.gmra.mrb[0].mxu0 %v3420
        %v3553 = vpop.f32.mrb[0].mxu0
        %v3554 = vadd.f32 0.0, %v3553
        %v3555 = vpop.f32.mrb[0].mxu0
        %3556 = vmatprep.mubr.f32.mxu0 0.0
        %3557 = vmatmul.mubr.f32.gmra.mrb[0].mxu0 %v3423
        %v3558 = vpop.f32.mrb[0].mxu0
        %v3559 = vadd.f32 0.0, %v3558
        %v3560 = vpop.f32.mrb[0].mxu0
        %3561 = vmatprep.mubr.f32.mxu0 0.0
        %3562 = vmatmul.mubr.f32.gmra.mrb[0].mxu0 %v3426
        %v3563 = vpop.f32.mrb[0].mxu0
        %v3564 = vadd.f32 0.0, %v3563
        %v3565 = vpop.f32.mrb[0].mxu0
        %3566 = vmatprep.mubr.f32.mxu0 0.0
        %3567 = vmatmul.mubr.f32.gmra.mrb[0].mxu0 %v3429
        %v3568 = vpop.f32.mrb[0].mxu0
        %v3569 = vadd.f32 0.0, %v3568
        %v3570 = vpop.f32.mrb[0].mxu0
        %3571 = vmatprep.mubr.f32.mxu0 0.0
        %3572 = vmatmul.mubr.f32.gmra.mrb[0].mxu0 %v3432
        %v3573 = vpop.f32.mrb[0].mxu0
        %v3574 = vadd.f32 0.0, %v3573
        %v3575 = vpop.f32.mrb[0].mxu0
        %3576 = vmatprep.mubr.f32.mxu0 0.0
        %3577 = vmatmul.mubr.f32.gmra.mrb[0].mxu0 %v3435
        %v3578 = vpop.f32.mrb[0].mxu0
        %v3579 = vadd.f32 0.0, %v3578
        %v3580 = vpop.f32.mrb[0].mxu0
        %3581 = vdwg.mxu0
        %v3582 = vadd.f32 %v3348, %v3504
        %v3583 = vadd.f32 %v3349, %v3509
        %v3584 = vadd.f32 %v3350, %v3514
        %v3585 = vadd.f32 %v3351, %v3519
        %v3586 = vadd.f32 %v3352, %v3524
        %v3587 = vadd.f32 %v3353, %v3529
        %v3588 = vadd.f32 %v3354, %v3534
        %v3589 = vadd.f32 %v3355, %v3539
        %v3590 = vadd.f32 %v3356, %v3544
        %v3591 = vadd.f32 %v3357, %v3549
        %v3592 = vadd.f32 %v3358, %v3554
        %v3593 = vadd.f32 %v3359, %v3559
        %v3594 = vadd.f32 %v3360, %v3564
        %v3595 = vadd.f32 %v3361, %v3569
        %v3596 = vadd.f32 %v3362, %v3574
        %v3597 = vadd.f32 %v3363, %v3579
        %v3598 = vld [vmem:[%s3129 + $0x2] sm:$0xff]
        %v3599 = vld [vmem:[%s3129 + $0xa] sm:$0xff]
        %v3600 = vld [vmem:[%s3129 + $0x1a] sm:$0xff]
        %v3601 = vld [vmem:[%s3129 + $0x22] sm:$0xff]
        %v3602 = vld [vmem:[%s3129 + $0x32] sm:$0xff]
        %v3603 = vld [vmem:[%s3129 + $0x3a] sm:$0xff]
        %v3604 = vld [vmem:[%s3129 + $0x4a] sm:$0xff]
        %v3605 = vld [vmem:[%s3129 + $0x52] sm:$0xff]
        %v3606 = vld [vmem:[%s3129 + $0x62] sm:$0xff]
        %v3607 = vld [vmem:[%s3129 + $0x6a] sm:$0xff]
        %v3608 = vld [vmem:[%s3129 + $0x7a] sm:$0xff]
        %v3609 = vld [vmem:[%s3129 + $0x82] sm:$0xff]
        %v3610 = vld [vmem:[%s3129 + $0x92] sm:$0xff]
        %v3611 = vld [vmem:[%s3129 + $0x9a] sm:$0xff]
        %v3612 = vld [vmem:[%s3129 + $0xaa] sm:$0xff]
        %v3613 = vld [vmem:[%s3129 + $0xb2] sm:$0xff]
        %s3614 = scalar_lea.vmem %s4, 320
        %v3615 = vld [vmem:[%s3614] sm:$0xff]
        %v3616 = vld [vmem:[%s3614 + $0x8] sm:$0xff]
        %v3617 = vld [vmem:[%s3614 + $0x10] sm:$0xff]
        %v3618 = vld [vmem:[%s3614 + $0x18] sm:$0xff]
        %v3619 = vld [vmem:[%s3614 + $0x20] sm:$0xff]
        %v3620 = vld [vmem:[%s3614 + $0x28] sm:$0xff]
        %v3621 = vld [vmem:[%s3614 + $0x30] sm:$0xff]
        %v3622 = vld [vmem:[%s3614 + $0x38] sm:$0xff]
        %v3624 = vsel %vm471, %v3598, 0
        %v3627 = vsel %vm471, %v3599, 0
        %v3630 = vsel %vm471, %v3600, 0
        %v3633 = vsel %vm471, %v3601, 0
        %v3636 = vsel %vm471, %v3602, 0
        %v3639 = vsel %vm471, %v3603, 0
        %v3642 = vsel %vm471, %v3604, 0
        %v3645 = vsel %vm471, %v3605, 0
        %v3648 = vsel %vm471, %v3606, 0
        %v3651 = vsel %vm471, %v3607, 0
        %v3654 = vsel %vm471, %v3608, 0
        %v3657 = vsel %vm471, %v3609, 0
        %v3660 = vsel %vm471, %v3610, 0
        %v3663 = vsel %vm471, %v3611, 0
        %v3666 = vsel %vm471, %v3612, 0
        %v3669 = vsel %vm471, %v3613, 0
        %3671 = vmatprep.subr.mxu0 0.0
        %3672 = vmatpush1.msra.mxu0 %v3615
        %3673 = vmatprep.subr.mxu0 0.0
        %3674 = vmatpush1.msra.mxu0 %v3616
        %3675 = vmatprep.subr.mxu0 0.0
        %3676 = vmatpush1.msra.mxu0 %v3617
        %3677 = vmatprep.subr.mxu0 0.0
        %3678 = vmatpush1.msra.mxu0 %v3618
        %3679 = vmatprep.subr.mxu0 0.0
        %3680 = vmatpush1.msra.mxu0 %v3619
        %3681 = vmatprep.subr.mxu0 0.0
        %3682 = vmatpush1.msra.mxu0 %v3620
        %3683 = vmatprep.subr.mxu0 0.0
        %3684 = vmatpush1.msra.mxu0 %v3621
        %3685 = vmatprep.subr.mxu0 0.0
        %3686 = vmatpush1.msra.mxu0 %v3622
        %3687 = vmatprep.subr.mxu0 0.0
        %3688 = vmatpush1.msra.mxu0 0.0
        %3689 = vmatprep.subr.mxu0 0.0
        %3690 = vmatpush1.msra.mxu0 0.0
        %3691 = vmatprep.subr.mxu0 0.0
        %3692 = vmatpush1.msra.mxu0 0.0
        %3693 = vmatprep.subr.mxu0 0.0
        %3694 = vmatpush1.msra.mxu0 0.0
        %3695 = vmatprep.subr.mxu0 0.0
        %3696 = vmatpush1.msra.mxu0 0.0
        %3697 = vmatprep.subr.mxu0 0.0
        %3698 = vmatpush1.msra.mxu0 0.0
        %3699 = vmatprep.subr.mxu0 0.0
        %3700 = vmatpush1.msra.mxu0 0.0
        %3701 = vmatprep.subr.mxu0 0.0
        %3702 = vmatpush1.msra.mxu0 0.0
        %3703 = vmatprep.subr.mxu0 0.0
        %3704 = vmatpush1.msra.mxu0 0.0
        %3705 = vmatprep.subr.mxu0 0.0
        %3706 = vmatpush1.msra.mxu0 0.0
        %3707 = vmatprep.subr.mxu0 0.0
        %3708 = vmatpush1.msra.mxu0 0.0
        %3709 = vmatprep.subr.mxu0 0.0
        %3710 = vmatpush1.msra.mxu0 0.0
        %3711 = vmatprep.subr.mxu0 0.0
        %3712 = vmatpush1.msra.mxu0 0.0
        %3713 = vmatprep.subr.mxu0 0.0
        %3714 = vmatpush1.msra.mxu0 0.0
        %3715 = vmatprep.subr.mxu0 0.0
        %3716 = vmatpush1.msra.mxu0 0.0
        %3717 = vmatprep.subr.mxu0 0.0
        %3718 = vmatpush1.msra.mxu0 0.0
        %3719 = vmatprep.subr.mxu0 0.0
        %3720 = vmatpush1.msra.mxu0 0.0
        %3721 = vmatprep.subr.mxu0 0.0
        %3722 = vmatpush1.msra.mxu0 0.0
        %3723 = vmatprep.subr.mxu0 0.0
        %3724 = vmatpush1.msra.mxu0 0.0
        %3725 = vmatprep.subr.mxu0 0.0
        %3726 = vmatpush1.msra.mxu0 0.0
        %3727 = vmatprep.subr.mxu0 0.0
        %3728 = vmatpush1.msra.mxu0 0.0
        %3729 = vmatprep.subr.mxu0 0.0
        %3730 = vmatpush1.msra.mxu0 0.0
        %3731 = vmatprep.subr.mxu0 0.0
        %3732 = vmatpush1.msra.mxu0 0.0
        %3733 = vmatprep.subr.mxu0 0.0
        %3734 = vmatpush1.msra.mxu0 0.0
        %3735 = vmatprep.mubr.f32.mxu0 0.0
        %3736 = vmatmul.mubr.f32.gmra.mrb[0].mxu0 %v3624
        %v3737 = vpop.f32.mrb[0].mxu0
        %v3738 = vadd.f32 0.0, %v3737
        %v3739 = vpop.f32.mrb[0].mxu0
        %3740 = vmatprep.mubr.f32.mxu0 0.0
        %3741 = vmatmul.mubr.f32.gmra.mrb[0].mxu0 %v3627
        %v3742 = vpop.f32.mrb[0].mxu0
        %v3743 = vadd.f32 0.0, %v3742
        %v3744 = vpop.f32.mrb[0].mxu0
        %3745 = vmatprep.mubr.f32.mxu0 0.0
        %3746 = vmatmul.mubr.f32.gmra.mrb[0].mxu0 %v3630
        %v3747 = vpop.f32.mrb[0].mxu0
        %v3748 = vadd.f32 0.0, %v3747
        %v3749 = vpop.f32.mrb[0].mxu0
        %3750 = vmatprep.mubr.f32.mxu0 0.0
        %3751 = vmatmul.mubr.f32.gmra.mrb[0].mxu0 %v3633
        %v3752 = vpop.f32.mrb[0].mxu0
        %v3753 = vadd.f32 0.0, %v3752
        %v3754 = vpop.f32.mrb[0].mxu0
        %3755 = vmatprep.mubr.f32.mxu0 0.0
        %3756 = vmatmul.mubr.f32.gmra.mrb[0].mxu0 %v3636
        %v3757 = vpop.f32.mrb[0].mxu0
        %v3758 = vadd.f32 0.0, %v3757
        %v3759 = vpop.f32.mrb[0].mxu0
        %3760 = vmatprep.mubr.f32.mxu0 0.0
        %3761 = vmatmul.mubr.f32.gmra.mrb[0].mxu0 %v3639
        %v3762 = vpop.f32.mrb[0].mxu0
        %v3763 = vadd.f32 0.0, %v3762
        %v3764 = vpop.f32.mrb[0].mxu0
        %3765 = vmatprep.mubr.f32.mxu0 0.0
        %3766 = vmatmul.mubr.f32.gmra.mrb[0].mxu0 %v3642
        %v3767 = vpop.f32.mrb[0].mxu0
        %v3768 = vadd.f32 0.0, %v3767
        %v3769 = vpop.f32.mrb[0].mxu0
        %3770 = vmatprep.mubr.f32.mxu0 0.0
        %3771 = vmatmul.mubr.f32.gmra.mrb[0].mxu0 %v3645
        %v3772 = vpop.f32.mrb[0].mxu0
        %v3773 = vadd.f32 0.0, %v3772
        %v3774 = vpop.f32.mrb[0].mxu0
        %3775 = vmatprep.mubr.f32.mxu0 0.0
        %3776 = vmatmul.mubr.f32.gmra.mrb[0].mxu0 %v3648
        %v3777 = vpop.f32.mrb[0].mxu0
        %v3778 = vadd.f32 0.0, %v3777
        %v3779 = vpop.f32.mrb[0].mxu0
        %3780 = vmatprep.mubr.f32.mxu0 0.0
        %3781 = vmatmul.mubr.f32.gmra.mrb[0].mxu0 %v3651
        %v3782 = vpop.f32.mrb[0].mxu0
        %v3783 = vadd.f32 0.0, %v3782
        %v3784 = vpop.f32.mrb[0].mxu0
        %3785 = vmatprep.mubr.f32.mxu0 0.0
        %3786 = vmatmul.mubr.f32.gmra.mrb[0].mxu0 %v3654
        %v3787 = vpop.f32.mrb[0].mxu0
        %v3788 = vadd.f32 0.0, %v3787
        %v3789 = vpop.f32.mrb[0].mxu0
        %3790 = vmatprep.mubr.f32.mxu0 0.0
        %3791 = vmatmul.mubr.f32.gmra.mrb[0].mxu0 %v3657
        %v3792 = vpop.f32.mrb[0].mxu0
        %v3793 = vadd.f32 0.0, %v3792
        %v3794 = vpop.f32.mrb[0].mxu0
        %3795 = vmatprep.mubr.f32.mxu0 0.0
        %3796 = vmatmul.mubr.f32.gmra.mrb[0].mxu0 %v3660
        %v3797 = vpop.f32.mrb[0].mxu0
        %v3798 = vadd.f32 0.0, %v3797
        %v3799 = vpop.f32.mrb[0].mxu0
        %3800 = vmatprep.mubr.f32.mxu0 0.0
        %3801 = vmatmul.mubr.f32.gmra.mrb[0].mxu0 %v3663
        %v3802 = vpop.f32.mrb[0].mxu0
        %v3803 = vadd.f32 0.0, %v3802
        %v3804 = vpop.f32.mrb[0].mxu0
        %3805 = vmatprep.mubr.f32.mxu0 0.0
        %3806 = vmatmul.mubr.f32.gmra.mrb[0].mxu0 %v3666
        %v3807 = vpop.f32.mrb[0].mxu0
        %v3808 = vadd.f32 0.0, %v3807
        %v3809 = vpop.f32.mrb[0].mxu0
        %3810 = vmatprep.mubr.f32.mxu0 0.0
        %3811 = vmatmul.mubr.f32.gmra.mrb[0].mxu0 %v3669
        %v3812 = vpop.f32.mrb[0].mxu0
        %v3813 = vadd.f32 0.0, %v3812
        %v3814 = vpop.f32.mrb[0].mxu0
        %3815 = vdwg.mxu0
        %v3816 = vadd.f32 %v3582, %v3738
        %v3817 = vadd.f32 %v3583, %v3743
        %v3818 = vadd.f32 %v3584, %v3748
        %v3819 = vadd.f32 %v3585, %v3753
        %v3820 = vadd.f32 %v3586, %v3758
        %v3821 = vadd.f32 %v3587, %v3763
        %v3822 = vadd.f32 %v3588, %v3768
        %v3823 = vadd.f32 %v3589, %v3773
        %v3824 = vadd.f32 %v3590, %v3778
        %v3825 = vadd.f32 %v3591, %v3783
        %v3826 = vadd.f32 %v3592, %v3788
        %v3827 = vadd.f32 %v3593, %v3793
        %v3828 = vadd.f32 %v3594, %v3798
        %v3829 = vadd.f32 %v3595, %v3803
        %v3830 = vadd.f32 %v3596, %v3808
        %v3831 = vadd.f32 %v3597, %v3813
        %s3832 = scalar_lea.vmem [#allocation2], 48
        %v3833 = vld [vmem:[%s3832] sm:$0xff]
        %v3834 = vld [vmem:[%s3832 + $0x8] sm:$0xff]
        %v3835 = vld [vmem:[%s3832 + $0x18] sm:$0xff]
        %v3836 = vld [vmem:[%s3832 + $0x20] sm:$0xff]
        %v3837 = vld [vmem:[%s3832 + $0x30] sm:$0xff]
        %v3838 = vld [vmem:[%s3832 + $0x38] sm:$0xff]
        %v3839 = vld [vmem:[%s3832 + $0x48] sm:$0xff]
        %v3840 = vld [vmem:[%s3832 + $0x50] sm:$0xff]
        %v3841 = vld [vmem:[%s3832 + $0x60] sm:$0xff]
        %v3842 = vld [vmem:[%s3832 + $0x68] sm:$0xff]
        %v3843 = vld [vmem:[%s3832 + $0x78] sm:$0xff]
        %v3844 = vld [vmem:[%s3832 + $0x80] sm:$0xff]
        %v3845 = vld [vmem:[%s3832 + $0x90] sm:$0xff]
        %v3846 = vld [vmem:[%s3832 + $0x98] sm:$0xff]
        %v3847 = vld [vmem:[%s3832 + $0xa8] sm:$0xff]
        %v3848 = vld [vmem:[%s3832 + $0xb0] sm:$0xff]
        %s3849 = scalar_lea.vmem %s4, 384
        %v3850 = vld [vmem:[%s3849] sm:$0xff]
        %v3851 = vld [vmem:[%s3849 + $0x8] sm:$0xff]
        %v3852 = vld [vmem:[%s3849 + $0x10] sm:$0xff]
        %v3853 = vld [vmem:[%s3849 + $0x18] sm:$0xff]
        %v3854 = vld [vmem:[%s3849 + $0x20] sm:$0xff]
        %v3855 = vld [vmem:[%s3849 + $0x28] sm:$0xff]
        %v3856 = vld [vmem:[%s3849 + $0x30] sm:$0xff]
        %v3857 = vld [vmem:[%s3849 + $0x38] sm:$0xff]
        %v3859 = vsel %vm471, %v3833, 0
        %v3862 = vsel %vm471, %v3834, 0
        %v3865 = vsel %vm471, %v3835, 0
        %v3868 = vsel %vm471, %v3836, 0
        %v3871 = vsel %vm471, %v3837, 0
        %v3874 = vsel %vm471, %v3838, 0
        %v3877 = vsel %vm471, %v3839, 0
        %v3880 = vsel %vm471, %v3840, 0
        %v3883 = vsel %vm471, %v3841, 0
        %v3886 = vsel %vm471, %v3842, 0
        %v3889 = vsel %vm471, %v3843, 0
        %v3892 = vsel %vm471, %v3844, 0
        %v3895 = vsel %vm471, %v3845, 0
        %v3898 = vsel %vm471, %v3846, 0
        %v3901 = vsel %vm471, %v3847, 0
        %v3904 = vsel %vm471, %v3848, 0
        %3906 = vmatprep.subr.mxu0 0.0
        %3907 = vmatpush1.msra.mxu0 %v3850
        %3908 = vmatprep.subr.mxu0 0.0
        %3909 = vmatpush1.msra.mxu0 %v3851
        %3910 = vmatprep.subr.mxu0 0.0
        %3911 = vmatpush1.msra.mxu0 %v3852
        %3912 = vmatprep.subr.mxu0 0.0
        %3913 = vmatpush1.msra.mxu0 %v3853
        %3914 = vmatprep.subr.mxu0 0.0
        %3915 = vmatpush1.msra.mxu0 %v3854
        %3916 = vmatprep.subr.mxu0 0.0
        %3917 = vmatpush1.msra.mxu0 %v3855
        %3918 = vmatprep.subr.mxu0 0.0
        %3919 = vmatpush1.msra.mxu0 %v3856
        %3920 = vmatprep.subr.mxu0 0.0
        %3921 = vmatpush1.msra.mxu0 %v3857
        %3922 = vmatprep.subr.mxu0 0.0
        %3923 = vmatpush1.msra.mxu0 0.0
        %3924 = vmatprep.subr.mxu0 0.0
        %3925 = vmatpush1.msra.mxu0 0.0
        %3926 = vmatprep.subr.mxu0 0.0
        %3927 = vmatpush1.msra.mxu0 0.0
        %3928 = vmatprep.subr.mxu0 0.0
        %3929 = vmatpush1.msra.mxu0 0.0
        %3930 = vmatprep.subr.mxu0 0.0
        %3931 = vmatpush1.msra.mxu0 0.0
        %3932 = vmatprep.subr.mxu0 0.0
        %3933 = vmatpush1.msra.mxu0 0.0
        %3934 = vmatprep.subr.mxu0 0.0
        %3935 = vmatpush1.msra.mxu0 0.0
        %3936 = vmatprep.subr.mxu0 0.0
        %3937 = vmatpush1.msra.mxu0 0.0
        %3938 = vmatprep.subr.mxu0 0.0
        %3939 = vmatpush1.msra.mxu0 0.0
        %3940 = vmatprep.subr.mxu0 0.0
        %3941 = vmatpush1.msra.mxu0 0.0
        %3942 = vmatprep.subr.mxu0 0.0
        %3943 = vmatpush1.msra.mxu0 0.0
        %3944 = vmatprep.subr.mxu0 0.0
        %3945 = vmatpush1.msra.mxu0 0.0
        %3946 = vmatprep.subr.mxu0 0.0
        %3947 = vmatpush1.msra.mxu0 0.0
        %3948 = vmatprep.subr.mxu0 0.0
        %3949 = vmatpush1.msra.mxu0 0.0
        %3950 = vmatprep.subr.mxu0 0.0
        %3951 = vmatpush1.msra.mxu0 0.0
        %3952 = vmatprep.subr.mxu0 0.0
        %3953 = vmatpush1.msra.mxu0 0.0
        %3954 = vmatprep.subr.mxu0 0.0
        %3955 = vmatpush1.msra.mxu0 0.0
        %3956 = vmatprep.subr.mxu0 0.0
        %3957 = vmatpush1.msra.mxu0 0.0
        %3958 = vmatprep.subr.mxu0 0.0
        %3959 = vmatpush1.msra.mxu0 0.0
        %3960 = vmatprep.subr.mxu0 0.0
        %3961 = vmatpush1.msra.mxu0 0.0
        %3962 = vmatprep.subr.mxu0 0.0
        %3963 = vmatpush1.msra.mxu0 0.0
        %3964 = vmatprep.subr.mxu0 0.0
        %3965 = vmatpush1.msra.mxu0 0.0
        %3966 = vmatprep.subr.mxu0 0.0
        %3967 = vmatpush1.msra.mxu0 0.0
        %3968 = vmatprep.subr.mxu0 0.0
        %3969 = vmatpush1.msra.mxu0 0.0
        %3970 = vmatprep.mubr.f32.mxu0 0.0
        %3971 = vmatmul.mubr.f32.gmra.mrb[0].mxu0 %v3859
        %v3972 = vpop.f32.mrb[0].mxu0
        %v3973 = vadd.f32 0.0, %v3972
        %v3974 = vpop.f32.mrb[0].mxu0
        %3975 = vmatprep.mubr.f32.mxu0 0.0
        %3976 = vmatmul.mubr.f32.gmra.mrb[0].mxu0 %v3862
        %v3977 = vpop.f32.mrb[0].mxu0
        %v3978 = vadd.f32 0.0, %v3977
        %v3979 = vpop.f32.mrb[0].mxu0
        %3980 = vmatprep.mubr.f32.mxu0 0.0
        %3981 = vmatmul.mubr.f32.gmra.mrb[0].mxu0 %v3865
        %v3982 = vpop.f32.mrb[0].mxu0
        %v3983 = vadd.f32 0.0, %v3982
        %v3984 = vpop.f32.mrb[0].mxu0
        %3985 = vmatprep.mubr.f32.mxu0 0.0
        %3986 = vmatmul.mubr.f32.gmra.mrb[0].mxu0 %v3868
        %v3987 = vpop.f32.mrb[0].mxu0
        %v3988 = vadd.f32 0.0, %v3987
        %v3989 = vpop.f32.mrb[0].mxu0
        %3990 = vmatprep.mubr.f32.mxu0 0.0
        %3991 = vmatmul.mubr.f32.gmra.mrb[0].mxu0 %v3871
        %v3992 = vpop.f32.mrb[0].mxu0
        %v3993 = vadd.f32 0.0, %v3992
        %v3994 = vpop.f32.mrb[0].mxu0
        %3995 = vmatprep.mubr.f32.mxu0 0.0
        %3996 = vmatmul.mubr.f32.gmra.mrb[0].mxu0 %v3874
        %v3997 = vpop.f32.mrb[0].mxu0
        %v3998 = vadd.f32 0.0, %v3997
        %v3999 = vpop.f32.mrb[0].mxu0
        %4000 = vmatprep.mubr.f32.mxu0 0.0
        %4001 = vmatmul.mubr.f32.gmra.mrb[0].mxu0 %v3877
        %v4002 = vpop.f32.mrb[0].mxu0
        %v4003 = vadd.f32 0.0, %v4002
        %v4004 = vpop.f32.mrb[0].mxu0
        %4005 = vmatprep.mubr.f32.mxu0 0.0
        %4006 = vmatmul.mubr.f32.gmra.mrb[0].mxu0 %v3880
        %v4007 = vpop.f32.mrb[0].mxu0
        %v4008 = vadd.f32 0.0, %v4007
        %v4009 = vpop.f32.mrb[0].mxu0
        %4010 = vmatprep.mubr.f32.mxu0 0.0
        %4011 = vmatmul.mubr.f32.gmra.mrb[0].mxu0 %v3883
        %v4012 = vpop.f32.mrb[0].mxu0
        %v4013 = vadd.f32 0.0, %v4012
        %v4014 = vpop.f32.mrb[0].mxu0
        %4015 = vmatprep.mubr.f32.mxu0 0.0
        %4016 = vmatmul.mubr.f32.gmra.mrb[0].mxu0 %v3886
        %v4017 = vpop.f32.mrb[0].mxu0
        %v4018 = vadd.f32 0.0, %v4017
        %v4019 = vpop.f32.mrb[0].mxu0
        %4020 = vmatprep.mubr.f32.mxu0 0.0
        %4021 = vmatmul.mubr.f32.gmra.mrb[0].mxu0 %v3889
        %v4022 = vpop.f32.mrb[0].mxu0
        %v4023 = vadd.f32 0.0, %v4022
        %v4024 = vpop.f32.mrb[0].mxu0
        %4025 = vmatprep.mubr.f32.mxu0 0.0
        %4026 = vmatmul.mubr.f32.gmra.mrb[0].mxu0 %v3892
        %v4027 = vpop.f32.mrb[0].mxu0
        %v4028 = vadd.f32 0.0, %v4027
        %v4029 = vpop.f32.mrb[0].mxu0
        %4030 = vmatprep.mubr.f32.mxu0 0.0
        %4031 = vmatmul.mubr.f32.gmra.mrb[0].mxu0 %v3895
        %v4032 = vpop.f32.mrb[0].mxu0
        %v4033 = vadd.f32 0.0, %v4032
        %v4034 = vpop.f32.mrb[0].mxu0
        %4035 = vmatprep.mubr.f32.mxu0 0.0
        %4036 = vmatmul.mubr.f32.gmra.mrb[0].mxu0 %v3898
        %v4037 = vpop.f32.mrb[0].mxu0
        %v4038 = vadd.f32 0.0, %v4037
        %v4039 = vpop.f32.mrb[0].mxu0
        %4040 = vmatprep.mubr.f32.mxu0 0.0
        %4041 = vmatmul.mubr.f32.gmra.mrb[0].mxu0 %v3901
        %v4042 = vpop.f32.mrb[0].mxu0
        %v4043 = vadd.f32 0.0, %v4042
        %v4044 = vpop.f32.mrb[0].mxu0
        %4045 = vmatprep.mubr.f32.mxu0 0.0
        %4046 = vmatmul.mubr.f32.gmra.mrb[0].mxu0 %v3904
        %v4047 = vpop.f32.mrb[0].mxu0
        %v4048 = vadd.f32 0.0, %v4047
        %v4049 = vpop.f32.mrb[0].mxu0
        %4050 = vdwg.mxu0
        %v4051 = vadd.f32 %v3816, %v3973
        %v4052 = vadd.f32 %v3817, %v3978
        %v4053 = vadd.f32 %v3818, %v3983
        %v4054 = vadd.f32 %v3819, %v3988
        %v4055 = vadd.f32 %v3820, %v3993
        %v4056 = vadd.f32 %v3821, %v3998
        %v4057 = vadd.f32 %v3822, %v4003
        %v4058 = vadd.f32 %v3823, %v4008
        %v4059 = vadd.f32 %v3824, %v4013
        %v4060 = vadd.f32 %v3825, %v4018
        %v4061 = vadd.f32 %v3826, %v4023
        %v4062 = vadd.f32 %v3827, %v4028
        %v4063 = vadd.f32 %v3828, %v4033
        %v4064 = vadd.f32 %v3829, %v4038
        %v4065 = vadd.f32 %v3830, %v4043
        %v4066 = vadd.f32 %v3831, %v4048
        %v4067 = vld [vmem:[%s3832 + $0x1] sm:$0xff]
        %v4068 = vld [vmem:[%s3832 + $0x9] sm:$0xff]
        %v4069 = vld [vmem:[%s3832 + $0x19] sm:$0xff]
        %v4070 = vld [vmem:[%s3832 + $0x21] sm:$0xff]
        %v4071 = vld [vmem:[%s3832 + $0x31] sm:$0xff]
        %v4072 = vld [vmem:[%s3832 + $0x39] sm:$0xff]
        %v4073 = vld [vmem:[%s3832 + $0x49] sm:$0xff]
        %v4074 = vld [vmem:[%s3832 + $0x51] sm:$0xff]
        %v4075 = vld [vmem:[%s3832 + $0x61] sm:$0xff]
        %v4076 = vld [vmem:[%s3832 + $0x69] sm:$0xff]
        %v4077 = vld [vmem:[%s3832 + $0x79] sm:$0xff]
        %v4078 = vld [vmem:[%s3832 + $0x81] sm:$0xff]
        %v4079 = vld [vmem:[%s3832 + $0x91] sm:$0xff]
        %v4080 = vld [vmem:[%s3832 + $0x99] sm:$0xff]
        %v4081 = vld [vmem:[%s3832 + $0xa9] sm:$0xff]
        %v4082 = vld [vmem:[%s3832 + $0xb1] sm:$0xff]
        %s4083 = scalar_lea.vmem %s4, 448
        %v4084 = vld [vmem:[%s4083] sm:$0xff]
        %v4085 = vld [vmem:[%s4083 + $0x8] sm:$0xff]
        %v4086 = vld [vmem:[%s4083 + $0x10] sm:$0xff]
        %v4087 = vld [vmem:[%s4083 + $0x18] sm:$0xff]
        %v4088 = vld [vmem:[%s4083 + $0x20] sm:$0xff]
        %v4089 = vld [vmem:[%s4083 + $0x28] sm:$0xff]
        %v4090 = vld [vmem:[%s4083 + $0x30] sm:$0xff]
        %v4091 = vld [vmem:[%s4083 + $0x38] sm:$0xff]
        %v4093 = vsel %vm471, %v4067, 0
        %v4096 = vsel %vm471, %v4068, 0
        %v4099 = vsel %vm471, %v4069, 0
        %v4102 = vsel %vm471, %v4070, 0
        %v4105 = vsel %vm471, %v4071, 0
        %v4108 = vsel %vm471, %v4072, 0
        %v4111 = vsel %vm471, %v4073, 0
        %v4114 = vsel %vm471, %v4074, 0
        %v4117 = vsel %vm471, %v4075, 0
        %v4120 = vsel %vm471, %v4076, 0
        %v4123 = vsel %vm471, %v4077, 0
        %v4126 = vsel %vm471, %v4078, 0
        %v4129 = vsel %vm471, %v4079, 0
        %v4132 = vsel %vm471, %v4080, 0
        %v4135 = vsel %vm471, %v4081, 0
        %v4138 = vsel %vm471, %v4082, 0
        %4140 = vmatprep.subr.mxu0 0.0
        %4141 = vmatpush1.msra.mxu0 %v4084
        %4142 = vmatprep.subr.mxu0 0.0
        %4143 = vmatpush1.msra.mxu0 %v4085
        %4144 = vmatprep.subr.mxu0 0.0
        %4145 = vmatpush1.msra.mxu0 %v4086
        %4146 = vmatprep.subr.mxu0 0.0
        %4147 = vmatpush1.msra.mxu0 %v4087
        %4148 = vmatprep.subr.mxu0 0.0
        %4149 = vmatpush1.msra.mxu0 %v4088
        %4150 = vmatprep.subr.mxu0 0.0
        %4151 = vmatpush1.msra.mxu0 %v4089
        %4152 = vmatprep.subr.mxu0 0.0
        %4153 = vmatpush1.msra.mxu0 %v4090
        %4154 = vmatprep.subr.mxu0 0.0
        %4155 = vmatpush1.msra.mxu0 %v4091
        %4156 = vmatprep.subr.mxu0 0.0
        %4157 = vmatpush1.msra.mxu0 0.0
        %4158 = vmatprep.subr.mxu0 0.0
        %4159 = vmatpush1.msra.mxu0 0.0
        %4160 = vmatprep.subr.mxu0 0.0
        %4161 = vmatpush1.msra.mxu0 0.0
        %4162 = vmatprep.subr.mxu0 0.0
        %4163 = vmatpush1.msra.mxu0 0.0
        %4164 = vmatprep.subr.mxu0 0.0
        %4165 = vmatpush1.msra.mxu0 0.0
        %4166 = vmatprep.subr.mxu0 0.0
        %4167 = vmatpush1.msra.mxu0 0.0
        %4168 = vmatprep.subr.mxu0 0.0
        %4169 = vmatpush1.msra.mxu0 0.0
        %4170 = vmatprep.subr.mxu0 0.0
        %4171 = vmatpush1.msra.mxu0 0.0
        %4172 = vmatprep.subr.mxu0 0.0
        %4173 = vmatpush1.msra.mxu0 0.0
        %4174 = vmatprep.subr.mxu0 0.0
        %4175 = vmatpush1.msra.mxu0 0.0
        %4176 = vmatprep.subr.mxu0 0.0
        %4177 = vmatpush1.msra.mxu0 0.0
        %4178 = vmatprep.subr.mxu0 0.0
        %4179 = vmatpush1.msra.mxu0 0.0
        %4180 = vmatprep.subr.mxu0 0.0
        %4181 = vmatpush1.msra.mxu0 0.0
        %4182 = vmatprep.subr.mxu0 0.0
        %4183 = vmatpush1.msra.mxu0 0.0
        %4184 = vmatprep.subr.mxu0 0.0
        %4185 = vmatpush1.msra.mxu0 0.0
        %4186 = vmatprep.subr.mxu0 0.0
        %4187 = vmatpush1.msra.mxu0 0.0
        %4188 = vmatprep.subr.mxu0 0.0
        %4189 = vmatpush1.msra.mxu0 0.0
        %4190 = vmatprep.subr.mxu0 0.0
        %4191 = vmatpush1.msra.mxu0 0.0
        %4192 = vmatprep.subr.mxu0 0.0
        %4193 = vmatpush1.msra.mxu0 0.0
        %4194 = vmatprep.subr.mxu0 0.0
        %4195 = vmatpush1.msra.mxu0 0.0
        %4196 = vmatprep.subr.mxu0 0.0
        %4197 = vmatpush1.msra.mxu0 0.0
        %4198 = vmatprep.subr.mxu0 0.0
        %4199 = vmatpush1.msra.mxu0 0.0
        %4200 = vmatprep.subr.mxu0 0.0
        %4201 = vmatpush1.msra.mxu0 0.0
        %4202 = vmatprep.subr.mxu0 0.0
        %4203 = vmatpush1.msra.mxu0 0.0
        %4204 = vmatprep.mubr.f32.mxu0 0.0
        %4205 = vmatmul.mubr.f32.gmra.mrb[0].mxu0 %v4093
        %v4206 = vpop.f32.mrb[0].mxu0
        %v4207 = vadd.f32 0.0, %v4206
        %v4208 = vpop.f32.mrb[0].mxu0
        %4209 = vmatprep.mubr.f32.mxu0 0.0
        %4210 = vmatmul.mubr.f32.gmra.mrb[0].mxu0 %v4096
        %v4211 = vpop.f32.mrb[0].mxu0
        %v4212 = vadd.f32 0.0, %v4211
        %v4213 = vpop.f32.mrb[0].mxu0
        %4214 = vmatprep.mubr.f32.mxu0 0.0
        %4215 = vmatmul.mubr.f32.gmra.mrb[0].mxu0 %v4099
        %v4216 = vpop.f32.mrb[0].mxu0
        %v4217 = vadd.f32 0.0, %v4216
        %v4218 = vpop.f32.mrb[0].mxu0
        %4219 = vmatprep.mubr.f32.mxu0 0.0
        %4220 = vmatmul.mubr.f32.gmra.mrb[0].mxu0 %v4102
        %v4221 = vpop.f32.mrb[0].mxu0
        %v4222 = vadd.f32 0.0, %v4221
        %v4223 = vpop.f32.mrb[0].mxu0
        %4224 = vmatprep.mubr.f32.mxu0 0.0
        %4225 = vmatmul.mubr.f32.gmra.mrb[0].mxu0 %v4105
        %v4226 = vpop.f32.mrb[0].mxu0
        %v4227 = vadd.f32 0.0, %v4226
        %v4228 = vpop.f32.mrb[0].mxu0
        %4229 = vmatprep.mubr.f32.mxu0 0.0
        %4230 = vmatmul.mubr.f32.gmra.mrb[0].mxu0 %v4108
        %v4231 = vpop.f32.mrb[0].mxu0
        %v4232 = vadd.f32 0.0, %v4231
        %v4233 = vpop.f32.mrb[0].mxu0
        %4234 = vmatprep.mubr.f32.mxu0 0.0
        %4235 = vmatmul.mubr.f32.gmra.mrb[0].mxu0 %v4111
        %v4236 = vpop.f32.mrb[0].mxu0
        %v4237 = vadd.f32 0.0, %v4236
        %v4238 = vpop.f32.mrb[0].mxu0
        %4239 = vmatprep.mubr.f32.mxu0 0.0
        %4240 = vmatmul.mubr.f32.gmra.mrb[0].mxu0 %v4114
        %v4241 = vpop.f32.mrb[0].mxu0
        %v4242 = vadd.f32 0.0, %v4241
        %v4243 = vpop.f32.mrb[0].mxu0
        %4244 = vmatprep.mubr.f32.mxu0 0.0
        %4245 = vmatmul.mubr.f32.gmra.mrb[0].mxu0 %v4117
        %v4246 = vpop.f32.mrb[0].mxu0
        %v4247 = vadd.f32 0.0, %v4246
        %v4248 = vpop.f32.mrb[0].mxu0
        %4249 = vmatprep.mubr.f32.mxu0 0.0
        %4250 = vmatmul.mubr.f32.gmra.mrb[0].mxu0 %v4120
        %v4251 = vpop.f32.mrb[0].mxu0
        %v4252 = vadd.f32 0.0, %v4251
        %v4253 = vpop.f32.mrb[0].mxu0
        %4254 = vmatprep.mubr.f32.mxu0 0.0
        %4255 = vmatmul.mubr.f32.gmra.mrb[0].mxu0 %v4123
        %v4256 = vpop.f32.mrb[0].mxu0
        %v4257 = vadd.f32 0.0, %v4256
        %v4258 = vpop.f32.mrb[0].mxu0
        %4259 = vmatprep.mubr.f32.mxu0 0.0
        %4260 = vmatmul.mubr.f32.gmra.mrb[0].mxu0 %v4126
        %v4261 = vpop.f32.mrb[0].mxu0
        %v4262 = vadd.f32 0.0, %v4261
        %v4263 = vpop.f32.mrb[0].mxu0
        %4264 = vmatprep.mubr.f32.mxu0 0.0
        %4265 = vmatmul.mubr.f32.gmra.mrb[0].mxu0 %v4129
        %v4266 = vpop.f32.mrb[0].mxu0
        %v4267 = vadd.f32 0.0, %v4266
        %v4268 = vpop.f32.mrb[0].mxu0
        %4269 = vmatprep.mubr.f32.mxu0 0.0
        %4270 = vmatmul.mubr.f32.gmra.mrb[0].mxu0 %v4132
        %v4271 = vpop.f32.mrb[0].mxu0
        %v4272 = vadd.f32 0.0, %v4271
        %v4273 = vpop.f32.mrb[0].mxu0
        %4274 = vmatprep.mubr.f32.mxu0 0.0
        %4275 = vmatmul.mubr.f32.gmra.mrb[0].mxu0 %v4135
        %v4276 = vpop.f32.mrb[0].mxu0
        %v4277 = vadd.f32 0.0, %v4276
        %v4278 = vpop.f32.mrb[0].mxu0
        %4279 = vmatprep.mubr.f32.mxu0 0.0
        %4280 = vmatmul.mubr.f32.gmra.mrb[0].mxu0 %v4138
        %v4281 = vpop.f32.mrb[0].mxu0
        %v4282 = vadd.f32 0.0, %v4281
        %v4283 = vpop.f32.mrb[0].mxu0
        %4284 = vdwg.mxu0
        %v4285 = vadd.f32 %v4051, %v4207
        %v4286 = vadd.f32 %v4052, %v4212
        %v4287 = vadd.f32 %v4053, %v4217
        %v4288 = vadd.f32 %v4054, %v4222
        %v4289 = vadd.f32 %v4055, %v4227
        %v4290 = vadd.f32 %v4056, %v4232
        %v4291 = vadd.f32 %v4057, %v4237
        %v4292 = vadd.f32 %v4058, %v4242
        %v4293 = vadd.f32 %v4059, %v4247
        %v4294 = vadd.f32 %v4060, %v4252
        %v4295 = vadd.f32 %v4061, %v4257
        %v4296 = vadd.f32 %v4062, %v4262
        %v4297 = vadd.f32 %v4063, %v4267
        %v4298 = vadd.f32 %v4064, %v4272
        %v4299 = vadd.f32 %v4065, %v4277
        %v4300 = vadd.f32 %v4066, %v4282
        %v4301 = vld [vmem:[%s3832 + $0x2] sm:$0xff]
        %v4302 = vld [vmem:[%s3832 + $0xa] sm:$0xff]
        %v4303 = vld [vmem:[%s3832 + $0x1a] sm:$0xff]
        %v4304 = vld [vmem:[%s3832 + $0x22] sm:$0xff]
        %v4305 = vld [vmem:[%s3832 + $0x32] sm:$0xff]
        %v4306 = vld [vmem:[%s3832 + $0x3a] sm:$0xff]
        %v4307 = vld [vmem:[%s3832 + $0x4a] sm:$0xff]
        %v4308 = vld [vmem:[%s3832 + $0x52] sm:$0xff]
        %v4309 = vld [vmem:[%s3832 + $0x62] sm:$0xff]
        %v4310 = vld [vmem:[%s3832 + $0x6a] sm:$0xff]
        %v4311 = vld [vmem:[%s3832 + $0x7a] sm:$0xff]
        %v4312 = vld [vmem:[%s3832 + $0x82] sm:$0xff]
        %v4313 = vld [vmem:[%s3832 + $0x92] sm:$0xff]
        %v4314 = vld [vmem:[%s3832 + $0x9a] sm:$0xff]
        %v4315 = vld [vmem:[%s3832 + $0xaa] sm:$0xff]
        %v4316 = vld [vmem:[%s3832 + $0xb2] sm:$0xff]
        %s4317 = scalar_lea.vmem %s4, 512
        %v4318 = vld [vmem:[%s4317] sm:$0xff]
        %v4319 = vld [vmem:[%s4317 + $0x8] sm:$0xff]
        %v4320 = vld [vmem:[%s4317 + $0x10] sm:$0xff]
        %v4321 = vld [vmem:[%s4317 + $0x18] sm:$0xff]
        %v4322 = vld [vmem:[%s4317 + $0x20] sm:$0xff]
        %v4323 = vld [vmem:[%s4317 + $0x28] sm:$0xff]
        %v4324 = vld [vmem:[%s4317 + $0x30] sm:$0xff]
        %v4325 = vld [vmem:[%s4317 + $0x38] sm:$0xff]
        %v4327 = vsel %vm471, %v4301, 0
        %v4330 = vsel %vm471, %v4302, 0
        %v4333 = vsel %vm471, %v4303, 0
        %v4336 = vsel %vm471, %v4304, 0
        %v4339 = vsel %vm471, %v4305, 0
        %v4342 = vsel %vm471, %v4306, 0
        %v4345 = vsel %vm471, %v4307, 0
        %v4348 = vsel %vm471, %v4308, 0
        %v4351 = vsel %vm471, %v4309, 0
        %v4354 = vsel %vm471, %v4310, 0
        %v4357 = vsel %vm471, %v4311, 0
        %v4360 = vsel %vm471, %v4312, 0
        %v4363 = vsel %vm471, %v4313, 0
        %v4366 = vsel %vm471, %v4314, 0
        %v4369 = vsel %vm471, %v4315, 0
        %v4372 = vsel %vm471, %v4316, 0
        %4374 = vmatprep.subr.mxu0 0.0
        %4375 = vmatpush1.msra.mxu0 %v4318
        %4376 = vmatprep.subr.mxu0 0.0
        %4377 = vmatpush1.msra.mxu0 %v4319
        %4378 = vmatprep.subr.mxu0 0.0
        %4379 = vmatpush1.msra.mxu0 %v4320
        %4380 = vmatprep.subr.mxu0 0.0
        %4381 = vmatpush1.msra.mxu0 %v4321
        %4382 = vmatprep.subr.mxu0 0.0
        %4383 = vmatpush1.msra.mxu0 %v4322
        %4384 = vmatprep.subr.mxu0 0.0
        %4385 = vmatpush1.msra.mxu0 %v4323
        %4386 = vmatprep.subr.mxu0 0.0
        %4387 = vmatpush1.msra.mxu0 %v4324
        %4388 = vmatprep.subr.mxu0 0.0
        %4389 = vmatpush1.msra.mxu0 %v4325
        %4390 = vmatprep.subr.mxu0 0.0
        %4391 = vmatpush1.msra.mxu0 0.0
        %4392 = vmatprep.subr.mxu0 0.0
        %4393 = vmatpush1.msra.mxu0 0.0
        %4394 = vmatprep.subr.mxu0 0.0
        %4395 = vmatpush1.msra.mxu0 0.0
        %4396 = vmatprep.subr.mxu0 0.0
        %4397 = vmatpush1.msra.mxu0 0.0
        %4398 = vmatprep.subr.mxu0 0.0
        %4399 = vmatpush1.msra.mxu0 0.0
        %4400 = vmatprep.subr.mxu0 0.0
        %4401 = vmatpush1.msra.mxu0 0.0
        %4402 = vmatprep.subr.mxu0 0.0
        %4403 = vmatpush1.msra.mxu0 0.0
        %4404 = vmatprep.subr.mxu0 0.0
        %4405 = vmatpush1.msra.mxu0 0.0
        %4406 = vmatprep.subr.mxu0 0.0
        %4407 = vmatpush1.msra.mxu0 0.0
        %4408 = vmatprep.subr.mxu0 0.0
        %4409 = vmatpush1.msra.mxu0 0.0
        %4410 = vmatprep.subr.mxu0 0.0
        %4411 = vmatpush1.msra.mxu0 0.0
        %4412 = vmatprep.subr.mxu0 0.0
        %4413 = vmatpush1.msra.mxu0 0.0
        %4414 = vmatprep.subr.mxu0 0.0
        %4415 = vmatpush1.msra.mxu0 0.0
        %4416 = vmatprep.subr.mxu0 0.0
        %4417 = vmatpush1.msra.mxu0 0.0
        %4418 = vmatprep.subr.mxu0 0.0
        %4419 = vmatpush1.msra.mxu0 0.0
        %4420 = vmatprep.subr.mxu0 0.0
        %4421 = vmatpush1.msra.mxu0 0.0
        %4422 = vmatprep.subr.mxu0 0.0
        %4423 = vmatpush1.msra.mxu0 0.0
        %4424 = vmatprep.subr.mxu0 0.0
        %4425 = vmatpush1.msra.mxu0 0.0
        %4426 = vmatprep.subr.mxu0 0.0
        %4427 = vmatpush1.msra.mxu0 0.0
        %4428 = vmatprep.subr.mxu0 0.0
        %4429 = vmatpush1.msra.mxu0 0.0
        %4430 = vmatprep.subr.mxu0 0.0
        %4431 = vmatpush1.msra.mxu0 0.0
        %4432 = vmatprep.subr.mxu0 0.0
        %4433 = vmatpush1.msra.mxu0 0.0
        %4434 = vmatprep.subr.mxu0 0.0
        %4435 = vmatpush1.msra.mxu0 0.0
        %4436 = vmatprep.subr.mxu0 0.0
        %4437 = vmatpush1.msra.mxu0 0.0
        %4438 = vmatprep.mubr.f32.mxu0 0.0
        %4439 = vmatmul.mubr.f32.gmra.mrb[0].mxu0 %v4327
        %v4440 = vpop.f32.mrb[0].mxu0
        %v4441 = vadd.f32 0.0, %v4440
        %v4442 = vpop.f32.mrb[0].mxu0
        %4443 = vmatprep.mubr.f32.mxu0 0.0
        %4444 = vmatmul.mubr.f32.gmra.mrb[0].mxu0 %v4330
        %v4445 = vpop.f32.mrb[0].mxu0
        %v4446 = vadd.f32 0.0, %v4445
        %v4447 = vpop.f32.mrb[0].mxu0
        %4448 = vmatprep.mubr.f32.mxu0 0.0
        %4449 = vmatmul.mubr.f32.gmra.mrb[0].mxu0 %v4333
        %v4450 = vpop.f32.mrb[0].mxu0
        %v4451 = vadd.f32 0.0, %v4450
        %v4452 = vpop.f32.mrb[0].mxu0
        %4453 = vmatprep.mubr.f32.mxu0 0.0
        %4454 = vmatmul.mubr.f32.gmra.mrb[0].mxu0 %v4336
        %v4455 = vpop.f32.mrb[0].mxu0
        %v4456 = vadd.f32 0.0, %v4455
        %v4457 = vpop.f32.mrb[0].mxu0
        %4458 = vmatprep.mubr.f32.mxu0 0.0
        %4459 = vmatmul.mubr.f32.gmra.mrb[0].mxu0 %v4339
        %v4460 = vpop.f32.mrb[0].mxu0
        %v4461 = vadd.f32 0.0, %v4460
        %v4462 = vpop.f32.mrb[0].mxu0
        %4463 = vmatprep.mubr.f32.mxu0 0.0
        %4464 = vmatmul.mubr.f32.gmra.mrb[0].mxu0 %v4342
        %v4465 = vpop.f32.mrb[0].mxu0
        %v4466 = vadd.f32 0.0, %v4465
        %v4467 = vpop.f32.mrb[0].mxu0
        %4468 = vmatprep.mubr.f32.mxu0 0.0
        %4469 = vmatmul.mubr.f32.gmra.mrb[0].mxu0 %v4345
        %v4470 = vpop.f32.mrb[0].mxu0
        %v4471 = vadd.f32 0.0, %v4470
        %v4472 = vpop.f32.mrb[0].mxu0
        %4473 = vmatprep.mubr.f32.mxu0 0.0
        %4474 = vmatmul.mubr.f32.gmra.mrb[0].mxu0 %v4348
        %v4475 = vpop.f32.mrb[0].mxu0
        %v4476 = vadd.f32 0.0, %v4475
        %v4477 = vpop.f32.mrb[0].mxu0
        %4478 = vmatprep.mubr.f32.mxu0 0.0
        %4479 = vmatmul.mubr.f32.gmra.mrb[0].mxu0 %v4351
        %v4480 = vpop.f32.mrb[0].mxu0
        %v4481 = vadd.f32 0.0, %v4480
        %v4482 = vpop.f32.mrb[0].mxu0
        %4483 = vmatprep.mubr.f32.mxu0 0.0
        %4484 = vmatmul.mubr.f32.gmra.mrb[0].mxu0 %v4354
        %v4485 = vpop.f32.mrb[0].mxu0
        %v4486 = vadd.f32 0.0, %v4485
        %v4487 = vpop.f32.mrb[0].mxu0
        %4488 = vmatprep.mubr.f32.mxu0 0.0
        %4489 = vmatmul.mubr.f32.gmra.mrb[0].mxu0 %v4357
        %v4490 = vpop.f32.mrb[0].mxu0
        %v4491 = vadd.f32 0.0, %v4490
        %v4492 = vpop.f32.mrb[0].mxu0
        %4493 = vmatprep.mubr.f32.mxu0 0.0
        %4494 = vmatmul.mubr.f32.gmra.mrb[0].mxu0 %v4360
        %v4495 = vpop.f32.mrb[0].mxu0
        %v4496 = vadd.f32 0.0, %v4495
        %v4497 = vpop.f32.mrb[0].mxu0
        %4498 = vmatprep.mubr.f32.mxu0 0.0
        %4499 = vmatmul.mubr.f32.gmra.mrb[0].mxu0 %v4363
        %v4500 = vpop.f32.mrb[0].mxu0
        %v4501 = vadd.f32 0.0, %v4500
        %v4502 = vpop.f32.mrb[0].mxu0
        %4503 = vmatprep.mubr.f32.mxu0 0.0
        %4504 = vmatmul.mubr.f32.gmra.mrb[0].mxu0 %v4366
        %v4505 = vpop.f32.mrb[0].mxu0
        %v4506 = vadd.f32 0.0, %v4505
        %v4507 = vpop.f32.mrb[0].mxu0
        %4508 = vmatprep.mubr.f32.mxu0 0.0
        %4509 = vmatmul.mubr.f32.gmra.mrb[0].mxu0 %v4369
        %v4510 = vpop.f32.mrb[0].mxu0
        %v4511 = vadd.f32 0.0, %v4510
        %v4512 = vpop.f32.mrb[0].mxu0
        %4513 = vmatprep.mubr.f32.mxu0 0.0
        %4514 = vmatmul.mubr.f32.gmra.mrb[0].mxu0 %v4372
        %v4515 = vpop.f32.mrb[0].mxu0
        %v4516 = vadd.f32 0.0, %v4515
        %v4517 = vpop.f32.mrb[0].mxu0
        %4518 = vdwg.mxu0
        %v4519 = vadd.f32 %v4285, %v4441
        %v4520 = vadd.f32 %v4286, %v4446
        %v4521 = vadd.f32 %v4287, %v4451
        %v4522 = vadd.f32 %v4288, %v4456
        %v4523 = vadd.f32 %v4289, %v4461
        %v4524 = vadd.f32 %v4290, %v4466
        %v4525 = vadd.f32 %v4291, %v4471
        %v4526 = vadd.f32 %v4292, %v4476
        %v4527 = vadd.f32 %v4293, %v4481
        %v4528 = vadd.f32 %v4294, %v4486
        %v4529 = vadd.f32 %v4295, %v4491
        %v4530 = vadd.f32 %v4296, %v4496
        %v4531 = vadd.f32 %v4297, %v4501
        %v4532 = vadd.f32 %v4298, %v4506
        %v4533 = vadd.f32 %v4299, %v4511
        %v4534 = vadd.f32 %v4300, %v4516
        %v4535 = vld [vmem:[%s5] sm:$0x1]
        %v4537 = vlaneseq
        %v4538 = vshrl.u32 %v4537, 7
        %v4539 = vsub.s32 0, %v4538
        %v4540 = vrot.slane %v4535, %v4539
        %v4542 = vadd.f32 %v4519, %v4540
        %v4543 = vadd.f32 %v4520, %v4540
        %v4544 = vadd.f32 %v4521, %v4540
        %v4545 = vadd.f32 %v4522, %v4540
        %v4546 = vadd.f32 %v4523, %v4540
        %v4547 = vadd.f32 %v4524, %v4540
        %v4548 = vadd.f32 %v4525, %v4540
        %v4549 = vadd.f32 %v4526, %v4540
        %v4550 = vadd.f32 %v4527, %v4540
        %v4551 = vadd.f32 %v4528, %v4540
        %v4552 = vadd.f32 %v4529, %v4540
        %v4553 = vadd.f32 %v4530, %v4540
        %v4554 = vadd.f32 %v4531, %v4540
        %v4555 = vadd.f32 %v4532, %v4540
        %v4556 = vadd.f32 %v4533, %v4540
        %v4557 = vadd.f32 %v4534, %v4540
        %v4566 = vrot.slane %v4544, 7
        %vm4567 = vcmask 1041409
        %v4568 = vsel %vm4567, %v4566, %v4542
        %v4569 = vrot.slane %v4546, 6
        %vm4570 = vcmask 1042434
        %v4571 = vsel %vm4570, %v4569, %v4568
        %v4572 = vrot.slane %v4548, 5
        %vm4573 = vcmask 1043459
        %v4574 = vsel %vm4573, %v4572, %v4571
        %v4575 = vrot.slane %v4550, 4
        %vm4576 = vcmask 1044484
        %v4577 = vsel %vm4576, %v4575, %v4574
        %v4578 = vrot.slane %v4552, 3
        %vm4579 = vcmask 1045509
        %v4580 = vsel %vm4579, %v4578, %v4577
        %v4581 = vrot.slane %v4554, 2
        %vm4582 = vcmask 1046534
        %v4583 = vsel %vm4582, %v4581, %v4580
        %v4584 = vrot.slane %v4556, 1
        %vm4585 = vcmask 1047559
        %v4586 = vsel %vm4585, %v4584, %v4583
        %v4588 = vrot.slane %v4542, 1
        %v4589 = vsel %vm4567, %v4544, %v4588
        %v4590 = vrot.slane %v4546, 7
        %v4591 = vsel %vm4570, %v4590, %v4589
        %v4592 = vrot.slane %v4548, 6
        %v4593 = vsel %vm4573, %v4592, %v4591
        %v4594 = vrot.slane %v4550, 5
        %v4595 = vsel %vm4576, %v4594, %v4593
        %v4596 = vrot.slane %v4552, 4
        %v4597 = vsel %vm4579, %v4596, %v4595
        %v4598 = vrot.slane %v4554, 3
        %v4599 = vsel %vm4582, %v4598, %v4597
        %v4600 = vrot.slane %v4556, 2
        %v4601 = vsel %vm4585, %v4600, %v4599
        %4602 = vrot.lane.b32.xlu0 %v4601, 64
        %v4603 = vpop.permute.xlu0 %4602
        %v4605 = vrot.slane %v4542, 2
        %v4606 = vrot.slane %v4544, 1
        %v4607 = vsel %vm4567, %v4606, %v4605
        %v4608 = vsel %vm4570, %v4546, %v4607
        %v4609 = vrot.slane %v4548, 7
        %v4610 = vsel %vm4573, %v4609, %v4608
        %v4611 = vrot.slane %v4550, 6
        %v4612 = vsel %vm4576, %v4611, %v4610
        %v4613 = vrot.slane %v4552, 5
        %v4614 = vsel %vm4579, %v4613, %v4612
        %v4615 = vrot.slane %v4554, 4
        %v4616 = vsel %vm4582, %v4615, %v4614
        %v4617 = vrot.slane %v4556, 3
        %v4618 = vsel %vm4585, %v4617, %v4616
        %v4620 = vrot.slane %v4542, 3
        %v4621 = vrot.slane %v4544, 2
        %v4622 = vsel %vm4567, %v4621, %v4620
        %v4623 = vrot.slane %v4546, 1
        %v4624 = vsel %vm4570, %v4623, %v4622
        %v4625 = vsel %vm4573, %v4548, %v4624
        %v4626 = vrot.slane %v4550, 7
        %v4627 = vsel %vm4576, %v4626, %v4625
        %v4628 = vrot.slane %v4552, 6
        %v4629 = vsel %vm4579, %v4628, %v4627
        %v4630 = vrot.slane %v4554, 5
        %v4631 = vsel %vm4582, %v4630, %v4629
        %v4632 = vrot.slane %v4556, 4
        %v4633 = vsel %vm4585, %v4632, %v4631
        %4634 = vrot.lane.b32.xlu0 %v4633, 64
        %v4635 = vpop.permute.xlu0 %4634
        %v4637 = vrot.slane %v4542, 4
        %v4638 = vrot.slane %v4544, 3
        %v4639 = vsel %vm4567, %v4638, %v4637
        %v4640 = vrot.slane %v4546, 2
        %v4641 = vsel %vm4570, %v4640, %v4639
        %v4642 = vrot.slane %v4548, 1
        %v4643 = vsel %vm4573, %v4642, %v4641
        %v4644 = vsel %vm4576, %v4550, %v4643
        %v4645 = vrot.slane %v4552, 7
        %v4646 = vsel %vm4579, %v4645, %v4644
        %v4647 = vrot.slane %v4554, 6
        %v4648 = vsel %vm4582, %v4647, %v4646
        %v4649 = vrot.slane %v4556, 5
        %v4650 = vsel %vm4585, %v4649, %v4648
        %v4652 = vrot.slane %v4542, 5
        %v4653 = vrot.slane %v4544, 4
        %v4654 = vsel %vm4567, %v4653, %v4652
        %v4655 = vrot.slane %v4546, 3
        %v4656 = vsel %vm4570, %v4655, %v4654
        %v4657 = vrot.slane %v4548, 2
        %v4658 = vsel %vm4573, %v4657, %v4656
        %v4659 = vrot.slane %v4550, 1
        %v4660 = vsel %vm4576, %v4659, %v4658
        %v4661 = vsel %vm4579, %v4552, %v4660
        %v4662 = vrot.slane %v4554, 7
        %v4663 = vsel %vm4582, %v4662, %v4661
        %v4664 = vrot.slane %v4556, 6
        %v4665 = vsel %vm4585, %v4664, %v4663
        %4666 = vrot.lane.b32.xlu0 %v4665, 64
        %v4667 = vpop.permute.xlu0 %4666
        %v4669 = vrot.slane %v4542, 6
        %v4670 = vrot.slane %v4544, 5
        %v4671 = vsel %vm4567, %v4670, %v4669
        %v4672 = vrot.slane %v4546, 4
        %v4673 = vsel %vm4570, %v4672, %v4671
        %v4674 = vrot.slane %v4548, 3
        %v4675 = vsel %vm4573, %v4674, %v4673
        %v4676 = vrot.slane %v4550, 2
        %v4677 = vsel %vm4576, %v4676, %v4675
        %v4678 = vrot.slane %v4552, 1
        %v4679 = vsel %vm4579, %v4678, %v4677
        %v4680 = vsel %vm4582, %v4554, %v4679
        %v4681 = vrot.slane %v4556, 7
        %v4682 = vsel %vm4585, %v4681, %v4680
        %v4684 = vrot.slane %v4542, 7
        %v4685 = vrot.slane %v4544, 6
        %v4686 = vsel %vm4567, %v4685, %v4684
        %v4687 = vrot.slane %v4546, 5
        %v4688 = vsel %vm4570, %v4687, %v4686
        %v4689 = vrot.slane %v4548, 4
        %v4690 = vsel %vm4573, %v4689, %v4688
        %v4691 = vrot.slane %v4550, 3
        %v4692 = vsel %vm4576, %v4691, %v4690
        %v4693 = vrot.slane %v4552, 2
        %v4694 = vsel %vm4579, %v4693, %v4692
        %v4695 = vrot.slane %v4554, 1
        %v4696 = vsel %vm4582, %v4695, %v4694
        %v4697 = vsel %vm4585, %v4556, %v4696
        %4698 = vrot.lane.b32.xlu0 %v4697, 64
        %v4699 = vpop.permute.xlu0 %4698
        %v4709 = vrot.slane %v4545, 7
        %v4710 = vsel %vm4567, %v4709, %v4543
        %v4711 = vrot.slane %v4547, 6
        %v4712 = vsel %vm4570, %v4711, %v4710
        %v4713 = vrot.slane %v4549, 5
        %v4714 = vsel %vm4573, %v4713, %v4712
        %v4715 = vrot.slane %v4551, 4
        %v4716 = vsel %vm4576, %v4715, %v4714
        %v4717 = vrot.slane %v4553, 3
        %v4718 = vsel %vm4579, %v4717, %v4716
        %v4719 = vrot.slane %v4555, 2
        %v4720 = vsel %vm4582, %v4719, %v4718
        %v4721 = vrot.slane %v4557, 1
        %v4722 = vsel %vm4585, %v4721, %v4720
        %v4724 = vrot.slane %v4543, 1
        %v4725 = vsel %vm4567, %v4545, %v4724
        %v4726 = vrot.slane %v4547, 7
        %v4727 = vsel %vm4570, %v4726, %v4725
        %v4728 = vrot.slane %v4549, 6
        %v4729 = vsel %vm4573, %v4728, %v4727
        %v4730 = vrot.slane %v4551, 5
        %v4731 = vsel %vm4576, %v4730, %v4729
        %v4732 = vrot.slane %v4553, 4
        %v4733 = vsel %vm4579, %v4732, %v4731
        %v4734 = vrot.slane %v4555, 3
        %v4735 = vsel %vm4582, %v4734, %v4733
        %v4736 = vrot.slane %v4557, 2
        %v4737 = vsel %vm4585, %v4736, %v4735
        %4738 = vrot.lane.b32.xlu0 %v4737, 64
        %v4739 = vpop.permute.xlu0 %4738
        %v4741 = vrot.slane %v4543, 2
        %v4742 = vrot.slane %v4545, 1
        %v4743 = vsel %vm4567, %v4742, %v4741
        %v4744 = vsel %vm4570, %v4547, %v4743
        %v4745 = vrot.slane %v4549, 7
        %v4746 = vsel %vm4573, %v4745, %v4744
        %v4747 = vrot.slane %v4551, 6
        %v4748 = vsel %vm4576, %v4747, %v4746
        %v4749 = vrot.slane %v4553, 5
        %v4750 = vsel %vm4579, %v4749, %v4748
        %v4751 = vrot.slane %v4555, 4
        %v4752 = vsel %vm4582, %v4751, %v4750
        %v4753 = vrot.slane %v4557, 3
        %v4754 = vsel %vm4585, %v4753, %v4752
        %v4756 = vrot.slane %v4543, 3
        %v4757 = vrot.slane %v4545, 2
        %v4758 = vsel %vm4567, %v4757, %v4756
        %v4759 = vrot.slane %v4547, 1
        %v4760 = vsel %vm4570, %v4759, %v4758
        %v4761 = vsel %vm4573, %v4549, %v4760
        %v4762 = vrot.slane %v4551, 7
        %v4763 = vsel %vm4576, %v4762, %v4761
        %v4764 = vrot.slane %v4553, 6
        %v4765 = vsel %vm4579, %v4764, %v4763
        %v4766 = vrot.slane %v4555, 5
        %v4767 = vsel %vm4582, %v4766, %v4765
        %v4768 = vrot.slane %v4557, 4
        %v4769 = vsel %vm4585, %v4768, %v4767
        %4770 = vrot.lane.b32.xlu0 %v4769, 64
        %v4771 = vpop.permute.xlu0 %4770
        %v4773 = vrot.slane %v4543, 4
        %v4774 = vrot.slane %v4545, 3
        %v4775 = vsel %vm4567, %v4774, %v4773
        %v4776 = vrot.slane %v4547, 2
        %v4777 = vsel %vm4570, %v4776, %v4775
        %v4778 = vrot.slane %v4549, 1
        %v4779 = vsel %vm4573, %v4778, %v4777
        %v4780 = vsel %vm4576, %v4551, %v4779
        %v4781 = vrot.slane %v4553, 7
        %v4782 = vsel %vm4579, %v4781, %v4780
        %v4783 = vrot.slane %v4555, 6
        %v4784 = vsel %vm4582, %v4783, %v4782
        %v4785 = vrot.slane %v4557, 5
        %v4786 = vsel %vm4585, %v4785, %v4784
        %v4788 = vrot.slane %v4543, 5
        %v4789 = vrot.slane %v4545, 4
        %v4790 = vsel %vm4567, %v4789, %v4788
        %v4791 = vrot.slane %v4547, 3
        %v4792 = vsel %vm4570, %v4791, %v4790
        %v4793 = vrot.slane %v4549, 2
        %v4794 = vsel %vm4573, %v4793, %v4792
        %v4795 = vrot.slane %v4551, 1
        %v4796 = vsel %vm4576, %v4795, %v4794
        %v4797 = vsel %vm4579, %v4553, %v4796
        %v4798 = vrot.slane %v4555, 7
        %v4799 = vsel %vm4582, %v4798, %v4797
        %v4800 = vrot.slane %v4557, 6
        %v4801 = vsel %vm4585, %v4800, %v4799
        %4802 = vrot.lane.b32.xlu0 %v4801, 64
        %v4803 = vpop.permute.xlu0 %4802
        %v4805 = vrot.slane %v4543, 6
        %v4806 = vrot.slane %v4545, 5
        %v4807 = vsel %vm4567, %v4806, %v4805
        %v4808 = vrot.slane %v4547, 4
        %v4809 = vsel %vm4570, %v4808, %v4807
        %v4810 = vrot.slane %v4549, 3
        %v4811 = vsel %vm4573, %v4810, %v4809
        %v4812 = vrot.slane %v4551, 2
        %v4813 = vsel %vm4576, %v4812, %v4811
        %v4814 = vrot.slane %v4553, 1
        %v4815 = vsel %vm4579, %v4814, %v4813
        %v4816 = vsel %vm4582, %v4555, %v4815
        %v4817 = vrot.slane %v4557, 7
        %v4818 = vsel %vm4585, %v4817, %v4816
        %v4820 = vrot.slane %v4543, 7
        %v4821 = vrot.slane %v4545, 6
        %v4822 = vsel %vm4567, %v4821, %v4820
        %v4823 = vrot.slane %v4547, 5
        %v4824 = vsel %vm4570, %v4823, %v4822
        %v4825 = vrot.slane %v4549, 4
        %v4826 = vsel %vm4573, %v4825, %v4824
        %v4827 = vrot.slane %v4551, 3
        %v4828 = vsel %vm4576, %v4827, %v4826
        %v4829 = vrot.slane %v4553, 2
        %v4830 = vsel %vm4579, %v4829, %v4828
        %v4831 = vrot.slane %v4555, 1
        %v4832 = vsel %vm4582, %v4831, %v4830
        %v4833 = vsel %vm4585, %v4557, %v4832
        %4834 = vrot.lane.b32.xlu0 %v4833, 64
        %v4835 = vpop.permute.xlu0 %4834
        %v4837 = vsel %vm471, %v4586, %v4603
        %v4838 = vsel %vm471, %v4618, %v4635
        %v4839 = vsel %vm471, %v4650, %v4667
        %v4840 = vsel %vm471, %v4682, %v4699
        %v4841 = vsel %vm471, %v4722, %v4739
        %v4842 = vsel %vm471, %v4754, %v4771
        %v4843 = vsel %vm471, %v4786, %v4803
        %v4844 = vsel %vm471, %v4818, %v4835
        %v4845 = vld [vmem:[%s311] sm:$0xff]
        %v4846 = vld [vmem:[%s311 + $0x8] sm:$0xff]
        %v4847 = vld [vmem:[%s311 + $0x10] sm:$0xff]
        %v4848 = vld [vmem:[%s311 + $0x18] sm:$0xff]
        %v4849 = vld [vmem:[%s311 + $0x20] sm:$0xff]
        %v4850 = vld [vmem:[%s311 + $0x28] sm:$0xff]
        %v4851 = vld [vmem:[%s311 + $0x30] sm:$0xff]
        %v4852 = vld [vmem:[%s311 + $0x38] sm:$0xff]
        %v4853 = vadd.f32 %v4837, %v4845
        %v4854 = vadd.f32 %v4838, %v4846
        %v4855 = vadd.f32 %v4839, %v4847
        %v4856 = vadd.f32 %v4840, %v4848
        %v4857 = vadd.f32 %v4841, %v4849
        %v4858 = vadd.f32 %v4842, %v4850
        %v4859 = vadd.f32 %v4843, %v4851
        %v4860 = vadd.f32 %v4844, %v4852
        %v4861 = vmax.f32 %v4853, 0.0
        %v4862 = vmax.f32 %v4854, 0.0
        %v4863 = vmax.f32 %v4855, 0.0
        %v4864 = vmax.f32 %v4856, 0.0
        %v4865 = vmax.f32 %v4857, 0.0
        %v4866 = vmax.f32 %v4858, 0.0
        %v4867 = vmax.f32 %v4859, 0.0
        %v4868 = vmax.f32 %v4860, 0.0
        %4869 = vst [vmem:[%s293] sm:$0xff] %v4861
        %4870 = vst [vmem:[%s293 + $0x8] sm:$0xff] %v4862
        %4871 = vst [vmem:[%s293 + $0x10] sm:$0xff] %v4863
        %4872 = vst [vmem:[%s293 + $0x18] sm:$0xff] %v4864
        %4873 = vst [vmem:[%s293 + $0x20] sm:$0xff] %v4865
        %4874 = vst [vmem:[%s293 + $0x28] sm:$0xff] %v4866
        %4875 = vst [vmem:[%s293 + $0x30] sm:$0xff] %v4867
        %4876 = vst [vmem:[%s293 + $0x38] sm:$0xff] %v4868
        %s4877 = sand.u32 %s184, 1
        %s4878 = scalar_lea.sflag [#allocation4], %s4877
        %s4879 = sand.u32 %s184, 1
        %s4880 = smul.addr %s4879, 64
        %s4881 = scalar_lea.vmem [#allocation3], %s4880
        // Predicated region
        $region57: #{tpu_custom_call.1} parent=43 // pred_check
          %p4882 = pneg %p194
        $region58: #{tpu_custom_call.1} parent=43 // pred_check_branch
          %4884 = sbr.rel (%p4882) target = $region60
        $region59: #{tpu_custom_call.1} parent=43 // pred_region
          %s4886 = ssub.s32 1024, 1024
          %4887 = vsyncadd %s4878, %s4886
          %s4888 = smul.addr %s25, 8
          %s4889 = smul.addr %s24, 16
          %s4890 = sadd.s32 %s4888, %s4889
          %s4891 = smul.addr %s4890, 128
          %s4892 = scalar_lea.hbm %s6, %s4891
          %s4894 = sshll.u32 %s4881, 4
          %s4895 = int_to_ptr.vmem [resolvable:$true] %s4894
          %4897 = dma.vmem_to_hbm [thread:$0]  %s4895, 1024, %s4892, %s4878
        $region60: #{tpu_custom_call.1} parent=43 // pred_fallthru
          _
      $region44: #{tpu_custom_call.1} parent=5 // pred_fallthru
        _
      %p4898 = scmp.le.s32.totalorder 2, %s15
      // Predicated region
      $region61: #{tpu_custom_call.1} parent=5 // pred_check
        %p4899 = pneg %p4898
      $region62: #{tpu_custom_call.1} parent=5 // pred_check_branch
        %4901 = sbr.rel (%p4899) target = $region64
      $region63: #{tpu_custom_call.1} parent=5 // pred_region
        %s4902 = ssub.s32 %s15, 2
        // Predicated region
        $region65: #{tpu_custom_call.1} parent=63 // pred_check
          %p4903 = pneg %p200
        $region66: #{tpu_custom_call.1} parent=63 // pred_check_branch
          %4905 = sbr.rel (%p4903) target = $region68
        $region67: #{tpu_custom_call.1} parent=63 // pred_region
          %s4906 = sand.u32 %s185, 1
          %s4907 = scalar_lea.sflag [#allocation4], %s4906
          %s4908 = sand.u32 %s185, 1
          %s4909 = smul.addr %s4908, 64
          %s4910 = scalar_lea.vmem [#allocation3], %s4909
          %4911 = dma.done %s4907, 1024
        $region68: #{tpu_custom_call.1} parent=63 // pred_fallthru
          _
      $region64: #{tpu_custom_call.1} parent=5 // pred_fallthru
        _
    $region6: #{tpu_custom_call.1} parent=1 // loop_footer
      %s19 = sadd.s32 1, %s15
    $region7: #{tpu_custom_call.1} parent=1 // loop_footer_branch
      %14 = sbr.rel target = $region3
    $region8: #{tpu_custom_call.1} parent=1 // loop_exit
      _
    %4912 = vsyncpa [#allocation4], 1
    %s4913 = scalar_lea.sflag [#allocation4], 1
    %4914 = vsyncpa %s4913, 1

</llo_original>
